<compile_context>
chip_gen: v7x
topology: tpu7x:2x2x1
jax: 0.10.0
libtpu: 0.0.40
codegen_flags: <defaults>
</compile_context>

<pallas_src>
import functools
import math

import jax
import jax.numpy as jnp
from jax import lax
from jax.experimental import pallas as pl
from jax.experimental.pallas import tpu as pltpu

EPS = 1e-6


def _round_up(v, m):
    return ((v + m - 1) // m) * m


def _vmem_budgets():
    """Generation-aware VMEM limits (128 MiB physical on v5e/v6e, 64 MiB on v7x)."""
    cap = 64 * 1024 * 1024
    try:
        info = pltpu.get_tpu_info()
        cap = int(getattr(info, "vmem_capacity_bytes", cap) or cap)
    except Exception:
        pass
    vmem_limit = int(min(cap * 3 // 4, 96 * 1024 * 1024))   # 96 MiB v5e/v6e, 48 MiB v7x
    tile_budget = int(min(cap // 4, 32 * 1024 * 1024))       # 32 MiB v5e/v6e, 16 MiB v7x
    return vmem_limit, tile_budget


def _layernorm_f32(x, alpha, bias):
    """Scalar-affine LayerNorm matching the reference (Bessel std, eps on std)."""
    d = x.shape[-1]
    mean = jnp.mean(x, axis=-1, keepdims=True)
    diff = x - mean
    var = jnp.sum(diff * diff, axis=-1, keepdims=True) / float(d - 1)
    std = jnp.sqrt(var)
    # One reciprocal per row, alpha folded in -> per-element multiply only.
    inv = pl.reciprocal(std + EPS, approx=False)
    return diff * (alpha * inv) + bias


# ---------------------------------------------------------------------------
# Fused (LayerNorm -> MultiHeadAttention -> output proj -> residual add) kernel
# Grid: (batch, q_tiles), both "parallel".
# ---------------------------------------------------------------------------
def _attn_block_kernel(alpha_ref, beta_ref, x_ref, *rest,
                       n_heads, is_self, tq, approx):
    if is_self:
        (wq_ref, bq_ref, wkv_ref, bkv_ref, wo_ref, bo_ref,
         o_ref, ctx_ref) = rest
        kv_ref = None
    else:
        (kv_ref, wq_ref, bq_ref, wkv_ref, bkv_ref, wo_ref, bo_ref,
         o_ref, ctx_ref) = rest

    cdt = wq_ref.dtype                       # MXU operand dtype (bf16 or f32)
    d_model = x_ref.shape[-1]
    d_k = d_model // n_heads
    scale = 1.0 / math.sqrt(d_k)
    alpha = alpha_ref[0]
    beta = beta_ref[0]

    # ---- query tile (residual rows), pre-norm fused --------------------
    q_start = pl.multiple_of(pl.program_id(1) * tq, tq)
    x_tile = x_ref[0, pl.ds(q_start, tq), :].astype(jnp.float32)     # (tq, D)
    n_tile = _layernorm_f32(x_tile, alpha, beta)

    # ---- K/V source (full length): LN(x) for self-attn, raw enc for cross
    if is_self:
        kv_src = _layernorm_f32(x_ref[0].astype(jnp.float32), alpha, beta)
    else:
        kv_src = kv_ref[0].astype(jnp.float32)

    # ---- projections: Q (per-tile) + fused K|V (one N=2D MXU pass) ------
    q = jnp.dot(n_tile.astype(cdt), wq_ref[...],
                preferred_element_type=jnp.float32) + bq_ref[...]
    kvp = jnp.dot(kv_src.astype(cdt), wkv_ref[...],
                  preferred_element_type=jnp.float32) + bkv_ref[...]
    k = kvp[:, :d_model].astype(cdt)
    v = kvp[:, d_model:].astype(cdt)

    # ---- per-head attention; ctx staged in VMEM scratch (bounds live ranges)
    # Masks are a no-op in the reference (out-of-place masked_fill).
    for h in range(n_heads):                    # static unroll; small n_heads
        sl = slice(h * d_k, (h + 1) * d_k)
        s = lax.dot_general(q[:, sl].astype(cdt), k[:, sl],
                            (((1,), (1,)), ((), ())),
                            preferred_element_type=jnp.float32) * scale
        s = s - jnp.max(s, axis=-1, keepdims=True)
        p = jnp.exp(s)
        p = p * pl.reciprocal(jnp.sum(p, axis=-1, keepdims=True), approx=approx)
        ctx_ref[:, sl] = jnp.dot(p.astype(cdt), v[:, sl],
                                 preferred_element_type=jnp.float32
                                 ).astype(ctx_ref.dtype)

    # ---- single (tq, D) @ (D, D) output projection + residual add -------
    out = jnp.dot(ctx_ref[...], wo_ref[...],
                  preferred_element_type=jnp.float32) + bo_ref[...]
    o_ref[0] = (x_tile + out).astype(o_ref.dtype)


def _pick_q_tile(s_len, max_tile=256):
    """Largest q-tile <= max_tile that divides S (multiple of 8), else full S."""
    if s_len <= max_tile:
        return s_len
    for t in range(max_tile, 7, -8):
        if s_len % t == 0:
            return t
    return s_len


def _mha_residual_block(x, kv, ln_alpha, ln_bias,
                        wq, bq, wk, bk, wv, bv, wo, bo,
                        *, n_heads, is_self, compute_dtype, vmem_limit):
    B, S, D = x.shape
    tq = _pick_q_tile(S)
    n_q = S // tq
    cdt = jnp.dtype(compute_dtype)

    # TODO(synk): pre-pack / pre-cast weights once outside the forward for real use.
    wq_c = wq.astype(cdt)
    wkv_c = jnp.concatenate([wk, wv], axis=1).astype(cdt)     # fused K|V (D, 2D)
    wo_c = wo.astype(cdt)
    bq_c = bq.reshape(1, D).astype(jnp.float32)
    bkv_c = jnp.concatenate([bk, bv]).reshape(1, 2 * D).astype(jnp.float32)
    bo_c = bo.reshape(1, D).astype(jnp.float32)

    kernel = functools.partial(_attn_block_kernel, n_heads=n_heads,
                               is_self=is_self, tq=tq,
                               approx=(cdt == jnp.dtype(jnp.bfloat16)))

    smem = pl.BlockSpec(memory_space=pltpu.MemorySpace.SMEM)
    # x index_map is constant in the q-tile axis -> DMA'd once per batch element.
    x_spec = pl.BlockSpec((1, S, D), lambda b, qi: (b, 0, 0))
    out_spec = pl.BlockSpec((1, tq, D), lambda b, qi: (b, qi, 0))

    args = [ln_alpha, ln_bias, x]
    if not is_self:
        args.append(kv)                       # self-attn: x is NOT passed twice
    args += [wq_c, bq_c, wkv_c, bkv_c, wo_c, bo_c]

    def build(weight_mode):
        def wspec(shape):
            if weight_mode is None:
                return pl.BlockSpec(shape, lambda b, qi: (0, 0))
            return pl.BlockSpec(shape, lambda b, qi: (0, 0),
                                pipeline_mode=weight_mode)

        in_specs = [smem, smem, x_spec]
        if not is_self:
            in_specs.append(pl.BlockSpec((1, kv.shape[1], D),
                                         lambda b, qi: (b, 0, 0)))
        in_specs += [wspec((D, D)), wspec((1, D)),
                     wspec((D, 2 * D)), wspec((1, 2 * D)),
                     wspec((D, D)), wspec((1, D))]
        return pl.pallas_call(
            kernel,
            out_shape=jax.ShapeDtypeStruct((B, S, D), x.dtype),
            grid=(B, n_q),
            in_specs=in_specs,
            out_specs=out_spec,
            scratch_shapes=[pltpu.VMEM((tq, D), cdt)],     # staged per-head ctx
            compiler_params=pltpu.CompilerParams(
                dimension_semantics=("parallel", "parallel"),
                vmem_limit_bytes=vmem_limit),
        )

    try:
        return build(pl.Buffered(1))(*args)    # single-buffered resident weights
    except Exception:
        return build(None)(*args)              # fallback: default double buffering


# ---------------------------------------------------------------------------
# Fused (LayerNorm -> Linear -> ReLU -> Linear -> residual add) kernel
# Grid: row tiles of the flattened (batch*seq, d_model) slab.
# ---------------------------------------------------------------------------
def _ffn_block_kernel(alpha_ref, beta_ref, x_ref, w1_ref, b1_ref, w2_ref, b2_ref,
                      o_ref):
    cdt = w1_ref.dtype
    x = x_ref[...].astype(jnp.float32)                      # (row_tile, D)
    n = _layernorm_f32(x, alpha_ref[0], beta_ref[0])
    hid = jnp.dot(n.astype(cdt), w1_ref[...],
                  preferred_element_type=jnp.float32) + b1_ref[...]
    hid = jnp.maximum(hid, 0.0)                             # ReLU (dropout = identity)
    out = jnp.dot(hid.astype(cdt), w2_ref[...],
                  preferred_element_type=jnp.float32) + b2_ref[...]
    o_ref[...] = (x + out).astype(o_ref.dtype)              # residual add (fused)


def _pick_row_tile(n_rows, d_model, d_ff, weight_bytes, budget_bytes):
    # Per-row f32 working set: double-buffered in+out tiles, LN temp, and the
    # d_ff hidden (x2 for temporaries).  Resident weight bytes are subtracted
    # from the budget first so the tile choice is actually VMEM-safe.
    act_bytes_per_row = 4 * (4 * d_model + 2 * d_model + 2 * d_ff)
    avail = max(budget_bytes - weight_bytes, 32 * act_bytes_per_row)
    tile = avail // act_bytes_per_row
    tile = max(8, min(1024, (tile // 8) * 8))
    return int(min(tile, _round_up(n_rows, 8)))


def _ffn_residual_block(x, ln_alpha, ln_bias, w1, b1, w2, b2,
                        *, compute_dtype, vmem_limit, tile_budget):
    orig_shape = x.shape
    D = orig_shape[-1]
    d_ff = w1.shape[1]
    x2 = x.reshape(-1, D)               # metadata-only reshape; no pad / copy
    n_rows = x2.shape[0]
    cdt = jnp.dtype(compute_dtype)

    w1_c = w1.astype(cdt)
    w2_c = w2.astype(cdt)
    b1_c = b1.reshape(1, d_ff).astype(jnp.float32)
    b2_c = b2.reshape(1, D).astype(jnp.float32)

    weight_bytes = (w1_c.size + w2_c.size) * cdt.itemsize + (d_ff + D) * 4
    row_tile = _pick_row_tile(n_rows, D, d_ff, weight_bytes, tile_budget)
    grid = (pl.cdiv(n_rows, row_tile),)      # ragged last block -> masked store

    x_spec = pl.BlockSpec((row_tile, D), lambda i: (i, 0))
    smem = pl.BlockSpec(memory_space=pltpu.MemorySpace.SMEM)

    def build(weight_mode):
        def wspec(shape):
            if weight_mode is None:
                return pl.BlockSpec(shape, lambda i: (0, 0))
            return pl.BlockSpec(shape, lambda i: (0, 0), pipeline_mode=weight_mode)

        return pl.pallas_call(
            _ffn_block_kernel,
            out_shape=jax.ShapeDtypeStruct((n_rows, D), x.dtype),
            grid=grid,
            in_specs=[smem, smem, x_spec,
                      wspec((D, d_ff)), wspec((1, d_ff)),
                      wspec((d_ff, D)), wspec((1, D))],
            out_specs=x_spec,
            compiler_params=pltpu.CompilerParams(
                dimension_semantics=("parallel",),
                vmem_limit_bytes=vmem_limit),
        )

    args = (ln_alpha, ln_bias, x2, w1_c, b1_c, w2_c, b2_c)
    try:
        out = build(pl.Buffered(1))(*args)
    except Exception:
        out = build(None)(*args)
    return out.reshape(orig_shape)


# ---------------------------------------------------------------------------
# DecoderBlock forward
# ---------------------------------------------------------------------------
def decoder_block_forward(x, encoder_output, src_mask, tgt_mask, params,
                          *, compute_dtype=jnp.bfloat16):
    # Masks: the reference applies masked_fill out-of-place and discards the
    # result, so they never affect the output — accepted and ignored here.
    # TODO(synk): wire masks through (additive -1e9 on scores) if the
    #             reference module is ever fixed.
    del src_mask, tgt_mask
    vmem_limit, tile_budget = _vmem_budgets()
    p = params
    x = _mha_residual_block(x, None, p["ln0_alpha"], p["ln0_bias"],
                            p["sa_wq"], p["sa_bq"], p["sa_wk"], p["sa_bk"],
                            p["sa_wv"], p["sa_bv"], p["sa_wo"], p["sa_bo"],
                            n_heads=p["h"], is_self=True,
                            compute_dtype=compute_dtype, vmem_limit=vmem_limit)
    x = _mha_residual_block(x, encoder_output, p["ln1_alpha"], p["ln1_bias"],
                            p["ca_wq"], p["ca_bq"], p["ca_wk"], p["ca_bk"],
                            p["ca_wv"], p["ca_bv"], p["ca_wo"], p["ca_bo"],
                            n_heads=p["h"], is_self=False,
                            compute_dtype=compute_dtype, vmem_limit=vmem_limit)
    x = _ffn_residual_block(x, p["ln2_alpha"], p["ln2_bias"],
                            p["ff_w1"], p["ff_b1"], p["ff_w2"], p["ff_b2"],
                            compute_dtype=compute_dtype, vmem_limit=vmem_limit,
                            tile_budget=tile_budget)
    return x


# ---------------------------------------------------------------------------
# Pure-JAX f32 reference (same intended semantics) for verification
# ---------------------------------------------------------------------------
def _reference_decoder_block(x, enc, params):
    p = params
    n_heads = p["h"]

    def ln(t, a, b):
        mean = jnp.mean(t, axis=-1, keepdims=True)
        var = jnp.sum((t - mean) ** 2, axis=-1, keepdims=True) / (t.shape[-1] - 1)
        std = jnp.sqrt(var)
        return a[0] * (t - mean) / (std + EPS) + b[0]

    def mha(q_in, kv_in, wq, bq, wk, bk, wv, bv, wo, bo):
        B, S, D = q_in.shape
        Skv = kv_in.shape[1]
        d_k = D // n_heads
        q = (q_in @ wq + bq).reshape(B, S, n_heads, d_k).transpose(0, 2, 1, 3)
        k = (kv_in @ wk + bk).reshape(B, Skv, n_heads, d_k).transpose(0, 2, 1, 3)
        v = (kv_in @ wv + bv).reshape(B, Skv, n_heads, d_k).transpose(0, 2, 1, 3)
        s = jnp.einsum("bhqd,bhkd->bhqk", q, k) / math.sqrt(d_k)
        pr = jax.nn.softmax(s, axis=-1)
        ctx = jnp.einsum("bhqk,bhkd->bhqd", pr, v).transpose(0, 2, 1, 3).reshape(B, S, D)
        return ctx @ wo + bo

    n0 = ln(x, p["ln0_alpha"], p["ln0_bias"])
    x = x + mha(n0, n0, p["sa_wq"], p["sa_bq"], p["sa_wk"], p["sa_bk"],
                p["sa_wv"], p["sa_bv"], p["sa_wo"], p["sa_bo"])
    n1 = ln(x, p["ln1_alpha"], p["ln1_bias"])
    x = x + mha(n1, enc, p["ca_wq"], p["ca_bq"], p["ca_wk"], p["ca_bk"],
                p["ca_wv"], p["ca_bv"], p["ca_wo"], p["ca_bo"])
    n2 = ln(x, p["ln2_alpha"], p["ln2_bias"])
    ff = jnp.maximum(n2 @ p["ff_w1"] + p["ff_b1"], 0.0) @ p["ff_w2"] + p["ff_b2"]
    return x + ff


if __name__ == "__main__":
    key = jax.random.PRNGKey(0)
    B, S, D, H, D_FF = 2, 8, 32, 4, 64

    keys = jax.random.split(key, 16)
    it = iter(keys)

    def linear(k, fan_in, fan_out):
        kw, kb = jax.random.split(k)
        lim = 1.0 / math.sqrt(fan_in)
        w = jax.random.uniform(kw, (fan_in, fan_out), jnp.float32, -lim, lim)
        b = jax.random.uniform(kb, (fan_out,), jnp.float32, -lim, lim)
        return w, b

    params = {"h": H}
    for prefix in ("sa", "ca"):
        for name in ("wq", "wk", "wv", "wo"):
            w, b = linear(next(it), D, D)
            params[f"{prefix}_{name}"] = w
            params[f"{prefix}_b{name[-1]}"] = b
    params["ff_w1"], params["ff_b1"] = linear(next(it), D, D_FF)
    params["ff_w2"], params["ff_b2"] = linear(next(it), D_FF, D)
    for i in range(3):
        params[f"ln{i}_alpha"] = jnp.ones((1,), jnp.float32)
        params[f"ln{i}_bias"] = jnp.zeros((1,), jnp.float32)

    x = jax.random.normal(next(it), (B, S, D), jnp.float32)
    enc_out = jax.random.normal(next(it), (B, S, D), jnp.float32)
    tgt_mask = jnp.tril(jnp.ones((1, 1, S, S), jnp.float32))  # no-op in reference
    src_mask = jnp.ones((1, 1, S, S), jnp.float32)            # no-op in reference

    # Default path: bf16 MXU operands, f32 accumulation.
    out_bf16 = decoder_block_forward(x, enc_out, src_mask, tgt_mask, params)
    out_bf16 = jax.block_until_ready(out_bf16)

    # Exact-f32 path for tight structural verification.
    out_f32 = decoder_block_forward(x, enc_out, src_mask, tgt_mask, params,
                                    compute_dtype=jnp.float32)
    out_f32 = jax.block_until_ready(out_f32)

    ref = _reference_decoder_block(x, enc_out, params)
    assert out_bf16.shape == x.shape and out_f32.shape == x.shape

    err_f32 = float(jnp.max(jnp.abs(out_f32 - ref)))
    assert err_f32 < 1e-3, f"f32 kernel mismatch vs reference: {err_f32}"

    # bf16 matmul operands: expected numerical envelope at these shapes.
    err_bf16 = float(jnp.max(jnp.abs(out_bf16 - ref)))
    assert err_bf16 < 1.5e-1, f"bf16 kernel mismatch vs reference: {err_bf16}"

    print("KERNEL_OK")
</pallas_src>

<mosaic_0001>
module attributes {stable_mosaic.version = 11 : i64} {
  func.func @_attn_block_kernel(%arg0: i32, %arg1: i32, %arg2: memref<1xf32, #tpu.memory_space<smem>>, %arg3: memref<1xf32, #tpu.memory_space<smem>>, %arg4: memref<1x8x32xf32, #tpu.memory_space<vmem>>, %arg5: memref<32x32xbf16, #tpu.memory_space<vmem>>, %arg6: memref<1x32xf32, #tpu.memory_space<vmem>>, %arg7: memref<32x64xbf16, #tpu.memory_space<vmem>>, %arg8: memref<1x64xf32, #tpu.memory_space<vmem>>, %arg9: memref<32x32xbf16, #tpu.memory_space<vmem>>, %arg10: memref<1x32xf32, #tpu.memory_space<vmem>>, %arg11: memref<1x8x32xf32, #tpu.memory_space<vmem>>, %arg12: memref<8x32xbf16, #tpu.memory_space<vmem>>) attributes {dimension_semantics = [#tpu.dimension_semantics<parallel>, #tpu.dimension_semantics<parallel>], iteration_bounds = array<i64: 2, 1>, scalar_prefetch = 0 : i64, scratch_operands = 1 : i64, tpu.core_type = #tpu.core_type<tc>, window_params = [{transform_indices = @transform_0, window_bounds = array<i64: 1>}, {transform_indices = @transform_1, window_bounds = array<i64: 1>}, {transform_indices = @transform_2, window_bounds = array<i64: 1, 8, 32>}, {pipeline_mode = #tpu.pipeline_mode<synchronous>, transform_indices = @transform_3, window_bounds = array<i64: 32, 32>}, {pipeline_mode = #tpu.pipeline_mode<synchronous>, transform_indices = @transform_4, window_bounds = array<i64: 1, 32>}, {pipeline_mode = #tpu.pipeline_mode<synchronous>, transform_indices = @transform_5, window_bounds = array<i64: 32, 64>}, {pipeline_mode = #tpu.pipeline_mode<synchronous>, transform_indices = @transform_6, window_bounds = array<i64: 1, 64>}, {pipeline_mode = #tpu.pipeline_mode<synchronous>, transform_indices = @transform_7, window_bounds = array<i64: 32, 32>}, {pipeline_mode = #tpu.pipeline_mode<synchronous>, transform_indices = @transform_8, window_bounds = array<i64: 1, 32>}, {transform_indices = @transform_9, window_bounds = array<i64: 1, 8, 32>}]} {
    %c0 = arith.constant 0 : index
    %0 = memref.load %arg2[%c0] : memref<1xf32, #tpu.memory_space<smem>>
    %c0_0 = arith.constant 0 : index
    %1 = memref.load %arg3[%c0_0] : memref<1xf32, #tpu.memory_space<smem>>
    %c8_i32 = arith.constant 8 : i32
    %2 = arith.muli %arg1, %c8_i32 : i32
    %3 = tpu.assume_multiple %2, 8 : i32
    %c0_1 = arith.constant 0 : index
    %4 = arith.index_cast %3 : i32 to index
    %c0_2 = arith.constant 0 : index
    %5 = vector.load %arg4[%c0_1, %4, %c0_2] : memref<1x8x32xf32, #tpu.memory_space<vmem>>, vector<1x8x32xf32>
    %6 = vector.shape_cast %5 : vector<1x8x32xf32> to vector<8x32xf32>
    %cst = arith.constant dense<0.000000e+00> : vector<8xf32>
    %7 = vector.multi_reduction <add>, %6, %cst [1] : vector<8x32xf32> to vector<8xf32>
    %8 = vector.shape_cast %7 : vector<8xf32> to vector<8x1xf32>
    %cst_3 = arith.constant 3.200000e+01 : f32
    %9 = vector.broadcast %cst_3 : f32 to vector<8x1xf32>
    %10 = arith.divf %8, %9 : vector<8x1xf32>
    %11 = vector.broadcast %10 : vector<8x1xf32> to vector<8x32xf32>
    %12 = arith.subf %6, %11 : vector<8x32xf32>
    %13 = arith.mulf %12, %12 : vector<8x32xf32>
    %cst_4 = arith.constant dense<0.000000e+00> : vector<8xf32>
    %14 = vector.multi_reduction <add>, %13, %cst_4 [1] : vector<8x32xf32> to vector<8xf32>
    %15 = vector.shape_cast %14 : vector<8xf32> to vector<8x1xf32>
    %cst_5 = arith.constant 3.100000e+01 : f32
    %16 = vector.broadcast %cst_5 : f32 to vector<8x1xf32>
    %17 = arith.divf %15, %16 : vector<8x1xf32>
    %18 = math.sqrt %17 : vector<8x1xf32>
    %cst_6 = arith.constant 9.99999997E-7 : f32
    %19 = vector.broadcast %cst_6 : f32 to vector<8x1xf32>
    %20 = arith.addf %18, %19 : vector<8x1xf32>
    %21 = tpu.reciprocal %20 : vector<8x1xf32> -> vector<8x1xf32>
    %22 = vector.broadcast %0 : f32 to vector<8x1xf32>
    %23 = arith.mulf %22, %21 : vector<8x1xf32>
    %24 = vector.broadcast %23 : vector<8x1xf32> to vector<8x32xf32>
    %25 = arith.mulf %12, %24 : vector<8x32xf32>
    %26 = vector.broadcast %1 : f32 to vector<8x32xf32>
    %27 = arith.addf %25, %26 : vector<8x32xf32>
    %c0_7 = arith.constant 0 : index
    %c0_8 = arith.constant 0 : index
    %c0_9 = arith.constant 0 : index
    %28 = vector.load %arg4[%c0_7, %c0_8, %c0_9] : memref<1x8x32xf32, #tpu.memory_space<vmem>>, vector<1x8x32xf32>
    %29 = vector.shape_cast %28 : vector<1x8x32xf32> to vector<8x32xf32>
    %cst_10 = arith.constant dense<0.000000e+00> : vector<8xf32>
    %30 = vector.multi_reduction <add>, %29, %cst_10 [1] : vector<8x32xf32> to vector<8xf32>
    %31 = vector.shape_cast %30 : vector<8xf32> to vector<8x1xf32>
    %cst_11 = arith.constant 3.200000e+01 : f32
    %32 = vector.broadcast %cst_11 : f32 to vector<8x1xf32>
    %33 = arith.divf %31, %32 : vector<8x1xf32>
    %34 = vector.broadcast %33 : vector<8x1xf32> to vector<8x32xf32>
    %35 = arith.subf %29, %34 : vector<8x32xf32>
    %36 = arith.mulf %35, %35 : vector<8x32xf32>
    %cst_12 = arith.constant dense<0.000000e+00> : vector<8xf32>
    %37 = vector.multi_reduction <add>, %36, %cst_12 [1] : vector<8x32xf32> to vector<8xf32>
    %38 = vector.shape_cast %37 : vector<8xf32> to vector<8x1xf32>
    %cst_13 = arith.constant 3.100000e+01 : f32
    %39 = vector.broadcast %cst_13 : f32 to vector<8x1xf32>
    %40 = arith.divf %38, %39 : vector<8x1xf32>
    %41 = math.sqrt %40 : vector<8x1xf32>
    %cst_14 = arith.constant 9.99999997E-7 : f32
    %42 = vector.broadcast %cst_14 : f32 to vector<8x1xf32>
    %43 = arith.addf %41, %42 : vector<8x1xf32>
    %44 = tpu.reciprocal %43 : vector<8x1xf32> -> vector<8x1xf32>
    %45 = vector.broadcast %0 : f32 to vector<8x1xf32>
    %46 = arith.mulf %45, %44 : vector<8x1xf32>
    %47 = vector.broadcast %46 : vector<8x1xf32> to vector<8x32xf32>
    %48 = arith.mulf %35, %47 : vector<8x32xf32>
    %49 = vector.broadcast %1 : f32 to vector<8x32xf32>
    %50 = arith.addf %48, %49 : vector<8x32xf32>
    %51 = arith.truncf %27 : vector<8x32xf32> to vector<8x32xbf16>
    %c0_15 = arith.constant 0 : index
    %c0_16 = arith.constant 0 : index
    %52 = vector.load %arg5[%c0_15, %c0_16] : memref<32x32xbf16, #tpu.memory_space<vmem>>, vector<32x32xbf16>
    %cst_17 = arith.constant dense<0.000000e+00> : vector<8x32xf32>
    %53 = tpu.matmul %51, %52, %cst_17 {dimension_numbers = #tpu.dot_dimension_numbers<[1], [0], [0], [1], [0, 0, 1, 1], [], []>} : vector<8x32xbf16>, vector<32x32xbf16>, vector<8x32xf32> -> vector<8x32xf32>
    %c0_18 = arith.constant 0 : index
    %c0_19 = arith.constant 0 : index
    %54 = vector.load %arg6[%c0_18, %c0_19] : memref<1x32xf32, #tpu.memory_space<vmem>>, vector<1x32xf32>
    %55 = vector.broadcast %54 : vector<1x32xf32> to vector<8x32xf32>
    %56 = arith.addf %53, %55 : vector<8x32xf32>
    %57 = arith.truncf %50 : vector<8x32xf32> to vector<8x32xbf16>
    %c0_20 = arith.constant 0 : index
    %c0_21 = arith.constant 0 : index
    %58 = vector.load %arg7[%c0_20, %c0_21] : memref<32x64xbf16, #tpu.memory_space<vmem>>, vector<32x64xbf16>
    %cst_22 = arith.constant dense<0.000000e+00> : vector<8x64xf32>
    %59 = tpu.matmul %57, %58, %cst_22 {dimension_numbers = #tpu.dot_dimension_numbers<[1], [0], [0], [1], [0, 0, 1, 1], [], []>} : vector<8x32xbf16>, vector<32x64xbf16>, vector<8x64xf32> -> vector<8x64xf32>
    %c0_23 = arith.constant 0 : index
    %c0_24 = arith.constant 0 : index
    %60 = vector.load %arg8[%c0_23, %c0_24] : memref<1x64xf32, #tpu.memory_space<vmem>>, vector<1x64xf32>
    %61 = vector.broadcast %60 : vector<1x64xf32> to vector<8x64xf32>
    %62 = arith.addf %59, %61 : vector<8x64xf32>
    %63 = vector.extract_strided_slice %62 {offsets = [0, 0], sizes = [8, 32], strides = [1, 1]} : vector<8x64xf32> to vector<8x32xf32>
    %64 = arith.truncf %63 : vector<8x32xf32> to vector<8x32xbf16>
    %65 = vector.extract_strided_slice %62 {offsets = [0, 32], sizes = [8, 32], strides = [1, 1]} : vector<8x64xf32> to vector<8x32xf32>
    %66 = arith.truncf %65 : vector<8x32xf32> to vector<8x32xbf16>
    %67 = vector.extract_strided_slice %56 {offsets = [0, 0], sizes = [8, 8], strides = [1, 1]} : vector<8x32xf32> to vector<8x8xf32>
    %68 = arith.truncf %67 : vector<8x8xf32> to vector<8x8xbf16>
    %69 = vector.extract_strided_slice %64 {offsets = [0, 0], sizes = [8, 8], strides = [1, 1]} : vector<8x32xbf16> to vector<8x8xbf16>
    %cst_25 = arith.constant dense<0.000000e+00> : vector<8x8xf32>
    %70 = tpu.matmul %68, %69, %cst_25 {dimension_numbers = #tpu.dot_dimension_numbers<[1], [1], [0], [0], [0, 0, 1, 0], [], []>} : vector<8x8xbf16>, vector<8x8xbf16>, vector<8x8xf32> -> vector<8x8xf32>
    %cst_26 = arith.constant 0.353553385 : f32
    %71 = vector.broadcast %cst_26 : f32 to vector<8x8xf32>
    %72 = arith.mulf %70, %71 : vector<8x8xf32>
    %cst_27 = arith.constant dense<0xFF800000> : vector<8xf32>
    %73 = vector.multi_reduction <maximumf>, %72, %cst_27 [1] : vector<8x8xf32> to vector<8xf32>
    %74 = vector.shape_cast %73 : vector<8xf32> to vector<8x1xf32>
    %75 = vector.broadcast %74 : vector<8x1xf32> to vector<8x8xf32>
    %76 = arith.subf %72, %75 : vector<8x8xf32>
    %77 = math.exp %76 : vector<8x8xf32>
    %cst_28 = arith.constant dense<0.000000e+00> : vector<8xf32>
    %78 = vector.multi_reduction <add>, %77, %cst_28 [1] : vector<8x8xf32> to vector<8xf32>
    %79 = vector.shape_cast %78 : vector<8xf32> to vector<8x1xf32>
    %80 = tpu.reciprocal %79 {approx = true} : vector<8x1xf32> -> vector<8x1xf32>
    %81 = vector.broadcast %80 : vector<8x1xf32> to vector<8x8xf32>
    %82 = arith.mulf %77, %81 : vector<8x8xf32>
    %83 = arith.truncf %82 : vector<8x8xf32> to vector<8x8xbf16>
    %84 = vector.extract_strided_slice %66 {offsets = [0, 0], sizes = [8, 8], strides = [1, 1]} : vector<8x32xbf16> to vector<8x8xbf16>
    %cst_29 = arith.constant dense<0.000000e+00> : vector<8x8xf32>
    %85 = tpu.matmul %83, %84, %cst_29 {dimension_numbers = #tpu.dot_dimension_numbers<[1], [0], [0], [1], [0, 0, 1, 1], [], []>} : vector<8x8xbf16>, vector<8x8xbf16>, vector<8x8xf32> -> vector<8x8xf32>
    %86 = arith.truncf %85 : vector<8x8xf32> to vector<8x8xbf16>
    %c0_30 = arith.constant 0 : index
    %c0_31 = arith.constant 0 : index
    %87 = vector.load %arg12[%c0_30, %c0_31] : memref<8x32xbf16, #tpu.memory_space<vmem>>, vector<8x8xbf16>
    tpu.vector_store %arg12[%c0_30, %c0_31], %86 {strides = array<i32>} : memref<8x32xbf16, #tpu.memory_space<vmem>>, vector<8x8xbf16>,
    %88 = vector.extract_strided_slice %56 {offsets = [0, 8], sizes = [8, 8], strides = [1, 1]} : vector<8x32xf32> to vector<8x8xf32>
    %89 = arith.truncf %88 : vector<8x8xf32> to vector<8x8xbf16>
    %90 = vector.extract_strided_slice %64 {offsets = [0, 8], sizes = [8, 8], strides = [1, 1]} : vector<8x32xbf16> to vector<8x8xbf16>
    %cst_32 = arith.constant dense<0.000000e+00> : vector<8x8xf32>
    %91 = tpu.matmul %89, %90, %cst_32 {dimension_numbers = #tpu.dot_dimension_numbers<[1], [1], [0], [0], [0, 0, 1, 0], [], []>} : vector<8x8xbf16>, vector<8x8xbf16>, vector<8x8xf32> -> vector<8x8xf32>
    %cst_33 = arith.constant 0.353553385 : f32
    %92 = vector.broadcast %cst_33 : f32 to vector<8x8xf32>
    %93 = arith.mulf %91, %92 : vector<8x8xf32>
    %cst_34 = arith.constant dense<0xFF800000> : vector<8xf32>
    %94 = vector.multi_reduction <maximumf>, %93, %cst_34 [1] : vector<8x8xf32> to vector<8xf32>
    %95 = vector.shape_cast %94 : vector<8xf32> to vector<8x1xf32>
    %96 = vector.broadcast %95 : vector<8x1xf32> to vector<8x8xf32>
    %97 = arith.subf %93, %96 : vector<8x8xf32>
    %98 = math.exp %97 : vector<8x8xf32>
    %cst_35 = arith.constant dense<0.000000e+00> : vector<8xf32>
    %99 = vector.multi_reduction <add>, %98, %cst_35 [1] : vector<8x8xf32> to vector<8xf32>
    %100 = vector.shape_cast %99 : vector<8xf32> to vector<8x1xf32>
    %101 = tpu.reciprocal %100 {approx = true} : vector<8x1xf32> -> vector<8x1xf32>
    %102 = vector.broadcast %101 : vector<8x1xf32> to vector<8x8xf32>
    %103 = arith.mulf %98, %102 : vector<8x8xf32>
    %104 = arith.truncf %103 : vector<8x8xf32> to vector<8x8xbf16>
    %105 = vector.extract_strided_slice %66 {offsets = [0, 8], sizes = [8, 8], strides = [1, 1]} : vector<8x32xbf16> to vector<8x8xbf16>
    %cst_36 = arith.constant dense<0.000000e+00> : vector<8x8xf32>
    %106 = tpu.matmul %104, %105, %cst_36 {dimension_numbers = #tpu.dot_dimension_numbers<[1], [0], [0], [1], [0, 0, 1, 1], [], []>} : vector<8x8xbf16>, vector<8x8xbf16>, vector<8x8xf32> -> vector<8x8xf32>
    %107 = arith.truncf %106 : vector<8x8xf32> to vector<8x8xbf16>
    %c0_37 = arith.constant 0 : index
    %c8 = arith.constant 8 : index
    %108 = vector.load %arg12[%c0_37, %c8] : memref<8x32xbf16, #tpu.memory_space<vmem>>, vector<8x8xbf16>
    tpu.vector_store %arg12[%c0_37, %c8], %107 {strides = array<i32>} : memref<8x32xbf16, #tpu.memory_space<vmem>>, vector<8x8xbf16>,
    %109 = vector.extract_strided_slice %56 {offsets = [0, 16], sizes = [8, 8], strides = [1, 1]} : vector<8x32xf32> to vector<8x8xf32>
    %110 = arith.truncf %109 : vector<8x8xf32> to vector<8x8xbf16>
    %111 = vector.extract_strided_slice %64 {offsets = [0, 16], sizes = [8, 8], strides = [1, 1]} : vector<8x32xbf16> to vector<8x8xbf16>
    %cst_38 = arith.constant dense<0.000000e+00> : vector<8x8xf32>
    %112 = tpu.matmul %110, %111, %cst_38 {dimension_numbers = #tpu.dot_dimension_numbers<[1], [1], [0], [0], [0, 0, 1, 0], [], []>} : vector<8x8xbf16>, vector<8x8xbf16>, vector<8x8xf32> -> vector<8x8xf32>
    %cst_39 = arith.constant 0.353553385 : f32
    %113 = vector.broadcast %cst_39 : f32 to vector<8x8xf32>
    %114 = arith.mulf %112, %113 : vector<8x8xf32>
    %cst_40 = arith.constant dense<0xFF800000> : vector<8xf32>
    %115 = vector.multi_reduction <maximumf>, %114, %cst_40 [1] : vector<8x8xf32> to vector<8xf32>
    %116 = vector.shape_cast %115 : vector<8xf32> to vector<8x1xf32>
    %117 = vector.broadcast %116 : vector<8x1xf32> to vector<8x8xf32>
    %118 = arith.subf %114, %117 : vector<8x8xf32>
    %119 = math.exp %118 : vector<8x8xf32>
    %cst_41 = arith.constant dense<0.000000e+00> : vector<8xf32>
    %120 = vector.multi_reduction <add>, %119, %cst_41 [1] : vector<8x8xf32> to vector<8xf32>
    %121 = vector.shape_cast %120 : vector<8xf32> to vector<8x1xf32>
    %122 = tpu.reciprocal %121 {approx = true} : vector<8x1xf32> -> vector<8x1xf32>
    %123 = vector.broadcast %122 : vector<8x1xf32> to vector<8x8xf32>
    %124 = arith.mulf %119, %123 : vector<8x8xf32>
    %125 = arith.truncf %124 : vector<8x8xf32> to vector<8x8xbf16>
    %126 = vector.extract_strided_slice %66 {offsets = [0, 16], sizes = [8, 8], strides = [1, 1]} : vector<8x32xbf16> to vector<8x8xbf16>
    %cst_42 = arith.constant dense<0.000000e+00> : vector<8x8xf32>
    %127 = tpu.matmul %125, %126, %cst_42 {dimension_numbers = #tpu.dot_dimension_numbers<[1], [0], [0], [1], [0, 0, 1, 1], [], []>} : vector<8x8xbf16>, vector<8x8xbf16>, vector<8x8xf32> -> vector<8x8xf32>
    %128 = arith.truncf %127 : vector<8x8xf32> to vector<8x8xbf16>
    %c0_43 = arith.constant 0 : index
    %c16 = arith.constant 16 : index
    %129 = vector.load %arg12[%c0_43, %c16] : memref<8x32xbf16, #tpu.memory_space<vmem>>, vector<8x8xbf16>
    tpu.vector_store %arg12[%c0_43, %c16], %128 {strides = array<i32>} : memref<8x32xbf16, #tpu.memory_space<vmem>>, vector<8x8xbf16>,
    %130 = vector.extract_strided_slice %56 {offsets = [0, 24], sizes = [8, 8], strides = [1, 1]} : vector<8x32xf32> to vector<8x8xf32>
    %131 = arith.truncf %130 : vector<8x8xf32> to vector<8x8xbf16>
    %132 = vector.extract_strided_slice %64 {offsets = [0, 24], sizes = [8, 8], strides = [1, 1]} : vector<8x32xbf16> to vector<8x8xbf16>
    %cst_44 = arith.constant dense<0.000000e+00> : vector<8x8xf32>
    %133 = tpu.matmul %131, %132, %cst_44 {dimension_numbers = #tpu.dot_dimension_numbers<[1], [1], [0], [0], [0, 0, 1, 0], [], []>} : vector<8x8xbf16>, vector<8x8xbf16>, vector<8x8xf32> -> vector<8x8xf32>
    %cst_45 = arith.constant 0.353553385 : f32
    %134 = vector.broadcast %cst_45 : f32 to vector<8x8xf32>
    %135 = arith.mulf %133, %134 : vector<8x8xf32>
    %cst_46 = arith.constant dense<0xFF800000> : vector<8xf32>
    %136 = vector.multi_reduction <maximumf>, %135, %cst_46 [1] : vector<8x8xf32> to vector<8xf32>
    %137 = vector.shape_cast %136 : vector<8xf32> to vector<8x1xf32>
    %138 = vector.broadcast %137 : vector<8x1xf32> to vector<8x8xf32>
    %139 = arith.subf %135, %138 : vector<8x8xf32>
    %140 = math.exp %139 : vector<8x8xf32>
    %cst_47 = arith.constant dense<0.000000e+00> : vector<8xf32>
    %141 = vector.multi_reduction <add>, %140, %cst_47 [1] : vector<8x8xf32> to vector<8xf32>
    %142 = vector.shape_cast %141 : vector<8xf32> to vector<8x1xf32>
    %143 = tpu.reciprocal %142 {approx = true} : vector<8x1xf32> -> vector<8x1xf32>
    %144 = vector.broadcast %143 : vector<8x1xf32> to vector<8x8xf32>
    %145 = arith.mulf %140, %144 : vector<8x8xf32>
    %146 = arith.truncf %145 : vector<8x8xf32> to vector<8x8xbf16>
    %147 = vector.extract_strided_slice %66 {offsets = [0, 24], sizes = [8, 8], strides = [1, 1]} : vector<8x32xbf16> to vector<8x8xbf16>
    %cst_48 = arith.constant dense<0.000000e+00> : vector<8x8xf32>
    %148 = tpu.matmul %146, %147, %cst_48 {dimension_numbers = #tpu.dot_dimension_numbers<[1], [0], [0], [1], [0, 0, 1, 1], [], []>} : vector<8x8xbf16>, vector<8x8xbf16>, vector<8x8xf32> -> vector<8x8xf32>
    %149 = arith.truncf %148 : vector<8x8xf32> to vector<8x8xbf16>
    %c0_49 = arith.constant 0 : index
    %c24 = arith.constant 24 : index
    %150 = vector.load %arg12[%c0_49, %c24] : memref<8x32xbf16, #tpu.memory_space<vmem>>, vector<8x8xbf16>
    tpu.vector_store %arg12[%c0_49, %c24], %149 {strides = array<i32>} : memref<8x32xbf16, #tpu.memory_space<vmem>>, vector<8x8xbf16>,
    %c0_50 = arith.constant 0 : index
    %c0_51 = arith.constant 0 : index
    %151 = vector.load %arg12[%c0_50, %c0_51] : memref<8x32xbf16, #tpu.memory_space<vmem>>, vector<8x32xbf16>
    %c0_52 = arith.constant 0 : index
    %c0_53 = arith.constant 0 : index
    %152 = vector.load %arg9[%c0_52, %c0_53] : memref<32x32xbf16, #tpu.memory_space<vmem>>, vector<32x32xbf16>
    %cst_54 = arith.constant dense<0.000000e+00> : vector<8x32xf32>
    %153 = tpu.matmul %151, %152, %cst_54 {dimension_numbers = #tpu.dot_dimension_numbers<[1], [0], [0], [1], [0, 0, 1, 1], [], []>} : vector<8x32xbf16>, vector<32x32xbf16>, vector<8x32xf32> -> vector<8x32xf32>
    %c0_55 = arith.constant 0 : index
    %c0_56 = arith.constant 0 : index
    %154 = vector.load %arg10[%c0_55, %c0_56] : memref<1x32xf32, #tpu.memory_space<vmem>>, vector<1x32xf32>
    %155 = vector.broadcast %154 : vector<1x32xf32> to vector<8x32xf32>
    %156 = arith.addf %153, %155 : vector<8x32xf32>
    %157 = arith.addf %6, %156 : vector<8x32xf32>
    %c0_57 = arith.constant 0 : index
    %c0_58 = arith.constant 0 : index
    %c0_59 = arith.constant 0 : index
    %158 = vector.load %arg11[%c0_57, %c0_58, %c0_59] : memref<1x8x32xf32, #tpu.memory_space<vmem>>, vector<1x8x32xf32>
    %159 = vector.shape_cast %158 : vector<1x8x32xf32> to vector<8x32xf32>
    %160 = vector.shape_cast %157 : vector<8x32xf32> to vector<1x8x32xf32>
    tpu.vector_store %arg11[%c0_57, %c0_58, %c0_59], %160 {strides = array<i32>} : memref<1x8x32xf32, #tpu.memory_space<vmem>>, vector<1x8x32xf32>,
    return
  }
  func.func @transform_0(%arg0: i32, %arg1: i32) -> i32 {
    %c0_i32 = arith.constant 0 : i32
    %c0_i32_0 = arith.constant 0 : i32
    return %c0_i32 : i32
  }
  func.func @transform_1(%arg0: i32, %arg1: i32) -> i32 {
    %c0_i32 = arith.constant 0 : i32
    %c0_i32_0 = arith.constant 0 : i32
    return %c0_i32 : i32
  }
  func.func @transform_2(%arg0: i32, %arg1: i32) -> (i32, i32, i32) {
    %c0_i32 = arith.constant 0 : i32
    %c0_i32_0 = arith.constant 0 : i32
    %c0_i32_1 = arith.constant 0 : i32
    return %arg0, %c0_i32, %c0_i32_0 : i32, i32, i32
  }
  func.func @transform_3(%arg0: i32, %arg1: i32) -> (i32, i32) {
    %c0_i32 = arith.constant 0 : i32
    %c0_i32_0 = arith.constant 0 : i32
    %c0_i32_1 = arith.constant 0 : i32
    return %c0_i32, %c0_i32_0 : i32, i32
  }
  func.func @transform_4(%arg0: i32, %arg1: i32) -> (i32, i32) {
    %c0_i32 = arith.constant 0 : i32
    %c0_i32_0 = arith.constant 0 : i32
    %c0_i32_1 = arith.constant 0 : i32
    return %c0_i32, %c0_i32_0 : i32, i32
  }
  func.func @transform_5(%arg0: i32, %arg1: i32) -> (i32, i32) {
    %c0_i32 = arith.constant 0 : i32
    %c0_i32_0 = arith.constant 0 : i32
    %c0_i32_1 = arith.constant 0 : i32
    return %c0_i32, %c0_i32_0 : i32, i32
  }
  func.func @transform_6(%arg0: i32, %arg1: i32) -> (i32, i32) {
    %c0_i32 = arith.constant 0 : i32
    %c0_i32_0 = arith.constant 0 : i32
    %c0_i32_1 = arith.constant 0 : i32
    return %c0_i32, %c0_i32_0 : i32, i32
  }
  func.func @transform_7(%arg0: i32, %arg1: i32) -> (i32, i32) {
    %c0_i32 = arith.constant 0 : i32
    %c0_i32_0 = arith.constant 0 : i32
    %c0_i32_1 = arith.constant 0 : i32
    return %c0_i32, %c0_i32_0 : i32, i32
  }
  func.func @transform_8(%arg0: i32, %arg1: i32) -> (i32, i32) {
    %c0_i32 = arith.constant 0 : i32
    %c0_i32_0 = arith.constant 0 : i32
    %c0_i32_1 = arith.constant 0 : i32
    return %c0_i32, %c0_i32_0 : i32, i32
  }
  func.func @transform_9(%arg0: i32, %arg1: i32) -> (i32, i32, i32) {
    %c0_i32 = arith.constant 0 : i32
    %c0_i32_0 = arith.constant 0 : i32
    return %arg0, %arg1, %c0_i32 : i32, i32, i32
  }
}

module attributes {stable_mosaic.version = 11 : i64} {
  func.func @_attn_block_kernel(%arg0: i32, %arg1: i32, %arg2: memref<1xf32, #tpu.memory_space<smem>>, %arg3: memref<1xf32, #tpu.memory_space<smem>>, %arg4: memref<1x8x32xf32, #tpu.memory_space<vmem>>, %arg5: memref<32x32xbf16, #tpu.memory_space<vmem>>, %arg6: memref<1x32xf32, #tpu.memory_space<vmem>>, %arg7: memref<32x64xbf16, #tpu.memory_space<vmem>>, %arg8: memref<1x64xf32, #tpu.memory_space<vmem>>, %arg9: memref<32x32xbf16, #tpu.memory_space<vmem>>, %arg10: memref<1x32xf32, #tpu.memory_space<vmem>>, %arg11: memref<1x8x32xf32, #tpu.memory_space<vmem>>, %arg12: memref<8x32xbf16, #tpu.memory_space<vmem>>) attributes {dimension_semantics = [#tpu.dimension_semantics<parallel>, #tpu.dimension_semantics<parallel>], iteration_bounds = array<i64: 2, 1>, scalar_prefetch = 0 : i64, scratch_operands = 1 : i64, tpu.core_type = #tpu.core_type<tc>, window_params = [{transform_indices = @transform_0, window_bounds = array<i64: 1>}, {transform_indices = @transform_1, window_bounds = array<i64: 1>}, {transform_indices = @transform_2, window_bounds = array<i64: 1, 8, 32>}, {pipeline_mode = #tpu.pipeline_mode<synchronous>, transform_indices = @transform_3, window_bounds = array<i64: 32, 32>}, {pipeline_mode = #tpu.pipeline_mode<synchronous>, transform_indices = @transform_4, window_bounds = array<i64: 1, 32>}, {pipeline_mode = #tpu.pipeline_mode<synchronous>, transform_indices = @transform_5, window_bounds = array<i64: 32, 64>}, {pipeline_mode = #tpu.pipeline_mode<synchronous>, transform_indices = @transform_6, window_bounds = array<i64: 1, 64>}, {pipeline_mode = #tpu.pipeline_mode<synchronous>, transform_indices = @transform_7, window_bounds = array<i64: 32, 32>}, {pipeline_mode = #tpu.pipeline_mode<synchronous>, transform_indices = @transform_8, window_bounds = array<i64: 1, 32>}, {transform_indices = @transform_9, window_bounds = array<i64: 1, 8, 32>}]} {
    %c0 = arith.constant 0 : index
    %0 = memref.load %arg2[%c0] : memref<1xf32, #tpu.memory_space<smem>>
    %c0_0 = arith.constant 0 : index
    %1 = memref.load %arg3[%c0_0] : memref<1xf32, #tpu.memory_space<smem>>
    %c8_i32 = arith.constant 8 : i32
    %2 = arith.muli %arg1, %c8_i32 : i32
    %3 = tpu.assume_multiple %2, 8 : i32
    %c0_1 = arith.constant 0 : index
    %4 = arith.index_cast %3 : i32 to index
    %c0_2 = arith.constant 0 : index
    %5 = vector.load %arg4[%c0_1, %4, %c0_2] : memref<1x8x32xf32, #tpu.memory_space<vmem>>, vector<1x8x32xf32>
    %6 = vector.shape_cast %5 : vector<1x8x32xf32> to vector<8x32xf32>
    %cst = arith.constant dense<0.000000e+00> : vector<8xf32>
    %7 = vector.multi_reduction <add>, %6, %cst [1] : vector<8x32xf32> to vector<8xf32>
    %8 = vector.shape_cast %7 : vector<8xf32> to vector<8x1xf32>
    %cst_3 = arith.constant 3.200000e+01 : f32
    %9 = vector.broadcast %cst_3 : f32 to vector<8x1xf32>
    %10 = arith.divf %8, %9 : vector<8x1xf32>
    %11 = vector.broadcast %10 : vector<8x1xf32> to vector<8x32xf32>
    %12 = arith.subf %6, %11 : vector<8x32xf32>
    %13 = arith.mulf %12, %12 : vector<8x32xf32>
    %cst_4 = arith.constant dense<0.000000e+00> : vector<8xf32>
    %14 = vector.multi_reduction <add>, %13, %cst_4 [1] : vector<8x32xf32> to vector<8xf32>
    %15 = vector.shape_cast %14 : vector<8xf32> to vector<8x1xf32>
    %cst_5 = arith.constant 3.100000e+01 : f32
    %16 = vector.broadcast %cst_5 : f32 to vector<8x1xf32>
    %17 = arith.divf %15, %16 : vector<8x1xf32>
    %18 = math.sqrt %17 : vector<8x1xf32>
    %cst_6 = arith.constant 9.99999997E-7 : f32
    %19 = vector.broadcast %cst_6 : f32 to vector<8x1xf32>
    %20 = arith.addf %18, %19 : vector<8x1xf32>
    %21 = tpu.reciprocal %20 : vector<8x1xf32> -> vector<8x1xf32>
    %22 = vector.broadcast %0 : f32 to vector<8x1xf32>
    %23 = arith.mulf %22, %21 : vector<8x1xf32>
    %24 = vector.broadcast %23 : vector<8x1xf32> to vector<8x32xf32>
    %25 = arith.mulf %12, %24 : vector<8x32xf32>
    %26 = vector.broadcast %1 : f32 to vector<8x32xf32>
    %27 = arith.addf %25, %26 : vector<8x32xf32>
    %c0_7 = arith.constant 0 : index
    %c0_8 = arith.constant 0 : index
    %c0_9 = arith.constant 0 : index
    %28 = vector.load %arg4[%c0_7, %c0_8, %c0_9] : memref<1x8x32xf32, #tpu.memory_space<vmem>>, vector<1x8x32xf32>
    %29 = vector.shape_cast %28 : vector<1x8x32xf32> to vector<8x32xf32>
    %cst_10 = arith.constant dense<0.000000e+00> : vector<8xf32>
    %30 = vector.multi_reduction <add>, %29, %cst_10 [1] : vector<8x32xf32> to vector<8xf32>
    %31 = vector.shape_cast %30 : vector<8xf32> to vector<8x1xf32>
    %cst_11 = arith.constant 3.200000e+01 : f32
    %32 = vector.broadcast %cst_11 : f32 to vector<8x1xf32>
    %33 = arith.divf %31, %32 : vector<8x1xf32>
    %34 = vector.broadcast %33 : vector<8x1xf32> to vector<8x32xf32>
    %35 = arith.subf %29, %34 : vector<8x32xf32>
    %36 = arith.mulf %35, %35 : vector<8x32xf32>
    %cst_12 = arith.constant dense<0.000000e+00> : vector<8xf32>
    %37 = vector.multi_reduction <add>, %36, %cst_12 [1] : vector<8x32xf32> to vector<8xf32>
    %38 = vector.shape_cast %37 : vector<8xf32> to vector<8x1xf32>
    %cst_13 = arith.constant 3.100000e+01 : f32
    %39 = vector.broadcast %cst_13 : f32 to vector<8x1xf32>
    %40 = arith.divf %38, %39 : vector<8x1xf32>
    %41 = math.sqrt %40 : vector<8x1xf32>
    %cst_14 = arith.constant 9.99999997E-7 : f32
    %42 = vector.broadcast %cst_14 : f32 to vector<8x1xf32>
    %43 = arith.addf %41, %42 : vector<8x1xf32>
    %44 = tpu.reciprocal %43 : vector<8x1xf32> -> vector<8x1xf32>
    %45 = vector.broadcast %0 : f32 to vector<8x1xf32>
    %46 = arith.mulf %45, %44 : vector<8x1xf32>
    %47 = vector.broadcast %46 : vector<8x1xf32> to vector<8x32xf32>
    %48 = arith.mulf %35, %47 : vector<8x32xf32>
    %49 = vector.broadcast %1 : f32 to vector<8x32xf32>
    %50 = arith.addf %48, %49 : vector<8x32xf32>
    %51 = arith.truncf %27 : vector<8x32xf32> to vector<8x32xbf16>
    %c0_15 = arith.constant 0 : index
    %c0_16 = arith.constant 0 : index
    %52 = vector.load %arg5[%c0_15, %c0_16] : memref<32x32xbf16, #tpu.memory_space<vmem>>, vector<32x32xbf16>
    %cst_17 = arith.constant dense<0.000000e+00> : vector<8x32xf32>
    %53 = tpu.matmul %51, %52, %cst_17 {dimension_numbers = #tpu.dot_dimension_numbers<[1], [0], [0], [1], [0, 0, 1, 1], [], []>} : vector<8x32xbf16>, vector<32x32xbf16>, vector<8x32xf32> -> vector<8x32xf32>
    %c0_18 = arith.constant 0 : index
    %c0_19 = arith.constant 0 : index
    %54 = vector.load %arg6[%c0_18, %c0_19] : memref<1x32xf32, #tpu.memory_space<vmem>>, vector<1x32xf32>
    %55 = vector.broadcast %54 : vector<1x32xf32> to vector<8x32xf32>
    %56 = arith.addf %53, %55 : vector<8x32xf32>
    %57 = arith.truncf %50 : vector<8x32xf32> to vector<8x32xbf16>
    %c0_20 = arith.constant 0 : index
    %c0_21 = arith.constant 0 : index
    %58 = vector.load %arg7[%c0_20, %c0_21] : memref<32x64xbf16, #tpu.memory_space<vmem>>, vector<32x64xbf16>
    %cst_22 = arith.constant dense<0.000000e+00> : vector<8x64xf32>
    %59 = tpu.matmul %57, %58, %cst_22 {dimension_numbers = #tpu.dot_dimension_numbers<[1], [0], [0], [1], [0, 0, 1, 1], [], []>} : vector<8x32xbf16>, vector<32x64xbf16>, vector<8x64xf32> -> vector<8x64xf32>
    %c0_23 = arith.constant 0 : index
    %c0_24 = arith.constant 0 : index
    %60 = vector.load %arg8[%c0_23, %c0_24] : memref<1x64xf32, #tpu.memory_space<vmem>>, vector<1x64xf32>
    %61 = vector.broadcast %60 : vector<1x64xf32> to vector<8x64xf32>
    %62 = arith.addf %59, %61 : vector<8x64xf32>
    %63 = vector.extract_strided_slice %62 {offsets = [0, 0], sizes = [8, 32], strides = [1, 1]} : vector<8x64xf32> to vector<8x32xf32>
    %64 = arith.truncf %63 : vector<8x32xf32> to vector<8x32xbf16>
    %65 = vector.extract_strided_slice %62 {offsets = [0, 32], sizes = [8, 32], strides = [1, 1]} : vector<8x64xf32> to vector<8x32xf32>
    %66 = arith.truncf %65 : vector<8x32xf32> to vector<8x32xbf16>
    %67 = vector.extract_strided_slice %56 {offsets = [0, 0], sizes = [8, 8], strides = [1, 1]} : vector<8x32xf32> to vector<8x8xf32>
    %68 = arith.truncf %67 : vector<8x8xf32> to vector<8x8xbf16>
    %69 = vector.extract_strided_slice %64 {offsets = [0, 0], sizes = [8, 8], strides = [1, 1]} : vector<8x32xbf16> to vector<8x8xbf16>
    %cst_25 = arith.constant dense<0.000000e+00> : vector<8x8xf32>
    %70 = tpu.matmul %68, %69, %cst_25 {dimension_numbers = #tpu.dot_dimension_numbers<[1], [1], [0], [0], [0, 0, 1, 0], [], []>} : vector<8x8xbf16>, vector<8x8xbf16>, vector<8x8xf32> -> vector<8x8xf32>
    %cst_26 = arith.constant 0.353553385 : f32
    %71 = vector.broadcast %cst_26 : f32 to vector<8x8xf32>
    %72 = arith.mulf %70, %71 : vector<8x8xf32>
    %cst_27 = arith.constant dense<0xFF800000> : vector<8xf32>
    %73 = vector.multi_reduction <maximumf>, %72, %cst_27 [1] : vector<8x8xf32> to vector<8xf32>
    %74 = vector.shape_cast %73 : vector<8xf32> to vector<8x1xf32>
    %75 = vector.broadcast %74 : vector<8x1xf32> to vector<8x8xf32>
    %76 = arith.subf %72, %75 : vector<8x8xf32>
    %77 = math.exp %76 : vector<8x8xf32>
    %cst_28 = arith.constant dense<0.000000e+00> : vector<8xf32>
    %78 = vector.multi_reduction <add>, %77, %cst_28 [1] : vector<8x8xf32> to vector<8xf32>
    %79 = vector.shape_cast %78 : vector<8xf32> to vector<8x1xf32>
    %80 = tpu.reciprocal %79 {approx = true} : vector<8x1xf32> -> vector<8x1xf32>
    %81 = vector.broadcast %80 : vector<8x1xf32> to vector<8x8xf32>
    %82 = arith.mulf %77, %81 : vector<8x8xf32>
    %83 = arith.truncf %82 : vector<8x8xf32> to vector<8x8xbf16>
    %84 = vector.extract_strided_slice %66 {offsets = [0, 0], sizes = [8, 8], strides = [1, 1]} : vector<8x32xbf16> to vector<8x8xbf16>
    %cst_29 = arith.constant dense<0.000000e+00> : vector<8x8xf32>
    %85 = tpu.matmul %83, %84, %cst_29 {dimension_numbers = #tpu.dot_dimension_numbers<[1], [0], [0], [1], [0, 0, 1, 1], [], []>} : vector<8x8xbf16>, vector<8x8xbf16>, vector<8x8xf32> -> vector<8x8xf32>
    %86 = arith.truncf %85 : vector<8x8xf32> to vector<8x8xbf16>
    %c0_30 = arith.constant 0 : index
    %c0_31 = arith.constant 0 : index
    %87 = vector.load %arg12[%c0_30, %c0_31] : memref<8x32xbf16, #tpu.memory_space<vmem>>, vector<8x8xbf16>
    tpu.vector_store %arg12[%c0_30, %c0_31], %86 {strides = array<i32>} : memref<8x32xbf16, #tpu.memory_space<vmem>>, vector<8x8xbf16>,
    %88 = vector.extract_strided_slice %56 {offsets = [0, 8], sizes = [8, 8], strides = [1, 1]} : vector<8x32xf32> to vector<8x8xf32>
    %89 = arith.truncf %88 : vector<8x8xf32> to vector<8x8xbf16>
    %90 = vector.extract_strided_slice %64 {offsets = [0, 8], sizes = [8, 8], strides = [1, 1]} : vector<8x32xbf16> to vector<8x8xbf16>
    %cst_32 = arith.constant dense<0.000000e+00> : vector<8x8xf32>
    %91 = tpu.matmul %89, %90, %cst_32 {dimension_numbers = #tpu.dot_dimension_numbers<[1], [1], [0], [0], [0, 0, 1, 0], [], []>} : vector<8x8xbf16>, vector<8x8xbf16>, vector<8x8xf32> -> vector<8x8xf32>
    %cst_33 = arith.constant 0.353553385 : f32
    %92 = vector.broadcast %cst_33 : f32 to vector<8x8xf32>
    %93 = arith.mulf %91, %92 : vector<8x8xf32>
    %cst_34 = arith.constant dense<0xFF800000> : vector<8xf32>
    %94 = vector.multi_reduction <maximumf>, %93, %cst_34 [1] : vector<8x8xf32> to vector<8xf32>
    %95 = vector.shape_cast %94 : vector<8xf32> to vector<8x1xf32>
    %96 = vector.broadcast %95 : vector<8x1xf32> to vector<8x8xf32>
    %97 = arith.subf %93, %96 : vector<8x8xf32>
    %98 = math.exp %97 : vector<8x8xf32>
    %cst_35 = arith.constant dense<0.000000e+00> : vector<8xf32>
    %99 = vector.multi_reduction <add>, %98, %cst_35 [1] : vector<8x8xf32> to vector<8xf32>
    %100 = vector.shape_cast %99 : vector<8xf32> to vector<8x1xf32>
    %101 = tpu.reciprocal %100 {approx = true} : vector<8x1xf32> -> vector<8x1xf32>
    %102 = vector.broadcast %101 : vector<8x1xf32> to vector<8x8xf32>
    %103 = arith.mulf %98, %102 : vector<8x8xf32>
    %104 = arith.truncf %103 : vector<8x8xf32> to vector<8x8xbf16>
    %105 = vector.extract_strided_slice %66 {offsets = [0, 8], sizes = [8, 8], strides = [1, 1]} : vector<8x32xbf16> to vector<8x8xbf16>
    %cst_36 = arith.constant dense<0.000000e+00> : vector<8x8xf32>
    %106 = tpu.matmul %104, %105, %cst_36 {dimension_numbers = #tpu.dot_dimension_numbers<[1], [0], [0], [1], [0, 0, 1, 1], [], []>} : vector<8x8xbf16>, vector<8x8xbf16>, vector<8x8xf32> -> vector<8x8xf32>
    %107 = arith.truncf %106 : vector<8x8xf32> to vector<8x8xbf16>
    %c0_37 = arith.constant 0 : index
    %c8 = arith.constant 8 : index
    %108 = vector.load %arg12[%c0_37, %c8] : memref<8x32xbf16, #tpu.memory_space<vmem>>, vector<8x8xbf16>
    tpu.vector_store %arg12[%c0_37, %c8], %107 {strides = array<i32>} : memref<8x32xbf16, #tpu.memory_space<vmem>>, vector<8x8xbf16>,
    %109 = vector.extract_strided_slice %56 {offsets = [0, 16], sizes = [8, 8], strides = [1, 1]} : vector<8x32xf32> to vector<8x8xf32>
    %110 = arith.truncf %109 : vector<8x8xf32> to vector<8x8xbf16>
    %111 = vector.extract_strided_slice %64 {offsets = [0, 16], sizes = [8, 8], strides = [1, 1]} : vector<8x32xbf16> to vector<8x8xbf16>
    %cst_38 = arith.constant dense<0.000000e+00> : vector<8x8xf32>
    %112 = tpu.matmul %110, %111, %cst_38 {dimension_numbers = #tpu.dot_dimension_numbers<[1], [1], [0], [0], [0, 0, 1, 0], [], []>} : vector<8x8xbf16>, vector<8x8xbf16>, vector<8x8xf32> -> vector<8x8xf32>
    %cst_39 = arith.constant 0.353553385 : f32
    %113 = vector.broadcast %cst_39 : f32 to vector<8x8xf32>
    %114 = arith.mulf %112, %113 : vector<8x8xf32>
    %cst_40 = arith.constant dense<0xFF800000> : vector<8xf32>
    %115 = vector.multi_reduction <maximumf>, %114, %cst_40 [1] : vector<8x8xf32> to vector<8xf32>
    %116 = vector.shape_cast %115 : vector<8xf32> to vector<8x1xf32>
    %117 = vector.broadcast %116 : vector<8x1xf32> to vector<8x8xf32>
    %118 = arith.subf %114, %117 : vector<8x8xf32>
    %119 = math.exp %118 : vector<8x8xf32>
    %cst_41 = arith.constant dense<0.000000e+00> : vector<8xf32>
    %120 = vector.multi_reduction <add>, %119, %cst_41 [1] : vector<8x8xf32> to vector<8xf32>
    %121 = vector.shape_cast %120 : vector<8xf32> to vector<8x1xf32>
    %122 = tpu.reciprocal %121 {approx = true} : vector<8x1xf32> -> vector<8x1xf32>
    %123 = vector.broadcast %122 : vector<8x1xf32> to vector<8x8xf32>
    %124 = arith.mulf %119, %123 : vector<8x8xf32>
    %125 = arith.truncf %124 : vector<8x8xf32> to vector<8x8xbf16>
    %126 = vector.extract_strided_slice %66 {offsets = [0, 16], sizes = [8, 8], strides = [1, 1]} : vector<8x32xbf16> to vector<8x8xbf16>
    %cst_42 = arith.constant dense<0.000000e+00> : vector<8x8xf32>
    %127 = tpu.matmul %125, %126, %cst_42 {dimension_numbers = #tpu.dot_dimension_numbers<[1], [0], [0], [1], [0, 0, 1, 1], [], []>} : vector<8x8xbf16>, vector<8x8xbf16>, vector<8x8xf32> -> vector<8x8xf32>
    %128 = arith.truncf %127 : vector<8x8xf32> to vector<8x8xbf16>
    %c0_43 = arith.constant 0 : index
    %c16 = arith.constant 16 : index
    %129 = vector.load %arg12[%c0_43, %c16] : memref<8x32xbf16, #tpu.memory_space<vmem>>, vector<8x8xbf16>
    tpu.vector_store %arg12[%c0_43, %c16], %128 {strides = array<i32>} : memref<8x32xbf16, #tpu.memory_space<vmem>>, vector<8x8xbf16>,
    %130 = vector.extract_strided_slice %56 {offsets = [0, 24], sizes = [8, 8], strides = [1, 1]} : vector<8x32xf32> to vector<8x8xf32>
    %131 = arith.truncf %130 : vector<8x8xf32> to vector<8x8xbf16>
    %132 = vector.extract_strided_slice %64 {offsets = [0, 24], sizes = [8, 8], strides = [1, 1]} : vector<8x32xbf16> to vector<8x8xbf16>
    %cst_44 = arith.constant dense<0.000000e+00> : vector<8x8xf32>
    %133 = tpu.matmul %131, %132, %cst_44 {dimension_numbers = #tpu.dot_dimension_numbers<[1], [1], [0], [0], [0, 0, 1, 0], [], []>} : vector<8x8xbf16>, vector<8x8xbf16>, vector<8x8xf32> -> vector<8x8xf32>
    %cst_45 = arith.constant 0.353553385 : f32
    %134 = vector.broadcast %cst_45 : f32 to vector<8x8xf32>
    %135 = arith.mulf %133, %134 : vector<8x8xf32>
    %cst_46 = arith.constant dense<0xFF800000> : vector<8xf32>
    %136 = vector.multi_reduction <maximumf>, %135, %cst_46 [1] : vector<8x8xf32> to vector<8xf32>
    %137 = vector.shape_cast %136 : vector<8xf32> to vector<8x1xf32>
    %138 = vector.broadcast %137 : vector<8x1xf32> to vector<8x8xf32>
    %139 = arith.subf %135, %138 : vector<8x8xf32>
    %140 = math.exp %139 : vector<8x8xf32>
    %cst_47 = arith.constant dense<0.000000e+00> : vector<8xf32>
    %141 = vector.multi_reduction <add>, %140, %cst_47 [1] : vector<8x8xf32> to vector<8xf32>
    %142 = vector.shape_cast %141 : vector<8xf32> to vector<8x1xf32>
    %143 = tpu.reciprocal %142 {approx = true} : vector<8x1xf32> -> vector<8x1xf32>
    %144 = vector.broadcast %143 : vector<8x1xf32> to vector<8x8xf32>
    %145 = arith.mulf %140, %144 : vector<8x8xf32>
    %146 = arith.truncf %145 : vector<8x8xf32> to vector<8x8xbf16>
    %147 = vector.extract_strided_slice %66 {offsets = [0, 24], sizes = [8, 8], strides = [1, 1]} : vector<8x32xbf16> to vector<8x8xbf16>
    %cst_48 = arith.constant dense<0.000000e+00> : vector<8x8xf32>
    %148 = tpu.matmul %146, %147, %cst_48 {dimension_numbers = #tpu.dot_dimension_numbers<[1], [0], [0], [1], [0, 0, 1, 1], [], []>} : vector<8x8xbf16>, vector<8x8xbf16>, vector<8x8xf32> -> vector<8x8xf32>
    %149 = arith.truncf %148 : vector<8x8xf32> to vector<8x8xbf16>
    %c0_49 = arith.constant 0 : index
    %c24 = arith.constant 24 : index
    %150 = vector.load %arg12[%c0_49, %c24] : memref<8x32xbf16, #tpu.memory_space<vmem>>, vector<8x8xbf16>
    tpu.vector_store %arg12[%c0_49, %c24], %149 {strides = array<i32>} : memref<8x32xbf16, #tpu.memory_space<vmem>>, vector<8x8xbf16>,
    %c0_50 = arith.constant 0 : index
    %c0_51 = arith.constant 0 : index
    %151 = vector.load %arg12[%c0_50, %c0_51] : memref<8x32xbf16, #tpu.memory_space<vmem>>, vector<8x32xbf16>
    %c0_52 = arith.constant 0 : index
    %c0_53 = arith.constant 0 : index
    %152 = vector.load %arg9[%c0_52, %c0_53] : memref<32x32xbf16, #tpu.memory_space<vmem>>, vector<32x32xbf16>
    %cst_54 = arith.constant dense<0.000000e+00> : vector<8x32xf32>
    %153 = tpu.matmul %151, %152, %cst_54 {dimension_numbers = #tpu.dot_dimension_numbers<[1], [0], [0], [1], [0, 0, 1, 1], [], []>} : vector<8x32xbf16>, vector<32x32xbf16>, vector<8x32xf32> -> vector<8x32xf32>
    %c0_55 = arith.constant 0 : index
    %c0_56 = arith.constant 0 : index
    %154 = vector.load %arg10[%c0_55, %c0_56] : memref<1x32xf32, #tpu.memory_space<vmem>>, vector<1x32xf32>
    %155 = vector.broadcast %154 : vector<1x32xf32> to vector<8x32xf32>
    %156 = arith.addf %153, %155 : vector<8x32xf32>
    %157 = arith.addf %6, %156 : vector<8x32xf32>
    %c0_57 = arith.constant 0 : index
    %c0_58 = arith.constant 0 : index
    %c0_59 = arith.constant 0 : index
    %158 = vector.load %arg11[%c0_57, %c0_58, %c0_59] : memref<1x8x32xf32, #tpu.memory_space<vmem>>, vector<1x8x32xf32>
    %159 = vector.shape_cast %158 : vector<1x8x32xf32> to vector<8x32xf32>
    %160 = vector.shape_cast %157 : vector<8x32xf32> to vector<1x8x32xf32>
    tpu.vector_store %arg11[%c0_57, %c0_58, %c0_59], %160 {strides = array<i32>} : memref<1x8x32xf32, #tpu.memory_space<vmem>>, vector<1x8x32xf32>,
    return
  }
  func.func @transform_0(%arg0: i32, %arg1: i32) -> i32 {
    %c0_i32 = arith.constant 0 : i32
    %c0_i32_0 = arith.constant 0 : i32
    return %c0_i32 : i32
  }
  func.func @transform_1(%arg0: i32, %arg1: i32) -> i32 {
    %c0_i32 = arith.constant 0 : i32
    %c0_i32_0 = arith.constant 0 : i32
    return %c0_i32 : i32
  }
  func.func @transform_2(%arg0: i32, %arg1: i32) -> (i32, i32, i32) {
    %c0_i32 = arith.constant 0 : i32
    %c0_i32_0 = arith.constant 0 : i32
    %c0_i32_1 = arith.constant 0 : i32
    return %arg0, %c0_i32, %c0_i32_0 : i32, i32, i32
  }
  func.func @transform_3(%arg0: i32, %arg1: i32) -> (i32, i32) {
    %c0_i32 = arith.constant 0 : i32
    %c0_i32_0 = arith.constant 0 : i32
    %c0_i32_1 = arith.constant 0 : i32
    return %c0_i32, %c0_i32_0 : i32, i32
  }
  func.func @transform_4(%arg0: i32, %arg1: i32) -> (i32, i32) {
    %c0_i32 = arith.constant 0 : i32
    %c0_i32_0 = arith.constant 0 : i32
    %c0_i32_1 = arith.constant 0 : i32
    return %c0_i32, %c0_i32_0 : i32, i32
  }
  func.func @transform_5(%arg0: i32, %arg1: i32) -> (i32, i32) {
    %c0_i32 = arith.constant 0 : i32
    %c0_i32_0 = arith.constant 0 : i32
    %c0_i32_1 = arith.constant 0 : i32
    return %c0_i32, %c0_i32_0 : i32, i32
  }
  func.func @transform_6(%arg0: i32, %arg1: i32) -> (i32, i32) {
    %c0_i32 = arith.constant 0 : i32
    %c0_i32_0 = arith.constant 0 : i32
    %c0_i32_1 = arith.constant 0 : i32
    return %c0_i32, %c0_i32_0 : i32, i32
  }
  func.func @transform_7(%arg0: i32, %arg1: i32) -> (i32, i32) {
    %c0_i32 = arith.constant 0 : i32
    %c0_i32_0 = arith.constant 0 : i32
    %c0_i32_1 = arith.constant 0 : i32
    return %c0_i32, %c0_i32_0 : i32, i32
  }
  func.func @transform_8(%arg0: i32, %arg1: i32) -> (i32, i32) {
    %c0_i32 = arith.constant 0 : i32
    %c0_i32_0 = arith.constant 0 : i32
    %c0_i32_1 = arith.constant 0 : i32
    return %c0_i32, %c0_i32_0 : i32, i32
  }
  func.func @transform_9(%arg0: i32, %arg1: i32) -> (i32, i32, i32) {
    %c0_i32 = arith.constant 0 : i32
    %c0_i32_0 = arith.constant 0 : i32
    return %arg0, %arg1, %c0_i32 : i32, i32, i32
  }
}

</mosaic_0001>

<llo_original>
// kernel: tpu_custom_call.1
$region0: #{tpu_custom_call.1}
  #allocation0 [shape = 'u32[]', space=smem, size = 0x4, offset = 0x4, fixed_abs, tag = 'smem constant byte address 0x4 - core index']
  #allocation1 [shape = 'u32[144,128]{1,0:T(1,128)}', space=vmem, size = 0x12000, scoped, tag = 'internal scratch']
  #allocation2 [shape = 'bf16[8,32]{1,0:T(8,128)(2,1)}', space=vmem, size = 0x800, scoped, tag = 'scratch operand']
  #allocation3 [shape = 'f32[1]{0:T(128)S(6)}', space=smem, size = 0x200, scoped, tag = 'scoped memory for tpu_custom_call.1']
  #allocation4 [shape = 'f32[1]{0:T(128)S(6)}', space=smem, size = 0x200, scoped, tag = 'scoped memory for tpu_custom_call.1']
  %s0 = inlined_call_operand.<no memory space> [shape: f32[1], index: 0, kind: input, shape index: {}]
  %s1 = inlined_call_operand.<no memory space> [shape: f32[1], index: 1, kind: input, shape index: {}]
  %s2 = inlined_call_operand.hbm [shape: f32[2,8,32], index: 2, kind: input, shape index: {}]
  %s3 = inlined_call_operand.hbm [shape: bf16[32,32], index: 3, kind: input, shape index: {}]
  %s4 = inlined_call_operand.vmem [shape: f32[1,32], index: 4, kind: input, shape index: {}]
  %s5 = inlined_call_operand.vmem [shape: bf16[32,64], index: 5, kind: input, shape index: {}]
  %s6 = inlined_call_operand.vmem [shape: f32[1,64], index: 6, kind: input, shape index: {}]
  %s7 = inlined_call_operand.hbm [shape: bf16[32,32], index: 7, kind: input, shape index: {}]
  %s8 = inlined_call_operand.vmem [shape: f32[1,32], index: 8, kind: input, shape index: {}]
  %s9 = inlined_call_operand.hbm [shape: f32[2,8,32], index: 9, kind: output, shape index: {}]
  %s10 = sld [smem:[#allocation0]]
  $region81: #{tpu_custom_call.1} parent=0
    _
  %s12 = ssub.s32 1, %s10
  %s13 = scalar_select 0, %s12, %s10
  %14 = sst [smem:[#allocation3]] %s0
  %15 = sst [smem:[#allocation4]] %s1
  $region1: #{tpu_custom_call.1} parent=0
    #allocation5 [shape = 'u8[8192]{0}', space=vmem, size = 0x2000, scoped, tag = 'input window, operand 2']
    #allocation6 [shape = 's32[2]{0}', space=sflag, size = 0x8, scoped, tag = 'scoped memory for tpu_custom_call.1']
    #allocation7 [shape = 's32[2]{0}', space=sflag, size = 0x8, scoped, tag = 'scoped memory for tpu_custom_call.1']
    #allocation8 [shape = 'u8[8192]{0}', space=vmem, size = 0x2000, scoped, tag = 'input window, operand 3, single buffered']
    #allocation9 [shape = 's32[1]{0}', space=sflag, size = 0x4, scoped, tag = 'scoped memory for tpu_custom_call.1']
    #allocation10 [shape = 'u8[8192]{0}', space=vmem, size = 0x2000, scoped, tag = 'input window, operand 7, single buffered']
    #allocation11 [shape = 'u8[8192]{0}', space=vmem, size = 0x2000, scoped, tag = 'output window, operand 0']
    %16 = vsyncpa [#allocation6], 0
    %s17 = scalar_lea.sflag [#allocation6], 1
    %18 = vsyncpa %s17, 0
    %19 = vsyncpa [#allocation9], 0
    %20 = vsyncpa [#allocation7], 0
    %s21 = scalar_lea.sflag [#allocation7], 1
    %22 = vsyncpa %s21, 0
    loop: start=0, step=1, limit=4
    $region2: #{tpu_custom_call.1} parent=1 // loop_pre_header
      _
    $region3: #{tpu_custom_call.1} parent=1 // loop_header
      %s24 = sphi 0, %s28
      %p25 = scmp.ge.s32.totalorder %s24, 4
      %s31 = sphi 0, %s43
      %s32 = sphi 0, %s39
      %s33 = sphi 0, %s31
      %s34 = sphi 0, %s32
      %s35 = sphi 0, %s33
      %s36 = sphi 0, %s34
      %s44 = sphi 0, %s44
      %s46 = sphi 0, %s44
      %s47 = sphi 0, %s46
      %s61 = sphi 0, %s47
      %s65 = sphi 0, %s65
      %s67 = sphi 0, %s65
      %s68 = sphi 0, %s67
      %s82 = sphi 0, %s68
      %s88 = sphi 0, %s90
      %s91 = sphi 0, %s88
      %s92 = sphi 0, %s91
      %s108 = sphi 0, %s92
      %s112 = sphi 0, %s112
      %s114 = sphi 0, %s112
      %s115 = sphi 0, %s114
      %s129 = sphi 0, %s115
      %s133 = sphi 0, %s133
      %s135 = sphi 0, %s133
      %s136 = sphi 0, %s135
      %s150 = sphi 0, %s136
      %s154 = sphi 0, %s154
      %s156 = sphi 0, %s154
      %s157 = sphi 0, %s156
      %s171 = sphi 0, %s157
      %s175 = sphi 0, %s175
      %s177 = sphi 0, %s175
      %s178 = sphi 0, %s177
      %s192 = sphi 0, %s178
      %s196 = sphi 0, %s196
      %s198 = sphi 0, %s196
      %s199 = sphi 0, %s198
      %s213 = sphi 0, %s199
      %s217 = sphi 0, %s217
      %s219 = sphi 0, %s217
      %s220 = sphi 0, %s219
      %s234 = sphi 0, %s220
      %s242 = sphi 0, %s244
      %s245 = sphi 0, %s242
      %s246 = sphi 0, %s245
      %s262 = sphi 0, %s246
    $region4: #{tpu_custom_call.1} parent=1 // loop_header_branch
      %27 = sbr.rel (%p25) target = $region8
    $region5: #{tpu_custom_call.1} parent=1 // loop_body
      %s29 = ssub.s32 %s24, 1
      %s30 = ssub.s32 %s24, 2
      %s37 = sadd.s32 1, %s32
      %p38 = scmp.ge.s32.totalorder %s37, 1
      %s39 = scalar_select %p38, 0, %s37
      %s40 = sadd.s32 1, %s31
      %s41 = scalar_select %p38, %s40, %s31
      %p42 = scmp.ge.s32.totalorder %s41, 2
      %s43 = scalar_select %p42, 0, %s41
      %s45 = sadd.s32 %s44, 1
      %p48 = scmp.eq.s32.totalorder %s24, 1
      %p49 = scmp.ne.s32.totalorder %s44, %s46
      %p50 = scmp.eq.s32.totalorder %s24, 0
      %p51 = por %p49, %p50
      %p52 = scmp.ne.s32.totalorder %s44, %s46
      %p53 = scmp.eq.s32.totalorder %s29, 1
      %p54 = por %p52, %p53
      %p55 = scmp.ne.s32.totalorder %s46, %s47
      %p56 = scmp.eq.s32.totalorder %s29, 0
      %p57 = por %p55, %p56
      %p58 = scmp.ne.s32.totalorder %s46, %s47
      %p59 = scmp.eq.s32.totalorder %s30, 1
      %p60 = por %p58, %p59
      %p62 = scmp.ne.s32.totalorder %s47, %s61
      %p63 = scmp.eq.s32.totalorder %s30, 0
      %p64 = por %p62, %p63
      %s66 = sadd.s32 %s65, 1
      %p69 = scmp.eq.s32.totalorder %s24, 1
      %p70 = scmp.ne.s32.totalorder %s65, %s67
      %p71 = scmp.eq.s32.totalorder %s24, 0
      %p72 = por %p70, %p71
      %p73 = scmp.ne.s32.totalorder %s65, %s67
      %p74 = scmp.eq.s32.totalorder %s29, 1
      %p75 = por %p73, %p74
      %p76 = scmp.ne.s32.totalorder %s67, %s68
      %p77 = scmp.eq.s32.totalorder %s29, 0
      %p78 = por %p76, %p77
      %p79 = scmp.ne.s32.totalorder %s67, %s68
      %p80 = scmp.eq.s32.totalorder %s30, 1
      %p81 = por %p79, %p80
      %p83 = scmp.ne.s32.totalorder %s68, %s82
      %p84 = scmp.eq.s32.totalorder %s30, 0
      %p85 = por %p83, %p84
      %s86 = ssub.s32 %s31, %s43
      %p87 = scmp.eq.s32.totalorder %s86, 0
      %s89 = sadd.s32 %s88, 1
      %s90 = scalar_select %p87, %s88, %s89
      %p93 = pneg %p87
      %p94 = scmp.eq.s32.totalorder %s24, 1
      %p95 = por %p93, %p94
      %p96 = scmp.ne.s32.totalorder %s88, %s91
      %p97 = scmp.eq.s32.totalorder %s24, 0
      %p98 = por %p96, %p97
      %p99 = scmp.ne.s32.totalorder %s88, %s91
      %p100 = scmp.eq.s32.totalorder %s29, 1
      %p101 = por %p99, %p100
      %p102 = scmp.ne.s32.totalorder %s91, %s92
      %p103 = scmp.eq.s32.totalorder %s29, 0
      %p104 = por %p102, %p103
      %p105 = scmp.ne.s32.totalorder %s91, %s92
      %p106 = scmp.eq.s32.totalorder %s30, 1
      %p107 = por %p105, %p106
      %p109 = scmp.ne.s32.totalorder %s92, %s108
      %p110 = scmp.eq.s32.totalorder %s30, 0
      %p111 = por %p109, %p110
      %s113 = sadd.s32 %s112, 1
      %p116 = scmp.eq.s32.totalorder %s24, 1
      %p117 = scmp.ne.s32.totalorder %s112, %s114
      %p118 = scmp.eq.s32.totalorder %s24, 0
      %p119 = por %p117, %p118
      %p120 = scmp.ne.s32.totalorder %s112, %s114
      %p121 = scmp.eq.s32.totalorder %s29, 1
      %p122 = por %p120, %p121
      %p123 = scmp.ne.s32.totalorder %s114, %s115
      %p124 = scmp.eq.s32.totalorder %s29, 0
      %p125 = por %p123, %p124
      %p126 = scmp.ne.s32.totalorder %s114, %s115
      %p127 = scmp.eq.s32.totalorder %s30, 1
      %p128 = por %p126, %p127
      %p130 = scmp.ne.s32.totalorder %s115, %s129
      %p131 = scmp.eq.s32.totalorder %s30, 0
      %p132 = por %p130, %p131
      %s134 = sadd.s32 %s133, 1
      %p137 = scmp.eq.s32.totalorder %s24, 1
      %p138 = scmp.ne.s32.totalorder %s133, %s135
      %p139 = scmp.eq.s32.totalorder %s24, 0
      %p140 = por %p138, %p139
      %p141 = scmp.ne.s32.totalorder %s133, %s135
      %p142 = scmp.eq.s32.totalorder %s29, 1
      %p143 = por %p141, %p142
      %p144 = scmp.ne.s32.totalorder %s135, %s136
      %p145 = scmp.eq.s32.totalorder %s29, 0
      %p146 = por %p144, %p145
      %p147 = scmp.ne.s32.totalorder %s135, %s136
      %p148 = scmp.eq.s32.totalorder %s30, 1
      %p149 = por %p147, %p148
      %p151 = scmp.ne.s32.totalorder %s136, %s150
      %p152 = scmp.eq.s32.totalorder %s30, 0
      %p153 = por %p151, %p152
      %s155 = sadd.s32 %s154, 1
      %p158 = scmp.eq.s32.totalorder %s24, 1
      %p159 = scmp.ne.s32.totalorder %s154, %s156
      %p160 = scmp.eq.s32.totalorder %s24, 0
      %p161 = por %p159, %p160
      %p162 = scmp.ne.s32.totalorder %s154, %s156
      %p163 = scmp.eq.s32.totalorder %s29, 1
      %p164 = por %p162, %p163
      %p165 = scmp.ne.s32.totalorder %s156, %s157
      %p166 = scmp.eq.s32.totalorder %s29, 0
      %p167 = por %p165, %p166
      %p168 = scmp.ne.s32.totalorder %s156, %s157
      %p169 = scmp.eq.s32.totalorder %s30, 1
      %p170 = por %p168, %p169
      %p172 = scmp.ne.s32.totalorder %s157, %s171
      %p173 = scmp.eq.s32.totalorder %s30, 0
      %p174 = por %p172, %p173
      %s176 = sadd.s32 %s175, 1
      %p179 = scmp.eq.s32.totalorder %s24, 1
      %p180 = scmp.ne.s32.totalorder %s175, %s177
      %p181 = scmp.eq.s32.totalorder %s24, 0
      %p182 = por %p180, %p181
      %p183 = scmp.ne.s32.totalorder %s175, %s177
      %p184 = scmp.eq.s32.totalorder %s29, 1
      %p185 = por %p183, %p184
      %p186 = scmp.ne.s32.totalorder %s177, %s178
      %p187 = scmp.eq.s32.totalorder %s29, 0
      %p188 = por %p186, %p187
      %p189 = scmp.ne.s32.totalorder %s177, %s178
      %p190 = scmp.eq.s32.totalorder %s30, 1
      %p191 = por %p189, %p190
      %p193 = scmp.ne.s32.totalorder %s178, %s192
      %p194 = scmp.eq.s32.totalorder %s30, 0
      %p195 = por %p193, %p194
      %s197 = sadd.s32 %s196, 1
      %p200 = scmp.eq.s32.totalorder %s24, 1
      %p201 = scmp.ne.s32.totalorder %s196, %s198
      %p202 = scmp.eq.s32.totalorder %s24, 0
      %p203 = por %p201, %p202
      %p204 = scmp.ne.s32.totalorder %s196, %s198
      %p205 = scmp.eq.s32.totalorder %s29, 1
      %p206 = por %p204, %p205
      %p207 = scmp.ne.s32.totalorder %s198, %s199
      %p208 = scmp.eq.s32.totalorder %s29, 0
      %p209 = por %p207, %p208
      %p210 = scmp.ne.s32.totalorder %s198, %s199
      %p211 = scmp.eq.s32.totalorder %s30, 1
      %p212 = por %p210, %p211
      %p214 = scmp.ne.s32.totalorder %s199, %s213
      %p215 = scmp.eq.s32.totalorder %s30, 0
      %p216 = por %p214, %p215
      %s218 = sadd.s32 %s217, 1
      %p221 = scmp.eq.s32.totalorder %s24, 1
      %p222 = scmp.ne.s32.totalorder %s217, %s219
      %p223 = scmp.eq.s32.totalorder %s24, 0
      %p224 = por %p222, %p223
      %p225 = scmp.ne.s32.totalorder %s217, %s219
      %p226 = scmp.eq.s32.totalorder %s29, 1
      %p227 = por %p225, %p226
      %p228 = scmp.ne.s32.totalorder %s219, %s220
      %p229 = scmp.eq.s32.totalorder %s29, 0
      %p230 = por %p228, %p229
      %p231 = scmp.ne.s32.totalorder %s219, %s220
      %p232 = scmp.eq.s32.totalorder %s30, 1
      %p233 = por %p231, %p232
      %p235 = scmp.ne.s32.totalorder %s220, %s234
      %p236 = scmp.eq.s32.totalorder %s30, 0
      %p237 = por %p235, %p236
      %s238 = ssub.s32 %s31, %s43
      %s239 = ssub.s32 %s32, %s39
      %s240 = sor.u32 %s238, %s239
      %p241 = scmp.eq.s32.totalorder %s240, 0
      %s243 = sadd.s32 %s242, 1
      %s244 = scalar_select %p241, %s242, %s243
      %p247 = pneg %p241
      %p248 = scmp.eq.s32.totalorder %s24, 1
      %p249 = por %p247, %p248
      %p250 = scmp.ne.s32.totalorder %s242, %s245
      %p251 = scmp.eq.s32.totalorder %s24, 0
      %p252 = por %p250, %p251
      %p253 = scmp.ne.s32.totalorder %s242, %s245
      %p254 = scmp.eq.s32.totalorder %s29, 1
      %p255 = por %p253, %p254
      %p256 = scmp.ne.s32.totalorder %s245, %s246
      %p257 = scmp.eq.s32.totalorder %s29, 0
      %p258 = por %p256, %p257
      %p259 = scmp.ne.s32.totalorder %s245, %s246
      %p260 = scmp.eq.s32.totalorder %s30, 1
      %p261 = por %p259, %p260
      %p263 = scmp.ne.s32.totalorder %s246, %s262
      %p264 = scmp.eq.s32.totalorder %s30, 0
      %p265 = por %p263, %p264
      %p266 = scmp.le.s32.totalorder 1, %s24
      %p267 = scmp.lt.s32.totalorder %s24, 3
      %p268 = pnand %p266, %p267
      %p269 = pneg %p268
      // Predicated region
      $region9: #{tpu_custom_call.1} parent=5 // pred_check
        _
      $region10: #{tpu_custom_call.1} parent=5 // pred_check_branch
        %271 = sbr.rel (%p268) target = $region12
      $region11: #{tpu_custom_call.1} parent=5 // pred_region
        %s272 = ssub.s32 %s24, 1
        // Predicated region
        $region13: #{tpu_custom_call.1} parent=11 // pred_check
          %p273 = pneg %p57
        $region14: #{tpu_custom_call.1} parent=11 // pred_check_branch
          %275 = sbr.rel (%p273) target = $region16
        $region15: #{tpu_custom_call.1} parent=11 // pred_region
          _
        $region16: #{tpu_custom_call.1} parent=11 // pred_fallthru
          _
        // Predicated region
        $region17: #{tpu_custom_call.1} parent=11 // pred_check
          %p276 = pneg %p78
        $region18: #{tpu_custom_call.1} parent=11 // pred_check_branch
          %278 = sbr.rel (%p276) target = $region20
        $region19: #{tpu_custom_call.1} parent=11 // pred_region
          _
        $region20: #{tpu_custom_call.1} parent=11 // pred_fallthru
          _
        // Predicated region
        $region21: #{tpu_custom_call.1} parent=11 // pred_check
          %p279 = pneg %p125
        $region22: #{tpu_custom_call.1} parent=11 // pred_check_branch
          %281 = sbr.rel (%p279) target = $region24
        $region23: #{tpu_custom_call.1} parent=11 // pred_region
          %s283 = ssub.s32 256, 256
          %284 = vsyncadd [#allocation9], %s283
          %s285 = sshll.u32 [#allocation8], 4
          %s286 = int_to_ptr.vmem [resolvable:$true] %s285
          %291 = dma.hbm_to_vmem [thread:$0]  %s3, 256, %s286, [#allocation9], 64, 64, 4
        $region24: #{tpu_custom_call.1} parent=11 // pred_fallthru
          _
        // Predicated region
        $region25: #{tpu_custom_call.1} parent=11 // pred_check
          %p292 = pneg %p146
        $region26: #{tpu_custom_call.1} parent=11 // pred_check_branch
          %294 = sbr.rel (%p292) target = $region28
        $region27: #{tpu_custom_call.1} parent=11 // pred_region
          _
        $region28: #{tpu_custom_call.1} parent=11 // pred_fallthru
          _
        // Predicated region
        $region29: #{tpu_custom_call.1} parent=11 // pred_check
          %p295 = pneg %p167
        $region30: #{tpu_custom_call.1} parent=11 // pred_check_branch
          %297 = sbr.rel (%p295) target = $region32
        $region31: #{tpu_custom_call.1} parent=11 // pred_region
          _
        $region32: #{tpu_custom_call.1} parent=11 // pred_fallthru
          _
        // Predicated region
        $region33: #{tpu_custom_call.1} parent=11 // pred_check
          %p298 = pneg %p188
        $region34: #{tpu_custom_call.1} parent=11 // pred_check_branch
          %300 = sbr.rel (%p298) target = $region36
        $region35: #{tpu_custom_call.1} parent=11 // pred_region
          _
        $region36: #{tpu_custom_call.1} parent=11 // pred_fallthru
          _
        // Predicated region
        $region37: #{tpu_custom_call.1} parent=11 // pred_check
          %p301 = pneg %p209
        $region38: #{tpu_custom_call.1} parent=11 // pred_check_branch
          %303 = sbr.rel (%p301) target = $region40
        $region39: #{tpu_custom_call.1} parent=11 // pred_region
          %s305 = ssub.s32 256, 256
          %306 = vsyncadd [#allocation9], %s305
          %s307 = sshll.u32 [#allocation10], 4
          %s308 = int_to_ptr.vmem [resolvable:$true] %s307
          %313 = dma.hbm_to_vmem [thread:$0]  %s7, 256, %s308, [#allocation9], 64, 64, 4
        $region40: #{tpu_custom_call.1} parent=11 // pred_fallthru
          _
        // Predicated region
        $region41: #{tpu_custom_call.1} parent=11 // pred_check
          %p314 = pneg %p230
        $region42: #{tpu_custom_call.1} parent=11 // pred_check_branch
          %316 = sbr.rel (%p314) target = $region44
        $region43: #{tpu_custom_call.1} parent=11 // pred_region
          _
        $region44: #{tpu_custom_call.1} parent=11 // pred_fallthru
          _
      $region12: #{tpu_custom_call.1} parent=5 // pred_fallthru
        _
      %p317 = scmp.lt.s32.totalorder %s24, 2
      // Predicated region
      $region45: #{tpu_custom_call.1} parent=5 // pred_check
        %p318 = pneg %p317
      $region46: #{tpu_custom_call.1} parent=5 // pred_check_branch
        %320 = sbr.rel (%p318) target = $region48
      $region47: #{tpu_custom_call.1} parent=5 // pred_region
        // Predicated region
        $region49: #{tpu_custom_call.1} parent=47 // pred_check
          %p321 = pneg %p98
        $region50: #{tpu_custom_call.1} parent=47 // pred_check_branch
          %323 = sbr.rel (%p321) target = $region52
        $region51: #{tpu_custom_call.1} parent=47 // pred_region
          %s324 = sand.u32 %s88, 1
          %s325 = scalar_lea.sflag [#allocation6], %s324
          %s326 = sand.u32 %s88, 1
          %s327 = smul.addr %s326, 8
          %s328 = scalar_lea.vmem [#allocation5], %s327
          %s330 = ssub.s32 128, 128
          %331 = vsyncadd %s325, %s330
          %s332 = smul.addr %s31, 128
          %s333 = scalar_lea.hbm %s2, %s332
          %s335 = sshll.u32 %s328, 4
          %s336 = int_to_ptr.vmem [resolvable:$true] %s335
          %338 = dma.hbm_to_vmem [thread:$0]  %s333, 128, %s336, %s325
        $region52: #{tpu_custom_call.1} parent=47 // pred_fallthru
          _
      $region48: #{tpu_custom_call.1} parent=5 // pred_fallthru
        _
      %p339 = scmp.le.s32.totalorder 1, %s24
      %p340 = scmp.lt.s32.totalorder %s24, 3
      %p341 = pnand %p339, %p340
      %p342 = pneg %p341
      // Predicated region
      $region53: #{tpu_custom_call.1} parent=5 // pred_check
        _
      $region54: #{tpu_custom_call.1} parent=5 // pred_check_branch
        %344 = sbr.rel (%p341) target = $region56
      $region55: #{tpu_custom_call.1} parent=5 // pred_region
        %s345 = ssub.s32 %s24, 1
        %s346 = sand.u32 %s91, 1
        %s347 = scalar_lea.sflag [#allocation6], %s346
        %s348 = sand.u32 %s91, 1
        %s349 = smul.addr %s348, 8
        %s350 = scalar_lea.vmem [#allocation5], %s349
        // Predicated region
        $region57: #{tpu_custom_call.1} parent=55 // pred_check
          %p351 = pneg %p104
        $region58: #{tpu_custom_call.1} parent=55 // pred_check_branch
          %353 = sbr.rel (%p351) target = $region60
        $region59: #{tpu_custom_call.1} parent=55 // pred_region
          %354 = dma.done %s347, 128
        $region60: #{tpu_custom_call.1} parent=55 // pred_fallthru
          _
        // Predicated region
        $region61: #{tpu_custom_call.1} parent=55 // pred_check
          %p355 = pneg %p125
        $region62: #{tpu_custom_call.1} parent=55 // pred_check_branch
          %357 = sbr.rel (%p355) target = $region64
        $region63: #{tpu_custom_call.1} parent=55 // pred_region
          %358 = dma.done [#allocation9], 256
        $region64: #{tpu_custom_call.1} parent=55 // pred_fallthru
          _
        // Predicated region
        $region65: #{tpu_custom_call.1} parent=55 // pred_check
          %p359 = pneg %p209
        $region66: #{tpu_custom_call.1} parent=55 // pred_check_branch
          %361 = sbr.rel (%p359) target = $region68
        $region67: #{tpu_custom_call.1} parent=55 // pred_region
          %362 = dma.done [#allocation9], 256
        $region68: #{tpu_custom_call.1} parent=55 // pred_fallthru
          _
        %p363 = pneg %p57
        %p364 = pneg %p54
        %p365 = pneg %p78
        %p366 = pneg %p75
        %s367 = sand.u32 %s91, 1
        %s368 = scalar_lea.sflag [#allocation6], %s367
        %s369 = sand.u32 %s91, 1
        %s370 = smul.addr %s369, 8
        %s371 = scalar_lea.vmem [#allocation5], %s370
        %p372 = pneg %p104
        %p373 = pneg %p101
        %p374 = pneg %p125
        %p375 = pneg %p122
        %p376 = pneg %p146
        %p377 = pneg %p143
        %p378 = pneg %p167
        %p379 = pneg %p164
        %p380 = pneg %p188
        %p381 = pneg %p185
        %p382 = pneg %p209
        %p383 = pneg %p206
        %p384 = pneg %p230
        %p385 = pneg %p227
        %p386 = pneg %p258
        %p387 = pneg %p255
        %s388 = sand.u32 %s245, 1
        %s389 = scalar_lea.sflag [#allocation7], %s388
        %s390 = sand.u32 %s245, 1
        %s391 = smul.addr %s390, 8
        %s392 = scalar_lea.vmem [#allocation11], %s391
        %s394 = sld [smem:[#allocation3]]
        %s395 = sld [smem:[#allocation4]]
        %s396 = smul.u32 %s34, 8
        %s397 = scalar_lea.vmem %s350, %s396 [#allocation5]
        %v398 = vld [vmem:[%s397] sm:$0xff]
        %vm399 = vcmask 261120
        %v400 = vsel %vm399, %v398, 0.0
        %401 = vadd.xlane.f32.xlu0 %v400
        %v402 = vpop.xlane.xlu0 %401
        %v403 = vrcp.pop 32.0
        %v404 = vmul.f32 %v402, %v403
        %v405 = vsub.f32 %v398, %v404
        %v406 = vmul.f32 %v405, %v405
        %v407 = vsel %vm399, %v406, 0.0
        %408 = vadd.xlane.f32.xlu0 %v407
        %v409 = vpop.xlane.xlu0 %408
        %v410 = vrcp.pop 31.0
        %v411 = vmul.f32 %v409, %v410
        %v412 = vrsqrt.pop %v411
        %v413 = vmul.f32 %v411, %v412
        %vm414 = vcmp.eq.f32.partialorder %v411, inf
        %v415 = vsel %vm414, %v411, %v413
        %vm416 = vcmp.eq.f32.partialorder %v411, 0.0
        %v417 = vand.u32 %v411, 2147483648
        %v418 = vsel %vm416, %v417, %v415
        %v419 = vadd.f32 %v418, 1e-06
        %v420 = vrcp.pop %v419
        %v421 = vstv %s394
        %v422 = vmul.f32 %v421, %v420
        %v423 = vmul.f32 %v405, %v422
        %v424 = vstv %s395
        %v425 = vadd.f32 %v423, %v424
        %v426 = vld [vmem:[%s350] sm:$0xff]
        %v427 = vsel %vm399, %v426, 0.0
        %428 = vadd.xlane.f32.xlu0 %v427
        %v429 = vpop.xlane.xlu0 %428
        %v430 = vmul.f32 %v429, %v403
        %v431 = vsub.f32 %v426, %v430
        %v432 = vmul.f32 %v431, %v431
        %v433 = vsel %vm399, %v432, 0.0
        %434 = vadd.xlane.f32.xlu0 %v433
        %v435 = vpop.xlane.xlu0 %434
        %v436 = vmul.f32 %v435, %v410
        %v437 = vrsqrt.pop %v436
        %v438 = vmul.f32 %v436, %v437
        %vm439 = vcmp.eq.f32.partialorder %v436, inf
        %v440 = vsel %vm439, %v436, %v438
        %vm441 = vcmp.eq.f32.partialorder %v436, 0.0
        %v442 = vand.u32 %v436, 2147483648
        %v443 = vsel %vm441, %v442, %v440
        %v444 = vadd.f32 %v443, 1e-06
        %v445 = vrcp.pop %v444
        %v446 = vmul.f32 %v421, %v445
        %v447 = vmul.f32 %v431, %v446
        %v448 = vadd.f32 %v447, %v424
        %v449 = vpack.c.bf16 %v425, %v425
        %v450 = vld [vmem:[#allocation8] sm:$0xf]
        %v451 = vld [vmem:[#allocation8 + $0x4] sm:$0xf]
        %v452 = vld [vmem:[#allocation8 + $0x8] sm:$0xf]
        %v453 = vld [vmem:[#allocation8 + $0xc] sm:$0xf]
        %v454 = vld [vmem:[%s4] sm:$0x1]
        %v456 = vlaneseq
        %v457 = vshrl.u32 %v456, 7
        %v458 = vsub.s32 0, %v457
        %v459 = vrot.slane %v454, %v458
        %v465 = vunpack.c.l.b16 %v450
        %v466 = vunpack.c.l.b16 %v451
        %v467 = vunpack.c.l.b16 %v452
        %v468 = vunpack.c.l.b16 %v453
        %v469 = vpack.c.b16 %v466, %v465
        %v470 = vpack.c.b16 %v468, %v467
        %v474 = vsel %vm399, %v449, 0
        %476 = vmatprep.subr.bf16.mxu0 0
        %477 = vmatpush1.bf16.msra.mxu0 %v469
        %478 = vmatprep.subr.bf16.mxu0 0
        %479 = vmatpush1.bf16.msra.mxu0 %v470
        %480 = vmatprep.subr.bf16.mxu0 0
        %481 = vmatpush1.bf16.msra.mxu0 0
        %482 = vmatprep.subr.bf16.mxu0 0
        %483 = vmatpush1.bf16.msra.mxu0 0
        %484 = vmatprep.subr.bf16.mxu0 0
        %485 = vmatpush1.bf16.msra.mxu0 0
        %486 = vmatprep.subr.bf16.mxu0 0
        %487 = vmatpush1.bf16.msra.mxu0 0
        %488 = vmatprep.subr.bf16.mxu0 0
        %489 = vmatpush1.bf16.msra.mxu0 0
        %490 = vmatprep.subr.bf16.mxu0 0
        %491 = vmatpush1.bf16.msra.mxu0 0
        %492 = vmatprep.subr.bf16.mxu0 0
        %493 = vmatpush1.bf16.msra.mxu0 0
        %494 = vmatprep.subr.bf16.mxu0 0
        %495 = vmatpush1.bf16.msra.mxu0 0
        %496 = vmatprep.subr.bf16.mxu0 0
        %497 = vmatpush1.bf16.msra.mxu0 0
        %498 = vmatprep.subr.bf16.mxu0 0
        %499 = vmatpush1.bf16.msra.mxu0 0
        %500 = vmatprep.subr.bf16.mxu0 0
        %501 = vmatpush1.bf16.msra.mxu0 0
        %502 = vmatprep.subr.bf16.mxu0 0
        %503 = vmatpush1.bf16.msra.mxu0 0
        %504 = vmatprep.subr.bf16.mxu0 0
        %505 = vmatpush1.bf16.msra.mxu0 0
        %506 = vmatprep.subr.bf16.mxu0 0
        %507 = vmatpush1.bf16.msra.mxu0 0
        %508 = vmatprep.mubr.bf16.mxu0 0
        %509 = vmatmul.mubr.bf16.gmra.mrb[0].mxu0 %v474
        %v510 = vpop.f32.mrb[0].mxu0
        %v511 = vadd.f32 %v459, %v510
        %v512 = vpop.f32.mrb[0].mxu0
        %v513 = vpop.f32.mrb[0].mxu0
        %v514 = vpop.f32.mrb[0].mxu0
        %515 = vdwg.mxu0
        %v516 = vpack.c.bf16 %v448, %v448
        %v517 = vld [vmem:[%s5] sm:$0xf]
        %v518 = vld [vmem:[%s5 + $0x4] sm:$0xf]
        %v519 = vld [vmem:[%s5 + $0x8] sm:$0xf]
        %v520 = vld [vmem:[%s5 + $0xc] sm:$0xf]
        %v521 = vld [vmem:[%s6] sm:$0x1]
        %v523 = vlaneseq
        %v524 = vshrl.u32 %v523, 7
        %v525 = vsub.s32 0, %v524
        %v526 = vrot.slane %v521, %v525
        %v532 = vunpack.c.l.b16 %v517
        %v533 = vunpack.c.l.b16 %v518
        %v534 = vunpack.c.l.b16 %v519
        %v535 = vunpack.c.l.b16 %v520
        %v536 = vpack.c.b16 %v533, %v532
        %v537 = vpack.c.b16 %v535, %v534
        %v541 = vsel %vm399, %v516, 0
        %543 = vmatprep.subr.bf16.mxu0 0
        %544 = vmatpush1.bf16.msra.mxu0 %v536
        %545 = vmatprep.subr.bf16.mxu0 0
        %546 = vmatpush1.bf16.msra.mxu0 %v537
        %547 = vmatprep.subr.bf16.mxu0 0
        %548 = vmatpush1.bf16.msra.mxu0 0
        %549 = vmatprep.subr.bf16.mxu0 0
        %550 = vmatpush1.bf16.msra.mxu0 0
        %551 = vmatprep.subr.bf16.mxu0 0
        %552 = vmatpush1.bf16.msra.mxu0 0
        %553 = vmatprep.subr.bf16.mxu0 0
        %554 = vmatpush1.bf16.msra.mxu0 0
        %555 = vmatprep.subr.bf16.mxu0 0
        %556 = vmatpush1.bf16.msra.mxu0 0
        %557 = vmatprep.subr.bf16.mxu0 0
        %558 = vmatpush1.bf16.msra.mxu0 0
        %559 = vmatprep.subr.bf16.mxu0 0
        %560 = vmatpush1.bf16.msra.mxu0 0
        %561 = vmatprep.subr.bf16.mxu0 0
        %562 = vmatpush1.bf16.msra.mxu0 0
        %563 = vmatprep.subr.bf16.mxu0 0
        %564 = vmatpush1.bf16.msra.mxu0 0
        %565 = vmatprep.subr.bf16.mxu0 0
        %566 = vmatpush1.bf16.msra.mxu0 0
        %567 = vmatprep.subr.bf16.mxu0 0
        %568 = vmatpush1.bf16.msra.mxu0 0
        %569 = vmatprep.subr.bf16.mxu0 0
        %570 = vmatpush1.bf16.msra.mxu0 0
        %571 = vmatprep.subr.bf16.mxu0 0
        %572 = vmatpush1.bf16.msra.mxu0 0
        %573 = vmatprep.subr.bf16.mxu0 0
        %574 = vmatpush1.bf16.msra.mxu0 0
        %575 = vmatprep.mubr.bf16.mxu0 0
        %576 = vmatmul.mubr.bf16.gmra.mrb[0].mxu0 %v541
        %v577 = vpop.f32.mrb[0].mxu0
        %v578 = vadd.f32 %v526, %v577
        %v579 = vpop.f32.mrb[0].mxu0
        %v580 = vpop.f32.mrb[0].mxu0
        %v581 = vpop.f32.mrb[0].mxu0
        %582 = vdwg.mxu0
        %v583 = vpack.c.bf16 %v578, %v578
        %v584 = vpack.c.bf16 %v511, %v511
        %vm585 = vcmask 64512
        %v587 = vsel %vm585, %v584, 0
        %v590 = vsel %vm585, %v583, 0
        %592 = vmatprep.subr.bf16.mxu0 0
        %593 = vmatpush1.bf16.xpose.msra.mxu0 %v590
        %594 = vmatprep.subr.bf16.mxu0 0
        %595 = vmatpush1.bf16.xpose.msra.mxu0 0
        %596 = vmatprep.subr.bf16.mxu0 0
        %597 = vmatpush1.bf16.xpose.msra.mxu0 0
        %598 = vmatprep.subr.bf16.mxu0 0
        %599 = vmatpush1.bf16.xpose.msra.mxu0 0
        %600 = vmatprep.subr.bf16.mxu0 0
        %601 = vmatpush1.bf16.xpose.msra.mxu0 0
        %602 = vmatprep.subr.bf16.mxu0 0
        %603 = vmatpush1.bf16.xpose.msra.mxu0 0
        %604 = vmatprep.subr.bf16.mxu0 0
        %605 = vmatpush1.bf16.xpose.msra.mxu0 0
        %606 = vmatprep.subr.bf16.mxu0 0
        %607 = vmatpush1.bf16.xpose.msra.mxu0 0
        %608 = vmatprep.subr.bf16.mxu0 0
        %609 = vmatpush1.bf16.xpose.msra.mxu0 0
        %610 = vmatprep.subr.bf16.mxu0 0
        %611 = vmatpush1.bf16.xpose.msra.mxu0 0
        %612 = vmatprep.subr.bf16.mxu0 0
        %613 = vmatpush1.bf16.xpose.msra.mxu0 0
        %614 = vmatprep.subr.bf16.mxu0 0
        %615 = vmatpush1.bf16.xpose.msra.mxu0 0
        %616 = vmatprep.subr.bf16.mxu0 0
        %617 = vmatpush1.bf16.xpose.msra.mxu0 0
        %618 = vmatprep.subr.bf16.mxu0 0
        %619 = vmatpush1.bf16.xpose.msra.mxu0 0
        %620 = vmatprep.subr.bf16.mxu0 0
        %621 = vmatpush1.bf16.xpose.msra.mxu0 0
        %622 = vmatprep.subr.bf16.mxu0 0
        %623 = vmatpush1.bf16.xpose.msra.mxu0 0
        %624 = vmatprep.mubr.bf16.mxu0 0
        %625 = vmatmul.mubr.bf16.gmra.mrb[0].mxu0 %v587
        %v626 = vpop.f32.mrb[0].mxu0
        %v627 = vadd.f32 0.0, %v626
        %v628 = vpop.f32.mrb[0].mxu0
        %v629 = vpop.f32.mrb[0].mxu0
        %v630 = vpop.f32.mrb[0].mxu0
        %631 = vdwg.mxu0
        %v632 = vmul.f32 %v627, 0.35355338
        %v633 = vsel %vm585, %v632, -inf
        %634 = vmax.xlane.f32.xlu0 %v633
        %v635 = vpop.xlane.xlu0 %634
        %v636 = vsub.f32 %v632, %v635
        %v637 = vmul.f32 %v636, 1.442695
        %v638 = vpow.pop %v637
        %v639 = vsel %vm585, %v638, 0.0
        %640 = vadd.xlane.f32.xlu0 %v639
        %v641 = vpop.xlane.xlu0 %640
        %v642 = vrcp.pop %v641
        %v643 = vmul.f32 %v638, %v642
        %v644 = vpack.c.bf16 %v643, %v643
        %646 = vrot.lane.b32.xlu0 %v583, 96
        %v647 = vpop.permute.xlu0 %646
        %v649 = vsel %vm585, %v644, 0
        %vm651 = vcmask 1043456
        %v653 = vsel %vm651, %v647, 0
        %655 = vmatprep.subr.bf16.mxu0 0
        %656 = vmatpush1.bf16.msra.mxu0 %v653
        %657 = vmatprep.subr.bf16.mxu0 0
        %658 = vmatpush1.bf16.msra.mxu0 0
        %659 = vmatprep.subr.bf16.mxu0 0
        %660 = vmatpush1.bf16.msra.mxu0 0
        %661 = vmatprep.subr.bf16.mxu0 0
        %662 = vmatpush1.bf16.msra.mxu0 0
        %663 = vmatprep.subr.bf16.mxu0 0
        %664 = vmatpush1.bf16.msra.mxu0 0
        %665 = vmatprep.subr.bf16.mxu0 0
        %666 = vmatpush1.bf16.msra.mxu0 0
        %667 = vmatprep.subr.bf16.mxu0 0
        %668 = vmatpush1.bf16.msra.mxu0 0
        %669 = vmatprep.subr.bf16.mxu0 0
        %670 = vmatpush1.bf16.msra.mxu0 0
        %671 = vmatprep.subr.bf16.mxu0 0
        %672 = vmatpush1.bf16.msra.mxu0 0
        %673 = vmatprep.subr.bf16.mxu0 0
        %674 = vmatpush1.bf16.msra.mxu0 0
        %675 = vmatprep.subr.bf16.mxu0 0
        %676 = vmatpush1.bf16.msra.mxu0 0
        %677 = vmatprep.subr.bf16.mxu0 0
        %678 = vmatpush1.bf16.msra.mxu0 0
        %679 = vmatprep.subr.bf16.mxu0 0
        %680 = vmatpush1.bf16.msra.mxu0 0
        %681 = vmatprep.subr.bf16.mxu0 0
        %682 = vmatpush1.bf16.msra.mxu0 0
        %683 = vmatprep.subr.bf16.mxu0 0
        %684 = vmatpush1.bf16.msra.mxu0 0
        %685 = vmatprep.subr.bf16.mxu0 0
        %686 = vmatpush1.bf16.msra.mxu0 0
        %687 = vmatprep.mubr.bf16.mxu0 0
        %688 = vmatmul.mubr.bf16.gmra.mrb[0].mxu0 %v649
        %v689 = vpop.f32.mrb[0].mxu0
        %v690 = vadd.f32 0.0, %v689
        %v691 = vpop.f32.mrb[0].mxu0
        %v692 = vpop.f32.mrb[0].mxu0
        %v693 = vpop.f32.mrb[0].mxu0
        %694 = vdwg.mxu0
        %v695 = vpack.c.bf16 %v690, %v690
        %vm696 = vcmask 60416
        %697 = vst.msk [vmem:[#allocation2] sm:$0xf] %vm696, %v695
        %699 = vrot.lane.b32.xlu0 %v584, 120
        %v700 = vpop.permute.xlu0 %699
        %701 = vrot.lane.b32.xlu0 %v583, 120
        %v702 = vpop.permute.xlu0 %701
        %v704 = vsel %vm585, %v700, 0
        %v707 = vsel %vm585, %v702, 0
        %709 = vmatprep.subr.bf16.mxu0 0
        %710 = vmatpush1.bf16.xpose.msra.mxu0 %v707
        %711 = vmatprep.subr.bf16.mxu0 0
        %712 = vmatpush1.bf16.xpose.msra.mxu0 0
        %713 = vmatprep.subr.bf16.mxu0 0
        %714 = vmatpush1.bf16.xpose.msra.mxu0 0
        %715 = vmatprep.subr.bf16.mxu0 0
        %716 = vmatpush1.bf16.xpose.msra.mxu0 0
        %717 = vmatprep.subr.bf16.mxu0 0
        %718 = vmatpush1.bf16.xpose.msra.mxu0 0
        %719 = vmatprep.subr.bf16.mxu0 0
        %720 = vmatpush1.bf16.xpose.msra.mxu0 0
        %721 = vmatprep.subr.bf16.mxu0 0
        %722 = vmatpush1.bf16.xpose.msra.mxu0 0
        %723 = vmatprep.subr.bf16.mxu0 0
        %724 = vmatpush1.bf16.xpose.msra.mxu0 0
        %725 = vmatprep.subr.bf16.mxu0 0
        %726 = vmatpush1.bf16.xpose.msra.mxu0 0
        %727 = vmatprep.subr.bf16.mxu0 0
        %728 = vmatpush1.bf16.xpose.msra.mxu0 0
        %729 = vmatprep.subr.bf16.mxu0 0
        %730 = vmatpush1.bf16.xpose.msra.mxu0 0
        %731 = vmatprep.subr.bf16.mxu0 0
        %732 = vmatpush1.bf16.xpose.msra.mxu0 0
        %733 = vmatprep.subr.bf16.mxu0 0
        %734 = vmatpush1.bf16.xpose.msra.mxu0 0
        %735 = vmatprep.subr.bf16.mxu0 0
        %736 = vmatpush1.bf16.xpose.msra.mxu0 0
        %737 = vmatprep.subr.bf16.mxu0 0
        %738 = vmatpush1.bf16.xpose.msra.mxu0 0
        %739 = vmatprep.subr.bf16.mxu0 0
        %740 = vmatpush1.bf16.xpose.msra.mxu0 0
        %741 = vmatprep.mubr.bf16.mxu0 0
        %742 = vmatmul.mubr.bf16.gmra.mrb[0].mxu0 %v704
        %v743 = vpop.f32.mrb[0].mxu0
        %v744 = vadd.f32 0.0, %v743
        %v745 = vpop.f32.mrb[0].mxu0
        %v746 = vpop.f32.mrb[0].mxu0
        %v747 = vpop.f32.mrb[0].mxu0
        %748 = vdwg.mxu0
        %v749 = vmul.f32 %v744, 0.35355338
        %v750 = vsel %vm585, %v749, -inf
        %751 = vmax.xlane.f32.xlu0 %v750
        %v752 = vpop.xlane.xlu0 %751
        %v753 = vsub.f32 %v749, %v752
        %v754 = vmul.f32 %v753, 1.442695
        %v755 = vpow.pop %v754
        %v756 = vsel %vm585, %v755, 0.0
        %757 = vadd.xlane.f32.xlu0 %v756
        %v758 = vpop.xlane.xlu0 %757
        %v759 = vrcp.pop %v758
        %v760 = vmul.f32 %v755, %v759
        %v761 = vpack.c.bf16 %v760, %v760
        %762 = vrot.lane.b32.xlu0 %v583, 88
        %v763 = vpop.permute.xlu0 %762
        %v765 = vsel %vm585, %v761, 0
        %v768 = vsel %vm651, %v763, 0
        %770 = vmatprep.subr.bf16.mxu0 0
        %771 = vmatpush1.bf16.msra.mxu0 %v768
        %772 = vmatprep.subr.bf16.mxu0 0
        %773 = vmatpush1.bf16.msra.mxu0 0
        %774 = vmatprep.subr.bf16.mxu0 0
        %775 = vmatpush1.bf16.msra.mxu0 0
        %776 = vmatprep.subr.bf16.mxu0 0
        %777 = vmatpush1.bf16.msra.mxu0 0
        %778 = vmatprep.subr.bf16.mxu0 0
        %779 = vmatpush1.bf16.msra.mxu0 0
        %780 = vmatprep.subr.bf16.mxu0 0
        %781 = vmatpush1.bf16.msra.mxu0 0
        %782 = vmatprep.subr.bf16.mxu0 0
        %783 = vmatpush1.bf16.msra.mxu0 0
        %784 = vmatprep.subr.bf16.mxu0 0
        %785 = vmatpush1.bf16.msra.mxu0 0
        %786 = vmatprep.subr.bf16.mxu0 0
        %787 = vmatpush1.bf16.msra.mxu0 0
        %788 = vmatprep.subr.bf16.mxu0 0
        %789 = vmatpush1.bf16.msra.mxu0 0
        %790 = vmatprep.subr.bf16.mxu0 0
        %791 = vmatpush1.bf16.msra.mxu0 0
        %792 = vmatprep.subr.bf16.mxu0 0
        %793 = vmatpush1.bf16.msra.mxu0 0
        %794 = vmatprep.subr.bf16.mxu0 0
        %795 = vmatpush1.bf16.msra.mxu0 0
        %796 = vmatprep.subr.bf16.mxu0 0
        %797 = vmatpush1.bf16.msra.mxu0 0
        %798 = vmatprep.subr.bf16.mxu0 0
        %799 = vmatpush1.bf16.msra.mxu0 0
        %800 = vmatprep.subr.bf16.mxu0 0
        %801 = vmatpush1.bf16.msra.mxu0 0
        %802 = vmatprep.mubr.bf16.mxu0 0
        %803 = vmatmul.mubr.bf16.gmra.mrb[0].mxu0 %v765
        %v804 = vpop.f32.mrb[0].mxu0
        %v805 = vadd.f32 0.0, %v804
        %v806 = vpop.f32.mrb[0].mxu0
        %v807 = vpop.f32.mrb[0].mxu0
        %v808 = vpop.f32.mrb[0].mxu0
        %809 = vdwg.mxu0
        %v810 = vpack.c.bf16 %v805, %v805
        %v812 = vunpack.c.l.b16 %v810
        %v813 = vpack.c.b16 %v812, %v812
        %814 = vrot.lane.b32.xlu0 %v813, 8
        %v815 = vpop.permute.xlu0 %814
        %vm817 = vcmask 126016
        %818 = vst.msk [vmem:[#allocation2] sm:$0xf] %vm817, %v815
        %819 = vrot.lane.b32.xlu0 %v584, 112
        %v820 = vpop.permute.xlu0 %819
        %821 = vrot.lane.b32.xlu0 %v583, 112
        %v822 = vpop.permute.xlu0 %821
        %v824 = vsel %vm585, %v820, 0
        %v827 = vsel %vm585, %v822, 0
        %829 = vmatprep.subr.bf16.mxu0 0
        %830 = vmatpush1.bf16.xpose.msra.mxu0 %v827
        %831 = vmatprep.subr.bf16.mxu0 0
        %832 = vmatpush1.bf16.xpose.msra.mxu0 0
        %833 = vmatprep.subr.bf16.mxu0 0
        %834 = vmatpush1.bf16.xpose.msra.mxu0 0
        %835 = vmatprep.subr.bf16.mxu0 0
        %836 = vmatpush1.bf16.xpose.msra.mxu0 0
        %837 = vmatprep.subr.bf16.mxu0 0
        %838 = vmatpush1.bf16.xpose.msra.mxu0 0
        %839 = vmatprep.subr.bf16.mxu0 0
        %840 = vmatpush1.bf16.xpose.msra.mxu0 0
        %841 = vmatprep.subr.bf16.mxu0 0
        %842 = vmatpush1.bf16.xpose.msra.mxu0 0
        %843 = vmatprep.subr.bf16.mxu0 0
        %844 = vmatpush1.bf16.xpose.msra.mxu0 0
        %845 = vmatprep.subr.bf16.mxu0 0
        %846 = vmatpush1.bf16.xpose.msra.mxu0 0
        %847 = vmatprep.subr.bf16.mxu0 0
        %848 = vmatpush1.bf16.xpose.msra.mxu0 0
        %849 = vmatprep.subr.bf16.mxu0 0
        %850 = vmatpush1.bf16.xpose.msra.mxu0 0
        %851 = vmatprep.subr.bf16.mxu0 0
        %852 = vmatpush1.bf16.xpose.msra.mxu0 0
        %853 = vmatprep.subr.bf16.mxu0 0
        %854 = vmatpush1.bf16.xpose.msra.mxu0 0
        %855 = vmatprep.subr.bf16.mxu0 0
        %856 = vmatpush1.bf16.xpose.msra.mxu0 0
        %857 = vmatprep.subr.bf16.mxu0 0
        %858 = vmatpush1.bf16.xpose.msra.mxu0 0
        %859 = vmatprep.subr.bf16.mxu0 0
        %860 = vmatpush1.bf16.xpose.msra.mxu0 0
        %861 = vmatprep.mubr.bf16.mxu0 0
        %862 = vmatmul.mubr.bf16.gmra.mrb[0].mxu0 %v824
        %v863 = vpop.f32.mrb[0].mxu0
        %v864 = vadd.f32 0.0, %v863
        %v865 = vpop.f32.mrb[0].mxu0
        %v866 = vpop.f32.mrb[0].mxu0
        %v867 = vpop.f32.mrb[0].mxu0
        %868 = vdwg.mxu0
        %v869 = vmul.f32 %v864, 0.35355338
        %v870 = vsel %vm585, %v869, -inf
        %871 = vmax.xlane.f32.xlu0 %v870
        %v872 = vpop.xlane.xlu0 %871
        %v873 = vsub.f32 %v869, %v872
        %v874 = vmul.f32 %v873, 1.442695
        %v875 = vpow.pop %v874
        %v876 = vsel %vm585, %v875, 0.0
        %877 = vadd.xlane.f32.xlu0 %v876
        %v878 = vpop.xlane.xlu0 %877
        %v879 = vrcp.pop %v878
        %v880 = vmul.f32 %v875, %v879
        %v881 = vpack.c.bf16 %v880, %v880
        %882 = vrot.lane.b32.xlu0 %v583, 80
        %v883 = vpop.permute.xlu0 %882
        %v885 = vsel %vm585, %v881, 0
        %v888 = vsel %vm651, %v883, 0
        %890 = vmatprep.subr.bf16.mxu0 0
        %891 = vmatpush1.bf16.msra.mxu0 %v888
        %892 = vmatprep.subr.bf16.mxu0 0
        %893 = vmatpush1.bf16.msra.mxu0 0
        %894 = vmatprep.subr.bf16.mxu0 0
        %895 = vmatpush1.bf16.msra.mxu0 0
        %896 = vmatprep.subr.bf16.mxu0 0
        %897 = vmatpush1.bf16.msra.mxu0 0
        %898 = vmatprep.subr.bf16.mxu0 0
        %899 = vmatpush1.bf16.msra.mxu0 0
        %900 = vmatprep.subr.bf16.mxu0 0
        %901 = vmatpush1.bf16.msra.mxu0 0
        %902 = vmatprep.subr.bf16.mxu0 0
        %903 = vmatpush1.bf16.msra.mxu0 0
        %904 = vmatprep.subr.bf16.mxu0 0
        %905 = vmatpush1.bf16.msra.mxu0 0
        %906 = vmatprep.subr.bf16.mxu0 0
        %907 = vmatpush1.bf16.msra.mxu0 0
        %908 = vmatprep.subr.bf16.mxu0 0
        %909 = vmatpush1.bf16.msra.mxu0 0
        %910 = vmatprep.subr.bf16.mxu0 0
        %911 = vmatpush1.bf16.msra.mxu0 0
        %912 = vmatprep.subr.bf16.mxu0 0
        %913 = vmatpush1.bf16.msra.mxu0 0
        %914 = vmatprep.subr.bf16.mxu0 0
        %915 = vmatpush1.bf16.msra.mxu0 0
        %916 = vmatprep.subr.bf16.mxu0 0
        %917 = vmatpush1.bf16.msra.mxu0 0
        %918 = vmatprep.subr.bf16.mxu0 0
        %919 = vmatpush1.bf16.msra.mxu0 0
        %920 = vmatprep.subr.bf16.mxu0 0
        %921 = vmatpush1.bf16.msra.mxu0 0
        %922 = vmatprep.mubr.bf16.mxu0 0
        %923 = vmatmul.mubr.bf16.gmra.mrb[0].mxu0 %v885
        %v924 = vpop.f32.mrb[0].mxu0
        %v925 = vadd.f32 0.0, %v924
        %v926 = vpop.f32.mrb[0].mxu0
        %v927 = vpop.f32.mrb[0].mxu0
        %v928 = vpop.f32.mrb[0].mxu0
        %929 = vdwg.mxu0
        %v930 = vpack.c.bf16 %v925, %v925
        %v932 = vunpack.c.l.b16 %v930
        %v933 = vpack.c.b16 %v932, %v932
        %934 = vrot.lane.b32.xlu0 %v933, 16
        %v935 = vpop.permute.xlu0 %934
        %vm937 = vcmask 191616
        %938 = vst.msk [vmem:[#allocation2] sm:$0xf] %vm937, %v935
        %939 = vrot.lane.b32.xlu0 %v584, 104
        %v940 = vpop.permute.xlu0 %939
        %941 = vrot.lane.b32.xlu0 %v583, 104
        %v942 = vpop.permute.xlu0 %941
        %v944 = vsel %vm585, %v940, 0
        %v947 = vsel %vm585, %v942, 0
        %949 = vmatprep.subr.bf16.mxu0 0
        %950 = vmatpush1.bf16.xpose.msra.mxu0 %v947
        %951 = vmatprep.subr.bf16.mxu0 0
        %952 = vmatpush1.bf16.xpose.msra.mxu0 0
        %953 = vmatprep.subr.bf16.mxu0 0
        %954 = vmatpush1.bf16.xpose.msra.mxu0 0
        %955 = vmatprep.subr.bf16.mxu0 0
        %956 = vmatpush1.bf16.xpose.msra.mxu0 0
        %957 = vmatprep.subr.bf16.mxu0 0
        %958 = vmatpush1.bf16.xpose.msra.mxu0 0
        %959 = vmatprep.subr.bf16.mxu0 0
        %960 = vmatpush1.bf16.xpose.msra.mxu0 0
        %961 = vmatprep.subr.bf16.mxu0 0
        %962 = vmatpush1.bf16.xpose.msra.mxu0 0
        %963 = vmatprep.subr.bf16.mxu0 0
        %964 = vmatpush1.bf16.xpose.msra.mxu0 0
        %965 = vmatprep.subr.bf16.mxu0 0
        %966 = vmatpush1.bf16.xpose.msra.mxu0 0
        %967 = vmatprep.subr.bf16.mxu0 0
        %968 = vmatpush1.bf16.xpose.msra.mxu0 0
        %969 = vmatprep.subr.bf16.mxu0 0
        %970 = vmatpush1.bf16.xpose.msra.mxu0 0
        %971 = vmatprep.subr.bf16.mxu0 0
        %972 = vmatpush1.bf16.xpose.msra.mxu0 0
        %973 = vmatprep.subr.bf16.mxu0 0
        %974 = vmatpush1.bf16.xpose.msra.mxu0 0
        %975 = vmatprep.subr.bf16.mxu0 0
        %976 = vmatpush1.bf16.xpose.msra.mxu0 0
        %977 = vmatprep.subr.bf16.mxu0 0
        %978 = vmatpush1.bf16.xpose.msra.mxu0 0
        %979 = vmatprep.subr.bf16.mxu0 0
        %980 = vmatpush1.bf16.xpose.msra.mxu0 0
        %981 = vmatprep.mubr.bf16.mxu0 0
        %982 = vmatmul.mubr.bf16.gmra.mrb[0].mxu0 %v944
        %v983 = vpop.f32.mrb[0].mxu0
        %v984 = vadd.f32 0.0, %v983
        %v985 = vpop.f32.mrb[0].mxu0
        %v986 = vpop.f32.mrb[0].mxu0
        %v987 = vpop.f32.mrb[0].mxu0
        %988 = vdwg.mxu0
        %v989 = vmul.f32 %v984, 0.35355338
        %v990 = vsel %vm585, %v989, -inf
        %991 = vmax.xlane.f32.xlu0 %v990
        %v992 = vpop.xlane.xlu0 %991
        %v993 = vsub.f32 %v989, %v992
        %v994 = vmul.f32 %v993, 1.442695
        %v995 = vpow.pop %v994
        %v996 = vsel %vm585, %v995, 0.0
        %997 = vadd.xlane.f32.xlu0 %v996
        %v998 = vpop.xlane.xlu0 %997
        %v999 = vrcp.pop %v998
        %v1000 = vmul.f32 %v995, %v999
        %v1001 = vpack.c.bf16 %v1000, %v1000
        %1002 = vrot.lane.b32.xlu0 %v583, 72
        %v1003 = vpop.permute.xlu0 %1002
        %v1005 = vsel %vm585, %v1001, 0
        %v1008 = vsel %vm651, %v1003, 0
        %1010 = vmatprep.subr.bf16.mxu0 0
        %1011 = vmatpush1.bf16.msra.mxu0 %v1008
        %1012 = vmatprep.subr.bf16.mxu0 0
        %1013 = vmatpush1.bf16.msra.mxu0 0
        %1014 = vmatprep.subr.bf16.mxu0 0
        %1015 = vmatpush1.bf16.msra.mxu0 0
        %1016 = vmatprep.subr.bf16.mxu0 0
        %1017 = vmatpush1.bf16.msra.mxu0 0
        %1018 = vmatprep.subr.bf16.mxu0 0
        %1019 = vmatpush1.bf16.msra.mxu0 0
        %1020 = vmatprep.subr.bf16.mxu0 0
        %1021 = vmatpush1.bf16.msra.mxu0 0
        %1022 = vmatprep.subr.bf16.mxu0 0
        %1023 = vmatpush1.bf16.msra.mxu0 0
        %1024 = vmatprep.subr.bf16.mxu0 0
        %1025 = vmatpush1.bf16.msra.mxu0 0
        %1026 = vmatprep.subr.bf16.mxu0 0
        %1027 = vmatpush1.bf16.msra.mxu0 0
        %1028 = vmatprep.subr.bf16.mxu0 0
        %1029 = vmatpush1.bf16.msra.mxu0 0
        %1030 = vmatprep.subr.bf16.mxu0 0
        %1031 = vmatpush1.bf16.msra.mxu0 0
        %1032 = vmatprep.subr.bf16.mxu0 0
        %1033 = vmatpush1.bf16.msra.mxu0 0
        %1034 = vmatprep.subr.bf16.mxu0 0
        %1035 = vmatpush1.bf16.msra.mxu0 0
        %1036 = vmatprep.subr.bf16.mxu0 0
        %1037 = vmatpush1.bf16.msra.mxu0 0
        %1038 = vmatprep.subr.bf16.mxu0 0
        %1039 = vmatpush1.bf16.msra.mxu0 0
        %1040 = vmatprep.subr.bf16.mxu0 0
        %1041 = vmatpush1.bf16.msra.mxu0 0
        %1042 = vmatprep.mubr.bf16.mxu0 0
        %1043 = vmatmul.mubr.bf16.gmra.mrb[0].mxu0 %v1005
        %v1044 = vpop.f32.mrb[0].mxu0
        %v1045 = vadd.f32 0.0, %v1044
        %v1046 = vpop.f32.mrb[0].mxu0
        %v1047 = vpop.f32.mrb[0].mxu0
        %v1048 = vpop.f32.mrb[0].mxu0
        %1049 = vdwg.mxu0
        %v1050 = vpack.c.bf16 %v1045, %v1045
        %v1052 = vunpack.c.l.b16 %v1050
        %v1053 = vpack.c.b16 %v1052, %v1052
        %1054 = vrot.lane.b32.xlu0 %v1053, 24
        %v1055 = vpop.permute.xlu0 %1054
        %vm1057 = vcmask 257216
        %1058 = vst.msk [vmem:[#allocation2] sm:$0xf] %vm1057, %v1055
        %v1059 = vld [vmem:[#allocation2] sm:$0xf]
        %v1060 = vld [vmem:[#allocation10] sm:$0xf]
        %v1061 = vld [vmem:[#allocation10 + $0x4] sm:$0xf]
        %v1062 = vld [vmem:[#allocation10 + $0x8] sm:$0xf]
        %v1063 = vld [vmem:[#allocation10 + $0xc] sm:$0xf]
        %v1064 = vld [vmem:[%s8] sm:$0x1]
        %v1066 = vlaneseq
        %v1067 = vshrl.u32 %v1066, 7
        %v1068 = vsub.s32 0, %v1067
        %v1069 = vrot.slane %v1064, %v1068
        %v1075 = vunpack.c.l.b16 %v1060
        %v1076 = vunpack.c.l.b16 %v1061
        %v1077 = vunpack.c.l.b16 %v1062
        %v1078 = vunpack.c.l.b16 %v1063
        %v1079 = vpack.c.b16 %v1076, %v1075
        %v1080 = vpack.c.b16 %v1078, %v1077
        %v1084 = vsel %vm399, %v1059, 0
        %1086 = vmatprep.subr.bf16.mxu0 0
        %1087 = vmatpush1.bf16.msra.mxu0 %v1079
        %1088 = vmatprep.subr.bf16.mxu0 0
        %1089 = vmatpush1.bf16.msra.mxu0 %v1080
        %1090 = vmatprep.subr.bf16.mxu0 0
        %1091 = vmatpush1.bf16.msra.mxu0 0
        %1092 = vmatprep.subr.bf16.mxu0 0
        %1093 = vmatpush1.bf16.msra.mxu0 0
        %1094 = vmatprep.subr.bf16.mxu0 0
        %1095 = vmatpush1.bf16.msra.mxu0 0
        %1096 = vmatprep.subr.bf16.mxu0 0
        %1097 = vmatpush1.bf16.msra.mxu0 0
        %1098 = vmatprep.subr.bf16.mxu0 0
        %1099 = vmatpush1.bf16.msra.mxu0 0
        %1100 = vmatprep.subr.bf16.mxu0 0
        %1101 = vmatpush1.bf16.msra.mxu0 0
        %1102 = vmatprep.subr.bf16.mxu0 0
        %1103 = vmatpush1.bf16.msra.mxu0 0
        %1104 = vmatprep.subr.bf16.mxu0 0
        %1105 = vmatpush1.bf16.msra.mxu0 0
        %1106 = vmatprep.subr.bf16.mxu0 0
        %1107 = vmatpush1.bf16.msra.mxu0 0
        %1108 = vmatprep.subr.bf16.mxu0 0
        %1109 = vmatpush1.bf16.msra.mxu0 0
        %1110 = vmatprep.subr.bf16.mxu0 0
        %1111 = vmatpush1.bf16.msra.mxu0 0
        %1112 = vmatprep.subr.bf16.mxu0 0
        %1113 = vmatpush1.bf16.msra.mxu0 0
        %1114 = vmatprep.subr.bf16.mxu0 0
        %1115 = vmatpush1.bf16.msra.mxu0 0
        %1116 = vmatprep.subr.bf16.mxu0 0
        %1117 = vmatpush1.bf16.msra.mxu0 0
        %1118 = vmatprep.mubr.bf16.mxu0 0
        %1119 = vmatmul.mubr.bf16.gmra.mrb[0].mxu0 %v1084
        %v1120 = vpop.f32.mrb[0].mxu0
        %v1121 = vadd.f32 %v1069, %v1120
        %v1122 = vpop.f32.mrb[0].mxu0
        %v1123 = vpop.f32.mrb[0].mxu0
        %v1124 = vpop.f32.mrb[0].mxu0
        %1125 = vdwg.mxu0
        %v1126 = vadd.f32 %v398, %v1121
        %1127 = vst.msk [vmem:[%s392] sm:$0xff] %vm399, %v1126
        %s1128 = sand.u32 %s245, 1
        %s1129 = scalar_lea.sflag [#allocation7], %s1128
        %s1130 = sand.u32 %s245, 1
        %s1131 = smul.addr %s1130, 8
        %s1132 = scalar_lea.vmem [#allocation11], %s1131
        // Predicated region
        $region69: #{tpu_custom_call.1} parent=55 // pred_check
          %p1133 = pneg %p255
        $region70: #{tpu_custom_call.1} parent=55 // pred_check_branch
          %1135 = sbr.rel (%p1133) target = $region72
        $region71: #{tpu_custom_call.1} parent=55 // pred_region
          %s1137 = ssub.s32 128, 128
          %1138 = vsyncadd %s1129, %s1137
          %s1139 = sadd.s32 %s34, %s33
          %s1140 = smul.addr %s1139, 128
          %s1141 = scalar_lea.hbm %s9, %s1140
          %s1143 = sshll.u32 %s1132, 4
          %s1144 = int_to_ptr.vmem [resolvable:$true] %s1143
          %1146 = dma.vmem_to_hbm [thread:$0]  %s1144, 128, %s1141, %s1129
        $region72: #{tpu_custom_call.1} parent=55 // pred_fallthru
          _
      $region56: #{tpu_custom_call.1} parent=5 // pred_fallthru
        _
      %p1147 = scmp.le.s32.totalorder 2, %s24
      // Predicated region
      $region73: #{tpu_custom_call.1} parent=5 // pred_check
        %p1148 = pneg %p1147
      $region74: #{tpu_custom_call.1} parent=5 // pred_check_branch
        %1150 = sbr.rel (%p1148) target = $region76
      $region75: #{tpu_custom_call.1} parent=5 // pred_region
        %s1151 = ssub.s32 %s24, 2
        // Predicated region
        $region77: #{tpu_custom_call.1} parent=75 // pred_check
          %p1152 = pneg %p261
        $region78: #{tpu_custom_call.1} parent=75 // pred_check_branch
          %1154 = sbr.rel (%p1152) target = $region80
        $region79: #{tpu_custom_call.1} parent=75 // pred_region
          %s1155 = sand.u32 %s246, 1
          %s1156 = scalar_lea.sflag [#allocation7], %s1155
          %s1157 = sand.u32 %s246, 1
          %s1158 = smul.addr %s1157, 8
          %s1159 = scalar_lea.vmem [#allocation11], %s1158
          %1160 = dma.done %s1156, 128
        $region80: #{tpu_custom_call.1} parent=75 // pred_fallthru
          _
      $region76: #{tpu_custom_call.1} parent=5 // pred_fallthru
        _
    $region6: #{tpu_custom_call.1} parent=1 // loop_footer
      %s28 = sadd.s32 1, %s24
    $region7: #{tpu_custom_call.1} parent=1 // loop_footer_branch
      %23 = sbr.rel target = $region3
    $region8: #{tpu_custom_call.1} parent=1 // loop_exit
      _
    %1161 = vsyncpa [#allocation6], 1
    %s1162 = scalar_lea.sflag [#allocation6], 1
    %1163 = vsyncpa %s1162, 1
    %1164 = vsyncpa [#allocation9], 1
    %1165 = vsyncpa [#allocation7], 1
    %s1166 = scalar_lea.sflag [#allocation7], 1
    %1167 = vsyncpa %s1166, 1

// kernel: tpu_custom_call.1
$region0: #{tpu_custom_call.1}
  #allocation0 [shape = 'u32[]', space=smem, size = 0x4, offset = 0x4, fixed_abs, tag = 'smem constant byte address 0x4 - core index']
  #allocation1 [shape = 'u32[144,128]{1,0:T(1,128)}', space=vmem, size = 0x12000, scoped, tag = 'internal scratch']
  #allocation2 [shape = 'bf16[8,32]{1,0:T(8,128)(2,1)}', space=vmem, size = 0x800, scoped, tag = 'scratch operand']
  #allocation3 [shape = 'f32[1]{0:T(128)S(6)}', space=smem, size = 0x200, scoped, tag = 'scoped memory for tpu_custom_call.1']
  #allocation4 [shape = 'f32[1]{0:T(128)S(6)}', space=smem, size = 0x200, scoped, tag = 'scoped memory for tpu_custom_call.1']
  %s0 = inlined_call_operand.<no memory space> [shape: f32[1], index: 0, kind: input, shape index: {}]
  %s1 = inlined_call_operand.<no memory space> [shape: f32[1], index: 1, kind: input, shape index: {}]
  %s2 = inlined_call_operand.hbm [shape: f32[2,8,32], index: 2, kind: input, shape index: {}]
  %s3 = inlined_call_operand.hbm [shape: bf16[32,32], index: 3, kind: input, shape index: {}]
  %s4 = inlined_call_operand.vmem [shape: f32[1,32], index: 4, kind: input, shape index: {}]
  %s5 = inlined_call_operand.vmem [shape: bf16[32,64], index: 5, kind: input, shape index: {}]
  %s6 = inlined_call_operand.vmem [shape: f32[1,64], index: 6, kind: input, shape index: {}]
  %s7 = inlined_call_operand.hbm [shape: bf16[32,32], index: 7, kind: input, shape index: {}]
  %s8 = inlined_call_operand.vmem [shape: f32[1,32], index: 8, kind: input, shape index: {}]
  %s9 = inlined_call_operand.hbm [shape: f32[2,8,32], index: 9, kind: output, shape index: {}]
  %s10 = sld [smem:[#allocation0]]
  $region81: #{tpu_custom_call.1} parent=0
    _
  %s12 = ssub.s32 1, %s10
  %s13 = scalar_select 0, %s12, %s10
  %14 = sst [smem:[#allocation3]] %s0
  %15 = sst [smem:[#allocation4]] %s1
  $region1: #{tpu_custom_call.1} parent=0
    #allocation5 [shape = 'u8[8192]{0}', space=vmem, size = 0x2000, scoped, tag = 'input window, operand 2']
    #allocation6 [shape = 's32[2]{0}', space=sflag, size = 0x8, scoped, tag = 'scoped memory for tpu_custom_call.1']
    #allocation7 [shape = 's32[2]{0}', space=sflag, size = 0x8, scoped, tag = 'scoped memory for tpu_custom_call.1']
    #allocation8 [shape = 'u8[8192]{0}', space=vmem, size = 0x2000, scoped, tag = 'input window, operand 3, single buffered']
    #allocation9 [shape = 's32[1]{0}', space=sflag, size = 0x4, scoped, tag = 'scoped memory for tpu_custom_call.1']
    #allocation10 [shape = 'u8[8192]{0}', space=vmem, size = 0x2000, scoped, tag = 'input window, operand 7, single buffered']
    #allocation11 [shape = 'u8[8192]{0}', space=vmem, size = 0x2000, scoped, tag = 'output window, operand 0']
    %16 = vsyncpa [#allocation6], 0
    %s17 = scalar_lea.sflag [#allocation6], 1
    %18 = vsyncpa %s17, 0
    %19 = vsyncpa [#allocation9], 0
    %20 = vsyncpa [#allocation7], 0
    %s21 = scalar_lea.sflag [#allocation7], 1
    %22 = vsyncpa %s21, 0
    loop: start=0, step=1, limit=4
    $region2: #{tpu_custom_call.1} parent=1 // loop_pre_header
      _
    $region3: #{tpu_custom_call.1} parent=1 // loop_header
      %s24 = sphi 0, %s28
      %p25 = scmp.ge.s32.totalorder %s24, 4
      %s31 = sphi 0, %s43
      %s32 = sphi 0, %s39
      %s33 = sphi 0, %s31
      %s34 = sphi 0, %s32
      %s35 = sphi 0, %s33
      %s36 = sphi 0, %s34
      %s44 = sphi 0, %s44
      %s46 = sphi 0, %s44
      %s47 = sphi 0, %s46
      %s61 = sphi 0, %s47
      %s65 = sphi 0, %s65
      %s67 = sphi 0, %s65
      %s68 = sphi 0, %s67
      %s82 = sphi 0, %s68
      %s88 = sphi 0, %s90
      %s91 = sphi 0, %s88
      %s92 = sphi 0, %s91
      %s108 = sphi 0, %s92
      %s112 = sphi 0, %s112
      %s114 = sphi 0, %s112
      %s115 = sphi 0, %s114
      %s129 = sphi 0, %s115
      %s133 = sphi 0, %s133
      %s135 = sphi 0, %s133
      %s136 = sphi 0, %s135
      %s150 = sphi 0, %s136
      %s154 = sphi 0, %s154
      %s156 = sphi 0, %s154
      %s157 = sphi 0, %s156
      %s171 = sphi 0, %s157
      %s175 = sphi 0, %s175
      %s177 = sphi 0, %s175
      %s178 = sphi 0, %s177
      %s192 = sphi 0, %s178
      %s196 = sphi 0, %s196
      %s198 = sphi 0, %s196
      %s199 = sphi 0, %s198
      %s213 = sphi 0, %s199
      %s217 = sphi 0, %s217
      %s219 = sphi 0, %s217
      %s220 = sphi 0, %s219
      %s234 = sphi 0, %s220
      %s242 = sphi 0, %s244
      %s245 = sphi 0, %s242
      %s246 = sphi 0, %s245
      %s262 = sphi 0, %s246
    $region4: #{tpu_custom_call.1} parent=1 // loop_header_branch
      %27 = sbr.rel (%p25) target = $region8
    $region5: #{tpu_custom_call.1} parent=1 // loop_body
      %s29 = ssub.s32 %s24, 1
      %s30 = ssub.s32 %s24, 2
      %s37 = sadd.s32 1, %s32
      %p38 = scmp.ge.s32.totalorder %s37, 1
      %s39 = scalar_select %p38, 0, %s37
      %s40 = sadd.s32 1, %s31
      %s41 = scalar_select %p38, %s40, %s31
      %p42 = scmp.ge.s32.totalorder %s41, 2
      %s43 = scalar_select %p42, 0, %s41
      %s45 = sadd.s32 %s44, 1
      %p48 = scmp.eq.s32.totalorder %s24, 1
      %p49 = scmp.ne.s32.totalorder %s44, %s46
      %p50 = scmp.eq.s32.totalorder %s24, 0
      %p51 = por %p49, %p50
      %p52 = scmp.ne.s32.totalorder %s44, %s46
      %p53 = scmp.eq.s32.totalorder %s29, 1
      %p54 = por %p52, %p53
      %p55 = scmp.ne.s32.totalorder %s46, %s47
      %p56 = scmp.eq.s32.totalorder %s29, 0
      %p57 = por %p55, %p56
      %p58 = scmp.ne.s32.totalorder %s46, %s47
      %p59 = scmp.eq.s32.totalorder %s30, 1
      %p60 = por %p58, %p59
      %p62 = scmp.ne.s32.totalorder %s47, %s61
      %p63 = scmp.eq.s32.totalorder %s30, 0
      %p64 = por %p62, %p63
      %s66 = sadd.s32 %s65, 1
      %p69 = scmp.eq.s32.totalorder %s24, 1
      %p70 = scmp.ne.s32.totalorder %s65, %s67
      %p71 = scmp.eq.s32.totalorder %s24, 0
      %p72 = por %p70, %p71
      %p73 = scmp.ne.s32.totalorder %s65, %s67
      %p74 = scmp.eq.s32.totalorder %s29, 1
      %p75 = por %p73, %p74
      %p76 = scmp.ne.s32.totalorder %s67, %s68
      %p77 = scmp.eq.s32.totalorder %s29, 0
      %p78 = por %p76, %p77
      %p79 = scmp.ne.s32.totalorder %s67, %s68
      %p80 = scmp.eq.s32.totalorder %s30, 1
      %p81 = por %p79, %p80
      %p83 = scmp.ne.s32.totalorder %s68, %s82
      %p84 = scmp.eq.s32.totalorder %s30, 0
      %p85 = por %p83, %p84
      %s86 = ssub.s32 %s31, %s43
      %p87 = scmp.eq.s32.totalorder %s86, 0
      %s89 = sadd.s32 %s88, 1
      %s90 = scalar_select %p87, %s88, %s89
      %p93 = pneg %p87
      %p94 = scmp.eq.s32.totalorder %s24, 1
      %p95 = por %p93, %p94
      %p96 = scmp.ne.s32.totalorder %s88, %s91
      %p97 = scmp.eq.s32.totalorder %s24, 0
      %p98 = por %p96, %p97
      %p99 = scmp.ne.s32.totalorder %s88, %s91
      %p100 = scmp.eq.s32.totalorder %s29, 1
      %p101 = por %p99, %p100
      %p102 = scmp.ne.s32.totalorder %s91, %s92
      %p103 = scmp.eq.s32.totalorder %s29, 0
      %p104 = por %p102, %p103
      %p105 = scmp.ne.s32.totalorder %s91, %s92
      %p106 = scmp.eq.s32.totalorder %s30, 1
      %p107 = por %p105, %p106
      %p109 = scmp.ne.s32.totalorder %s92, %s108
      %p110 = scmp.eq.s32.totalorder %s30, 0
      %p111 = por %p109, %p110
      %s113 = sadd.s32 %s112, 1
      %p116 = scmp.eq.s32.totalorder %s24, 1
      %p117 = scmp.ne.s32.totalorder %s112, %s114
      %p118 = scmp.eq.s32.totalorder %s24, 0
      %p119 = por %p117, %p118
      %p120 = scmp.ne.s32.totalorder %s112, %s114
      %p121 = scmp.eq.s32.totalorder %s29, 1
      %p122 = por %p120, %p121
      %p123 = scmp.ne.s32.totalorder %s114, %s115
      %p124 = scmp.eq.s32.totalorder %s29, 0
      %p125 = por %p123, %p124
      %p126 = scmp.ne.s32.totalorder %s114, %s115
      %p127 = scmp.eq.s32.totalorder %s30, 1
      %p128 = por %p126, %p127
      %p130 = scmp.ne.s32.totalorder %s115, %s129
      %p131 = scmp.eq.s32.totalorder %s30, 0
      %p132 = por %p130, %p131
      %s134 = sadd.s32 %s133, 1
      %p137 = scmp.eq.s32.totalorder %s24, 1
      %p138 = scmp.ne.s32.totalorder %s133, %s135
      %p139 = scmp.eq.s32.totalorder %s24, 0
      %p140 = por %p138, %p139
      %p141 = scmp.ne.s32.totalorder %s133, %s135
      %p142 = scmp.eq.s32.totalorder %s29, 1
      %p143 = por %p141, %p142
      %p144 = scmp.ne.s32.totalorder %s135, %s136
      %p145 = scmp.eq.s32.totalorder %s29, 0
      %p146 = por %p144, %p145
      %p147 = scmp.ne.s32.totalorder %s135, %s136
      %p148 = scmp.eq.s32.totalorder %s30, 1
      %p149 = por %p147, %p148
      %p151 = scmp.ne.s32.totalorder %s136, %s150
      %p152 = scmp.eq.s32.totalorder %s30, 0
      %p153 = por %p151, %p152
      %s155 = sadd.s32 %s154, 1
      %p158 = scmp.eq.s32.totalorder %s24, 1
      %p159 = scmp.ne.s32.totalorder %s154, %s156
      %p160 = scmp.eq.s32.totalorder %s24, 0
      %p161 = por %p159, %p160
      %p162 = scmp.ne.s32.totalorder %s154, %s156
      %p163 = scmp.eq.s32.totalorder %s29, 1
      %p164 = por %p162, %p163
      %p165 = scmp.ne.s32.totalorder %s156, %s157
      %p166 = scmp.eq.s32.totalorder %s29, 0
      %p167 = por %p165, %p166
      %p168 = scmp.ne.s32.totalorder %s156, %s157
      %p169 = scmp.eq.s32.totalorder %s30, 1
      %p170 = por %p168, %p169
      %p172 = scmp.ne.s32.totalorder %s157, %s171
      %p173 = scmp.eq.s32.totalorder %s30, 0
      %p174 = por %p172, %p173
      %s176 = sadd.s32 %s175, 1
      %p179 = scmp.eq.s32.totalorder %s24, 1
      %p180 = scmp.ne.s32.totalorder %s175, %s177
      %p181 = scmp.eq.s32.totalorder %s24, 0
      %p182 = por %p180, %p181
      %p183 = scmp.ne.s32.totalorder %s175, %s177
      %p184 = scmp.eq.s32.totalorder %s29, 1
      %p185 = por %p183, %p184
      %p186 = scmp.ne.s32.totalorder %s177, %s178
      %p187 = scmp.eq.s32.totalorder %s29, 0
      %p188 = por %p186, %p187
      %p189 = scmp.ne.s32.totalorder %s177, %s178
      %p190 = scmp.eq.s32.totalorder %s30, 1
      %p191 = por %p189, %p190
      %p193 = scmp.ne.s32.totalorder %s178, %s192
      %p194 = scmp.eq.s32.totalorder %s30, 0
      %p195 = por %p193, %p194
      %s197 = sadd.s32 %s196, 1
      %p200 = scmp.eq.s32.totalorder %s24, 1
      %p201 = scmp.ne.s32.totalorder %s196, %s198
      %p202 = scmp.eq.s32.totalorder %s24, 0
      %p203 = por %p201, %p202
      %p204 = scmp.ne.s32.totalorder %s196, %s198
      %p205 = scmp.eq.s32.totalorder %s29, 1
      %p206 = por %p204, %p205
      %p207 = scmp.ne.s32.totalorder %s198, %s199
      %p208 = scmp.eq.s32.totalorder %s29, 0
      %p209 = por %p207, %p208
      %p210 = scmp.ne.s32.totalorder %s198, %s199
      %p211 = scmp.eq.s32.totalorder %s30, 1
      %p212 = por %p210, %p211
      %p214 = scmp.ne.s32.totalorder %s199, %s213
      %p215 = scmp.eq.s32.totalorder %s30, 0
      %p216 = por %p214, %p215
      %s218 = sadd.s32 %s217, 1
      %p221 = scmp.eq.s32.totalorder %s24, 1
      %p222 = scmp.ne.s32.totalorder %s217, %s219
      %p223 = scmp.eq.s32.totalorder %s24, 0
      %p224 = por %p222, %p223
      %p225 = scmp.ne.s32.totalorder %s217, %s219
      %p226 = scmp.eq.s32.totalorder %s29, 1
      %p227 = por %p225, %p226
      %p228 = scmp.ne.s32.totalorder %s219, %s220
      %p229 = scmp.eq.s32.totalorder %s29, 0
      %p230 = por %p228, %p229
      %p231 = scmp.ne.s32.totalorder %s219, %s220
      %p232 = scmp.eq.s32.totalorder %s30, 1
      %p233 = por %p231, %p232
      %p235 = scmp.ne.s32.totalorder %s220, %s234
      %p236 = scmp.eq.s32.totalorder %s30, 0
      %p237 = por %p235, %p236
      %s238 = ssub.s32 %s31, %s43
      %s239 = ssub.s32 %s32, %s39
      %s240 = sor.u32 %s238, %s239
      %p241 = scmp.eq.s32.totalorder %s240, 0
      %s243 = sadd.s32 %s242, 1
      %s244 = scalar_select %p241, %s242, %s243
      %p247 = pneg %p241
      %p248 = scmp.eq.s32.totalorder %s24, 1
      %p249 = por %p247, %p248
      %p250 = scmp.ne.s32.totalorder %s242, %s245
      %p251 = scmp.eq.s32.totalorder %s24, 0
      %p252 = por %p250, %p251
      %p253 = scmp.ne.s32.totalorder %s242, %s245
      %p254 = scmp.eq.s32.totalorder %s29, 1
      %p255 = por %p253, %p254
      %p256 = scmp.ne.s32.totalorder %s245, %s246
      %p257 = scmp.eq.s32.totalorder %s29, 0
      %p258 = por %p256, %p257
      %p259 = scmp.ne.s32.totalorder %s245, %s246
      %p260 = scmp.eq.s32.totalorder %s30, 1
      %p261 = por %p259, %p260
      %p263 = scmp.ne.s32.totalorder %s246, %s262
      %p264 = scmp.eq.s32.totalorder %s30, 0
      %p265 = por %p263, %p264
      %p266 = scmp.le.s32.totalorder 1, %s24
      %p267 = scmp.lt.s32.totalorder %s24, 3
      %p268 = pnand %p266, %p267
      %p269 = pneg %p268
      // Predicated region
      $region9: #{tpu_custom_call.1} parent=5 // pred_check
        _
      $region10: #{tpu_custom_call.1} parent=5 // pred_check_branch
        %271 = sbr.rel (%p268) target = $region12
      $region11: #{tpu_custom_call.1} parent=5 // pred_region
        %s272 = ssub.s32 %s24, 1
        // Predicated region
        $region13: #{tpu_custom_call.1} parent=11 // pred_check
          %p273 = pneg %p57
        $region14: #{tpu_custom_call.1} parent=11 // pred_check_branch
          %275 = sbr.rel (%p273) target = $region16
        $region15: #{tpu_custom_call.1} parent=11 // pred_region
          _
        $region16: #{tpu_custom_call.1} parent=11 // pred_fallthru
          _
        // Predicated region
        $region17: #{tpu_custom_call.1} parent=11 // pred_check
          %p276 = pneg %p78
        $region18: #{tpu_custom_call.1} parent=11 // pred_check_branch
          %278 = sbr.rel (%p276) target = $region20
        $region19: #{tpu_custom_call.1} parent=11 // pred_region
          _
        $region20: #{tpu_custom_call.1} parent=11 // pred_fallthru
          _
        // Predicated region
        $region21: #{tpu_custom_call.1} parent=11 // pred_check
          %p279 = pneg %p125
        $region22: #{tpu_custom_call.1} parent=11 // pred_check_branch
          %281 = sbr.rel (%p279) target = $region24
        $region23: #{tpu_custom_call.1} parent=11 // pred_region
          %s283 = ssub.s32 256, 256
          %284 = vsyncadd [#allocation9], %s283
          %s285 = sshll.u32 [#allocation8], 4
          %s286 = int_to_ptr.vmem [resolvable:$true] %s285
          %291 = dma.hbm_to_vmem [thread:$0]  %s3, 256, %s286, [#allocation9], 64, 64, 4
        $region24: #{tpu_custom_call.1} parent=11 // pred_fallthru
          _
        // Predicated region
        $region25: #{tpu_custom_call.1} parent=11 // pred_check
          %p292 = pneg %p146
        $region26: #{tpu_custom_call.1} parent=11 // pred_check_branch
          %294 = sbr.rel (%p292) target = $region28
        $region27: #{tpu_custom_call.1} parent=11 // pred_region
          _
        $region28: #{tpu_custom_call.1} parent=11 // pred_fallthru
          _
        // Predicated region
        $region29: #{tpu_custom_call.1} parent=11 // pred_check
          %p295 = pneg %p167
        $region30: #{tpu_custom_call.1} parent=11 // pred_check_branch
          %297 = sbr.rel (%p295) target = $region32
        $region31: #{tpu_custom_call.1} parent=11 // pred_region
          _
        $region32: #{tpu_custom_call.1} parent=11 // pred_fallthru
          _
        // Predicated region
        $region33: #{tpu_custom_call.1} parent=11 // pred_check
          %p298 = pneg %p188
        $region34: #{tpu_custom_call.1} parent=11 // pred_check_branch
          %300 = sbr.rel (%p298) target = $region36
        $region35: #{tpu_custom_call.1} parent=11 // pred_region
          _
        $region36: #{tpu_custom_call.1} parent=11 // pred_fallthru
          _
        // Predicated region
        $region37: #{tpu_custom_call.1} parent=11 // pred_check
          %p301 = pneg %p209
        $region38: #{tpu_custom_call.1} parent=11 // pred_check_branch
          %303 = sbr.rel (%p301) target = $region40
        $region39: #{tpu_custom_call.1} parent=11 // pred_region
          %s305 = ssub.s32 256, 256
          %306 = vsyncadd [#allocation9], %s305
          %s307 = sshll.u32 [#allocation10], 4
          %s308 = int_to_ptr.vmem [resolvable:$true] %s307
          %313 = dma.hbm_to_vmem [thread:$0]  %s7, 256, %s308, [#allocation9], 64, 64, 4
        $region40: #{tpu_custom_call.1} parent=11 // pred_fallthru
          _
        // Predicated region
        $region41: #{tpu_custom_call.1} parent=11 // pred_check
          %p314 = pneg %p230
        $region42: #{tpu_custom_call.1} parent=11 // pred_check_branch
          %316 = sbr.rel (%p314) target = $region44
        $region43: #{tpu_custom_call.1} parent=11 // pred_region
          _
        $region44: #{tpu_custom_call.1} parent=11 // pred_fallthru
          _
      $region12: #{tpu_custom_call.1} parent=5 // pred_fallthru
        _
      %p317 = scmp.lt.s32.totalorder %s24, 2
      // Predicated region
      $region45: #{tpu_custom_call.1} parent=5 // pred_check
        %p318 = pneg %p317
      $region46: #{tpu_custom_call.1} parent=5 // pred_check_branch
        %320 = sbr.rel (%p318) target = $region48
      $region47: #{tpu_custom_call.1} parent=5 // pred_region
        // Predicated region
        $region49: #{tpu_custom_call.1} parent=47 // pred_check
          %p321 = pneg %p98
        $region50: #{tpu_custom_call.1} parent=47 // pred_check_branch
          %323 = sbr.rel (%p321) target = $region52
        $region51: #{tpu_custom_call.1} parent=47 // pred_region
          %s324 = sand.u32 %s88, 1
          %s325 = scalar_lea.sflag [#allocation6], %s324
          %s326 = sand.u32 %s88, 1
          %s327 = smul.addr %s326, 8
          %s328 = scalar_lea.vmem [#allocation5], %s327
          %s330 = ssub.s32 128, 128
          %331 = vsyncadd %s325, %s330
          %s332 = smul.addr %s31, 128
          %s333 = scalar_lea.hbm %s2, %s332
          %s335 = sshll.u32 %s328, 4
          %s336 = int_to_ptr.vmem [resolvable:$true] %s335
          %338 = dma.hbm_to_vmem [thread:$0]  %s333, 128, %s336, %s325
        $region52: #{tpu_custom_call.1} parent=47 // pred_fallthru
          _
      $region48: #{tpu_custom_call.1} parent=5 // pred_fallthru
        _
      %p339 = scmp.le.s32.totalorder 1, %s24
      %p340 = scmp.lt.s32.totalorder %s24, 3
      %p341 = pnand %p339, %p340
      %p342 = pneg %p341
      // Predicated region
      $region53: #{tpu_custom_call.1} parent=5 // pred_check
        _
      $region54: #{tpu_custom_call.1} parent=5 // pred_check_branch
        %344 = sbr.rel (%p341) target = $region56
      $region55: #{tpu_custom_call.1} parent=5 // pred_region
        %s345 = ssub.s32 %s24, 1
        %s346 = sand.u32 %s91, 1
        %s347 = scalar_lea.sflag [#allocation6], %s346
        %s348 = sand.u32 %s91, 1
        %s349 = smul.addr %s348, 8
        %s350 = scalar_lea.vmem [#allocation5], %s349
        // Predicated region
        $region57: #{tpu_custom_call.1} parent=55 // pred_check
          %p351 = pneg %p104
        $region58: #{tpu_custom_call.1} parent=55 // pred_check_branch
          %353 = sbr.rel (%p351) target = $region60
        $region59: #{tpu_custom_call.1} parent=55 // pred_region
          %354 = dma.done %s347, 128
        $region60: #{tpu_custom_call.1} parent=55 // pred_fallthru
          _
        // Predicated region
        $region61: #{tpu_custom_call.1} parent=55 // pred_check
          %p355 = pneg %p125
        $region62: #{tpu_custom_call.1} parent=55 // pred_check_branch
          %357 = sbr.rel (%p355) target = $region64
        $region63: #{tpu_custom_call.1} parent=55 // pred_region
          %358 = dma.done [#allocation9], 256
        $region64: #{tpu_custom_call.1} parent=55 // pred_fallthru
          _
        // Predicated region
        $region65: #{tpu_custom_call.1} parent=55 // pred_check
          %p359 = pneg %p209
        $region66: #{tpu_custom_call.1} parent=55 // pred_check_branch
          %361 = sbr.rel (%p359) target = $region68
        $region67: #{tpu_custom_call.1} parent=55 // pred_region
          %362 = dma.done [#allocation9], 256
        $region68: #{tpu_custom_call.1} parent=55 // pred_fallthru
          _
        %p363 = pneg %p57
        %p364 = pneg %p54
        %p365 = pneg %p78
        %p366 = pneg %p75
        %s367 = sand.u32 %s91, 1
        %s368 = scalar_lea.sflag [#allocation6], %s367
        %s369 = sand.u32 %s91, 1
        %s370 = smul.addr %s369, 8
        %s371 = scalar_lea.vmem [#allocation5], %s370
        %p372 = pneg %p104
        %p373 = pneg %p101
        %p374 = pneg %p125
        %p375 = pneg %p122
        %p376 = pneg %p146
        %p377 = pneg %p143
        %p378 = pneg %p167
        %p379 = pneg %p164
        %p380 = pneg %p188
        %p381 = pneg %p185
        %p382 = pneg %p209
        %p383 = pneg %p206
        %p384 = pneg %p230
        %p385 = pneg %p227
        %p386 = pneg %p258
        %p387 = pneg %p255
        %s388 = sand.u32 %s245, 1
        %s389 = scalar_lea.sflag [#allocation7], %s388
        %s390 = sand.u32 %s245, 1
        %s391 = smul.addr %s390, 8
        %s392 = scalar_lea.vmem [#allocation11], %s391
        %s394 = sld [smem:[#allocation3]]
        %s395 = sld [smem:[#allocation4]]
        %s396 = smul.u32 %s34, 8
        %s397 = scalar_lea.vmem %s350, %s396 [#allocation5]
        %v398 = vld [vmem:[%s397] sm:$0xff]
        %vm399 = vcmask 261120
        %v400 = vsel %vm399, %v398, 0.0
        %401 = vadd.xlane.f32.xlu0 %v400
        %v402 = vpop.xlane.xlu0 %401
        %v403 = vrcp.pop 32.0
        %v404 = vmul.f32 %v402, %v403
        %v405 = vsub.f32 %v398, %v404
        %v406 = vmul.f32 %v405, %v405
        %v407 = vsel %vm399, %v406, 0.0
        %408 = vadd.xlane.f32.xlu0 %v407
        %v409 = vpop.xlane.xlu0 %408
        %v410 = vrcp.pop 31.0
        %v411 = vmul.f32 %v409, %v410
        %v412 = vrsqrt.pop %v411
        %v413 = vmul.f32 %v411, %v412
        %vm414 = vcmp.eq.f32.partialorder %v411, inf
        %v415 = vsel %vm414, %v411, %v413
        %vm416 = vcmp.eq.f32.partialorder %v411, 0.0
        %v417 = vand.u32 %v411, 2147483648
        %v418 = vsel %vm416, %v417, %v415
        %v419 = vadd.f32 %v418, 1e-06
        %v420 = vrcp.pop %v419
        %v421 = vstv %s394
        %v422 = vmul.f32 %v421, %v420
        %v423 = vmul.f32 %v405, %v422
        %v424 = vstv %s395
        %v425 = vadd.f32 %v423, %v424
        %v426 = vld [vmem:[%s350] sm:$0xff]
        %v427 = vsel %vm399, %v426, 0.0
        %428 = vadd.xlane.f32.xlu0 %v427
        %v429 = vpop.xlane.xlu0 %428
        %v430 = vmul.f32 %v429, %v403
        %v431 = vsub.f32 %v426, %v430
        %v432 = vmul.f32 %v431, %v431
        %v433 = vsel %vm399, %v432, 0.0
        %434 = vadd.xlane.f32.xlu0 %v433
        %v435 = vpop.xlane.xlu0 %434
        %v436 = vmul.f32 %v435, %v410
        %v437 = vrsqrt.pop %v436
        %v438 = vmul.f32 %v436, %v437
        %vm439 = vcmp.eq.f32.partialorder %v436, inf
        %v440 = vsel %vm439, %v436, %v438
        %vm441 = vcmp.eq.f32.partialorder %v436, 0.0
        %v442 = vand.u32 %v436, 2147483648
        %v443 = vsel %vm441, %v442, %v440
        %v444 = vadd.f32 %v443, 1e-06
        %v445 = vrcp.pop %v444
        %v446 = vmul.f32 %v421, %v445
        %v447 = vmul.f32 %v431, %v446
        %v448 = vadd.f32 %v447, %v424
        %v449 = vpack.c.bf16 %v425, %v425
        %v450 = vld [vmem:[#allocation8] sm:$0xf]
        %v451 = vld [vmem:[#allocation8 + $0x4] sm:$0xf]
        %v452 = vld [vmem:[#allocation8 + $0x8] sm:$0xf]
        %v453 = vld [vmem:[#allocation8 + $0xc] sm:$0xf]
        %v454 = vld [vmem:[%s4] sm:$0x1]
        %v456 = vlaneseq
        %v457 = vshrl.u32 %v456, 7
        %v458 = vsub.s32 0, %v457
        %v459 = vrot.slane %v454, %v458
        %v465 = vunpack.c.l.b16 %v450
        %v466 = vunpack.c.l.b16 %v451
        %v467 = vunpack.c.l.b16 %v452
        %v468 = vunpack.c.l.b16 %v453
        %v469 = vpack.c.b16 %v466, %v465
        %v470 = vpack.c.b16 %v468, %v467
        %v474 = vsel %vm399, %v449, 0
        %476 = vmatprep.subr.bf16.mxu0 0
        %477 = vmatpush1.bf16.msra.mxu0 %v469
        %478 = vmatprep.subr.bf16.mxu0 0
        %479 = vmatpush1.bf16.msra.mxu0 %v470
        %480 = vmatprep.subr.bf16.mxu0 0
        %481 = vmatpush1.bf16.msra.mxu0 0
        %482 = vmatprep.subr.bf16.mxu0 0
        %483 = vmatpush1.bf16.msra.mxu0 0
        %484 = vmatprep.subr.bf16.mxu0 0
        %485 = vmatpush1.bf16.msra.mxu0 0
        %486 = vmatprep.subr.bf16.mxu0 0
        %487 = vmatpush1.bf16.msra.mxu0 0
        %488 = vmatprep.subr.bf16.mxu0 0
        %489 = vmatpush1.bf16.msra.mxu0 0
        %490 = vmatprep.subr.bf16.mxu0 0
        %491 = vmatpush1.bf16.msra.mxu0 0
        %492 = vmatprep.subr.bf16.mxu0 0
        %493 = vmatpush1.bf16.msra.mxu0 0
        %494 = vmatprep.subr.bf16.mxu0 0
        %495 = vmatpush1.bf16.msra.mxu0 0
        %496 = vmatprep.subr.bf16.mxu0 0
        %497 = vmatpush1.bf16.msra.mxu0 0
        %498 = vmatprep.subr.bf16.mxu0 0
        %499 = vmatpush1.bf16.msra.mxu0 0
        %500 = vmatprep.subr.bf16.mxu0 0
        %501 = vmatpush1.bf16.msra.mxu0 0
        %502 = vmatprep.subr.bf16.mxu0 0
        %503 = vmatpush1.bf16.msra.mxu0 0
        %504 = vmatprep.subr.bf16.mxu0 0
        %505 = vmatpush1.bf16.msra.mxu0 0
        %506 = vmatprep.subr.bf16.mxu0 0
        %507 = vmatpush1.bf16.msra.mxu0 0
        %508 = vmatprep.mubr.bf16.mxu0 0
        %509 = vmatmul.mubr.bf16.gmra.mrb[0].mxu0 %v474
        %v510 = vpop.f32.mrb[0].mxu0
        %v511 = vadd.f32 %v459, %v510
        %v512 = vpop.f32.mrb[0].mxu0
        %v513 = vpop.f32.mrb[0].mxu0
        %v514 = vpop.f32.mrb[0].mxu0
        %515 = vdwg.mxu0
        %v516 = vpack.c.bf16 %v448, %v448
        %v517 = vld [vmem:[%s5] sm:$0xf]
        %v518 = vld [vmem:[%s5 + $0x4] sm:$0xf]
        %v519 = vld [vmem:[%s5 + $0x8] sm:$0xf]
        %v520 = vld [vmem:[%s5 + $0xc] sm:$0xf]
        %v521 = vld [vmem:[%s6] sm:$0x1]
        %v523 = vlaneseq
        %v524 = vshrl.u32 %v523, 7
        %v525 = vsub.s32 0, %v524
        %v526 = vrot.slane %v521, %v525
        %v532 = vunpack.c.l.b16 %v517
        %v533 = vunpack.c.l.b16 %v518
        %v534 = vunpack.c.l.b16 %v519
        %v535 = vunpack.c.l.b16 %v520
        %v536 = vpack.c.b16 %v533, %v532
        %v537 = vpack.c.b16 %v535, %v534
        %v541 = vsel %vm399, %v516, 0
        %543 = vmatprep.subr.bf16.mxu0 0
        %544 = vmatpush1.bf16.msra.mxu0 %v536
        %545 = vmatprep.subr.bf16.mxu0 0
        %546 = vmatpush1.bf16.msra.mxu0 %v537
        %547 = vmatprep.subr.bf16.mxu0 0
        %548 = vmatpush1.bf16.msra.mxu0 0
        %549 = vmatprep.subr.bf16.mxu0 0
        %550 = vmatpush1.bf16.msra.mxu0 0
        %551 = vmatprep.subr.bf16.mxu0 0
        %552 = vmatpush1.bf16.msra.mxu0 0
        %553 = vmatprep.subr.bf16.mxu0 0
        %554 = vmatpush1.bf16.msra.mxu0 0
        %555 = vmatprep.subr.bf16.mxu0 0
        %556 = vmatpush1.bf16.msra.mxu0 0
        %557 = vmatprep.subr.bf16.mxu0 0
        %558 = vmatpush1.bf16.msra.mxu0 0
        %559 = vmatprep.subr.bf16.mxu0 0
        %560 = vmatpush1.bf16.msra.mxu0 0
        %561 = vmatprep.subr.bf16.mxu0 0
        %562 = vmatpush1.bf16.msra.mxu0 0
        %563 = vmatprep.subr.bf16.mxu0 0
        %564 = vmatpush1.bf16.msra.mxu0 0
        %565 = vmatprep.subr.bf16.mxu0 0
        %566 = vmatpush1.bf16.msra.mxu0 0
        %567 = vmatprep.subr.bf16.mxu0 0
        %568 = vmatpush1.bf16.msra.mxu0 0
        %569 = vmatprep.subr.bf16.mxu0 0
        %570 = vmatpush1.bf16.msra.mxu0 0
        %571 = vmatprep.subr.bf16.mxu0 0
        %572 = vmatpush1.bf16.msra.mxu0 0
        %573 = vmatprep.subr.bf16.mxu0 0
        %574 = vmatpush1.bf16.msra.mxu0 0
        %575 = vmatprep.mubr.bf16.mxu0 0
        %576 = vmatmul.mubr.bf16.gmra.mrb[0].mxu0 %v541
        %v577 = vpop.f32.mrb[0].mxu0
        %v578 = vadd.f32 %v526, %v577
        %v579 = vpop.f32.mrb[0].mxu0
        %v580 = vpop.f32.mrb[0].mxu0
        %v581 = vpop.f32.mrb[0].mxu0
        %582 = vdwg.mxu0
        %v583 = vpack.c.bf16 %v578, %v578
        %v584 = vpack.c.bf16 %v511, %v511
        %vm585 = vcmask 64512
        %v587 = vsel %vm585, %v584, 0
        %v590 = vsel %vm585, %v583, 0
        %592 = vmatprep.subr.bf16.mxu0 0
        %593 = vmatpush1.bf16.xpose.msra.mxu0 %v590
        %594 = vmatprep.subr.bf16.mxu0 0
        %595 = vmatpush1.bf16.xpose.msra.mxu0 0
        %596 = vmatprep.subr.bf16.mxu0 0
        %597 = vmatpush1.bf16.xpose.msra.mxu0 0
        %598 = vmatprep.subr.bf16.mxu0 0
        %599 = vmatpush1.bf16.xpose.msra.mxu0 0
        %600 = vmatprep.subr.bf16.mxu0 0
        %601 = vmatpush1.bf16.xpose.msra.mxu0 0
        %602 = vmatprep.subr.bf16.mxu0 0
        %603 = vmatpush1.bf16.xpose.msra.mxu0 0
        %604 = vmatprep.subr.bf16.mxu0 0
        %605 = vmatpush1.bf16.xpose.msra.mxu0 0
        %606 = vmatprep.subr.bf16.mxu0 0
        %607 = vmatpush1.bf16.xpose.msra.mxu0 0
        %608 = vmatprep.subr.bf16.mxu0 0
        %609 = vmatpush1.bf16.xpose.msra.mxu0 0
        %610 = vmatprep.subr.bf16.mxu0 0
        %611 = vmatpush1.bf16.xpose.msra.mxu0 0
        %612 = vmatprep.subr.bf16.mxu0 0
        %613 = vmatpush1.bf16.xpose.msra.mxu0 0
        %614 = vmatprep.subr.bf16.mxu0 0
        %615 = vmatpush1.bf16.xpose.msra.mxu0 0
        %616 = vmatprep.subr.bf16.mxu0 0
        %617 = vmatpush1.bf16.xpose.msra.mxu0 0
        %618 = vmatprep.subr.bf16.mxu0 0
        %619 = vmatpush1.bf16.xpose.msra.mxu0 0
        %620 = vmatprep.subr.bf16.mxu0 0
        %621 = vmatpush1.bf16.xpose.msra.mxu0 0
        %622 = vmatprep.subr.bf16.mxu0 0
        %623 = vmatpush1.bf16.xpose.msra.mxu0 0
        %624 = vmatprep.mubr.bf16.mxu0 0
        %625 = vmatmul.mubr.bf16.gmra.mrb[0].mxu0 %v587
        %v626 = vpop.f32.mrb[0].mxu0
        %v627 = vadd.f32 0.0, %v626
        %v628 = vpop.f32.mrb[0].mxu0
        %v629 = vpop.f32.mrb[0].mxu0
        %v630 = vpop.f32.mrb[0].mxu0
        %631 = vdwg.mxu0
        %v632 = vmul.f32 %v627, 0.35355338
        %v633 = vsel %vm585, %v632, -inf
        %634 = vmax.xlane.f32.xlu0 %v633
        %v635 = vpop.xlane.xlu0 %634
        %v636 = vsub.f32 %v632, %v635
        %v637 = vmul.f32 %v636, 1.442695
        %v638 = vpow.pop %v637
        %v639 = vsel %vm585, %v638, 0.0
        %640 = vadd.xlane.f32.xlu0 %v639
        %v641 = vpop.xlane.xlu0 %640
        %v642 = vrcp.pop %v641
        %v643 = vmul.f32 %v638, %v642
        %v644 = vpack.c.bf16 %v643, %v643
        %646 = vrot.lane.b32.xlu0 %v583, 96
        %v647 = vpop.permute.xlu0 %646
        %v649 = vsel %vm585, %v644, 0
        %vm651 = vcmask 1043456
        %v653 = vsel %vm651, %v647, 0
        %655 = vmatprep.subr.bf16.mxu0 0
        %656 = vmatpush1.bf16.msra.mxu0 %v653
        %657 = vmatprep.subr.bf16.mxu0 0
        %658 = vmatpush1.bf16.msra.mxu0 0
        %659 = vmatprep.subr.bf16.mxu0 0
        %660 = vmatpush1.bf16.msra.mxu0 0
        %661 = vmatprep.subr.bf16.mxu0 0
        %662 = vmatpush1.bf16.msra.mxu0 0
        %663 = vmatprep.subr.bf16.mxu0 0
        %664 = vmatpush1.bf16.msra.mxu0 0
        %665 = vmatprep.subr.bf16.mxu0 0
        %666 = vmatpush1.bf16.msra.mxu0 0
        %667 = vmatprep.subr.bf16.mxu0 0
        %668 = vmatpush1.bf16.msra.mxu0 0
        %669 = vmatprep.subr.bf16.mxu0 0
        %670 = vmatpush1.bf16.msra.mxu0 0
        %671 = vmatprep.subr.bf16.mxu0 0
        %672 = vmatpush1.bf16.msra.mxu0 0
        %673 = vmatprep.subr.bf16.mxu0 0
        %674 = vmatpush1.bf16.msra.mxu0 0
        %675 = vmatprep.subr.bf16.mxu0 0
        %676 = vmatpush1.bf16.msra.mxu0 0
        %677 = vmatprep.subr.bf16.mxu0 0
        %678 = vmatpush1.bf16.msra.mxu0 0
        %679 = vmatprep.subr.bf16.mxu0 0
        %680 = vmatpush1.bf16.msra.mxu0 0
        %681 = vmatprep.subr.bf16.mxu0 0
        %682 = vmatpush1.bf16.msra.mxu0 0
        %683 = vmatprep.subr.bf16.mxu0 0
        %684 = vmatpush1.bf16.msra.mxu0 0
        %685 = vmatprep.subr.bf16.mxu0 0
        %686 = vmatpush1.bf16.msra.mxu0 0
        %687 = vmatprep.mubr.bf16.mxu0 0
        %688 = vmatmul.mubr.bf16.gmra.mrb[0].mxu0 %v649
        %v689 = vpop.f32.mrb[0].mxu0
        %v690 = vadd.f32 0.0, %v689
        %v691 = vpop.f32.mrb[0].mxu0
        %v692 = vpop.f32.mrb[0].mxu0
        %v693 = vpop.f32.mrb[0].mxu0
        %694 = vdwg.mxu0
        %v695 = vpack.c.bf16 %v690, %v690
        %vm696 = vcmask 60416
        %697 = vst.msk [vmem:[#allocation2] sm:$0xf] %vm696, %v695
        %699 = vrot.lane.b32.xlu0 %v584, 120
        %v700 = vpop.permute.xlu0 %699
        %701 = vrot.lane.b32.xlu0 %v583, 120
        %v702 = vpop.permute.xlu0 %701
        %v704 = vsel %vm585, %v700, 0
        %v707 = vsel %vm585, %v702, 0
        %709 = vmatprep.subr.bf16.mxu0 0
        %710 = vmatpush1.bf16.xpose.msra.mxu0 %v707
        %711 = vmatprep.subr.bf16.mxu0 0
        %712 = vmatpush1.bf16.xpose.msra.mxu0 0
        %713 = vmatprep.subr.bf16.mxu0 0
        %714 = vmatpush1.bf16.xpose.msra.mxu0 0
        %715 = vmatprep.subr.bf16.mxu0 0
        %716 = vmatpush1.bf16.xpose.msra.mxu0 0
        %717 = vmatprep.subr.bf16.mxu0 0
        %718 = vmatpush1.bf16.xpose.msra.mxu0 0
        %719 = vmatprep.subr.bf16.mxu0 0
        %720 = vmatpush1.bf16.xpose.msra.mxu0 0
        %721 = vmatprep.subr.bf16.mxu0 0
        %722 = vmatpush1.bf16.xpose.msra.mxu0 0
        %723 = vmatprep.subr.bf16.mxu0 0
        %724 = vmatpush1.bf16.xpose.msra.mxu0 0
        %725 = vmatprep.subr.bf16.mxu0 0
        %726 = vmatpush1.bf16.xpose.msra.mxu0 0
        %727 = vmatprep.subr.bf16.mxu0 0
        %728 = vmatpush1.bf16.xpose.msra.mxu0 0
        %729 = vmatprep.subr.bf16.mxu0 0
        %730 = vmatpush1.bf16.xpose.msra.mxu0 0
        %731 = vmatprep.subr.bf16.mxu0 0
        %732 = vmatpush1.bf16.xpose.msra.mxu0 0
        %733 = vmatprep.subr.bf16.mxu0 0
        %734 = vmatpush1.bf16.xpose.msra.mxu0 0
        %735 = vmatprep.subr.bf16.mxu0 0
        %736 = vmatpush1.bf16.xpose.msra.mxu0 0
        %737 = vmatprep.subr.bf16.mxu0 0
        %738 = vmatpush1.bf16.xpose.msra.mxu0 0
        %739 = vmatprep.subr.bf16.mxu0 0
        %740 = vmatpush1.bf16.xpose.msra.mxu0 0
        %741 = vmatprep.mubr.bf16.mxu0 0
        %742 = vmatmul.mubr.bf16.gmra.mrb[0].mxu0 %v704
        %v743 = vpop.f32.mrb[0].mxu0
        %v744 = vadd.f32 0.0, %v743
        %v745 = vpop.f32.mrb[0].mxu0
        %v746 = vpop.f32.mrb[0].mxu0
        %v747 = vpop.f32.mrb[0].mxu0
        %748 = vdwg.mxu0
        %v749 = vmul.f32 %v744, 0.35355338
        %v750 = vsel %vm585, %v749, -inf
        %751 = vmax.xlane.f32.xlu0 %v750
        %v752 = vpop.xlane.xlu0 %751
        %v753 = vsub.f32 %v749, %v752
        %v754 = vmul.f32 %v753, 1.442695
        %v755 = vpow.pop %v754
        %v756 = vsel %vm585, %v755, 0.0
        %757 = vadd.xlane.f32.xlu0 %v756
        %v758 = vpop.xlane.xlu0 %757
        %v759 = vrcp.pop %v758
        %v760 = vmul.f32 %v755, %v759
        %v761 = vpack.c.bf16 %v760, %v760
        %762 = vrot.lane.b32.xlu0 %v583, 88
        %v763 = vpop.permute.xlu0 %762
        %v765 = vsel %vm585, %v761, 0
        %v768 = vsel %vm651, %v763, 0
        %770 = vmatprep.subr.bf16.mxu0 0
        %771 = vmatpush1.bf16.msra.mxu0 %v768
        %772 = vmatprep.subr.bf16.mxu0 0
        %773 = vmatpush1.bf16.msra.mxu0 0
        %774 = vmatprep.subr.bf16.mxu0 0
        %775 = vmatpush1.bf16.msra.mxu0 0
        %776 = vmatprep.subr.bf16.mxu0 0
        %777 = vmatpush1.bf16.msra.mxu0 0
        %778 = vmatprep.subr.bf16.mxu0 0
        %779 = vmatpush1.bf16.msra.mxu0 0
        %780 = vmatprep.subr.bf16.mxu0 0
        %781 = vmatpush1.bf16.msra.mxu0 0
        %782 = vmatprep.subr.bf16.mxu0 0
        %783 = vmatpush1.bf16.msra.mxu0 0
        %784 = vmatprep.subr.bf16.mxu0 0
        %785 = vmatpush1.bf16.msra.mxu0 0
        %786 = vmatprep.subr.bf16.mxu0 0
        %787 = vmatpush1.bf16.msra.mxu0 0
        %788 = vmatprep.subr.bf16.mxu0 0
        %789 = vmatpush1.bf16.msra.mxu0 0
        %790 = vmatprep.subr.bf16.mxu0 0
        %791 = vmatpush1.bf16.msra.mxu0 0
        %792 = vmatprep.subr.bf16.mxu0 0
        %793 = vmatpush1.bf16.msra.mxu0 0
        %794 = vmatprep.subr.bf16.mxu0 0
        %795 = vmatpush1.bf16.msra.mxu0 0
        %796 = vmatprep.subr.bf16.mxu0 0
        %797 = vmatpush1.bf16.msra.mxu0 0
        %798 = vmatprep.subr.bf16.mxu0 0
        %799 = vmatpush1.bf16.msra.mxu0 0
        %800 = vmatprep.subr.bf16.mxu0 0
        %801 = vmatpush1.bf16.msra.mxu0 0
        %802 = vmatprep.mubr.bf16.mxu0 0
        %803 = vmatmul.mubr.bf16.gmra.mrb[0].mxu0 %v765
        %v804 = vpop.f32.mrb[0].mxu0
        %v805 = vadd.f32 0.0, %v804
        %v806 = vpop.f32.mrb[0].mxu0
        %v807 = vpop.f32.mrb[0].mxu0
        %v808 = vpop.f32.mrb[0].mxu0
        %809 = vdwg.mxu0
        %v810 = vpack.c.bf16 %v805, %v805
        %v812 = vunpack.c.l.b16 %v810
        %v813 = vpack.c.b16 %v812, %v812
        %814 = vrot.lane.b32.xlu0 %v813, 8
        %v815 = vpop.permute.xlu0 %814
        %vm817 = vcmask 126016
        %818 = vst.msk [vmem:[#allocation2] sm:$0xf] %vm817, %v815
        %819 = vrot.lane.b32.xlu0 %v584, 112
        %v820 = vpop.permute.xlu0 %819
        %821 = vrot.lane.b32.xlu0 %v583, 112
        %v822 = vpop.permute.xlu0 %821
        %v824 = vsel %vm585, %v820, 0
        %v827 = vsel %vm585, %v822, 0
        %829 = vmatprep.subr.bf16.mxu0 0
        %830 = vmatpush1.bf16.xpose.msra.mxu0 %v827
        %831 = vmatprep.subr.bf16.mxu0 0
        %832 = vmatpush1.bf16.xpose.msra.mxu0 0
        %833 = vmatprep.subr.bf16.mxu0 0
        %834 = vmatpush1.bf16.xpose.msra.mxu0 0
        %835 = vmatprep.subr.bf16.mxu0 0
        %836 = vmatpush1.bf16.xpose.msra.mxu0 0
        %837 = vmatprep.subr.bf16.mxu0 0
        %838 = vmatpush1.bf16.xpose.msra.mxu0 0
        %839 = vmatprep.subr.bf16.mxu0 0
        %840 = vmatpush1.bf16.xpose.msra.mxu0 0
        %841 = vmatprep.subr.bf16.mxu0 0
        %842 = vmatpush1.bf16.xpose.msra.mxu0 0
        %843 = vmatprep.subr.bf16.mxu0 0
        %844 = vmatpush1.bf16.xpose.msra.mxu0 0
        %845 = vmatprep.subr.bf16.mxu0 0
        %846 = vmatpush1.bf16.xpose.msra.mxu0 0
        %847 = vmatprep.subr.bf16.mxu0 0
        %848 = vmatpush1.bf16.xpose.msra.mxu0 0
        %849 = vmatprep.subr.bf16.mxu0 0
        %850 = vmatpush1.bf16.xpose.msra.mxu0 0
        %851 = vmatprep.subr.bf16.mxu0 0
        %852 = vmatpush1.bf16.xpose.msra.mxu0 0
        %853 = vmatprep.subr.bf16.mxu0 0
        %854 = vmatpush1.bf16.xpose.msra.mxu0 0
        %855 = vmatprep.subr.bf16.mxu0 0
        %856 = vmatpush1.bf16.xpose.msra.mxu0 0
        %857 = vmatprep.subr.bf16.mxu0 0
        %858 = vmatpush1.bf16.xpose.msra.mxu0 0
        %859 = vmatprep.subr.bf16.mxu0 0
        %860 = vmatpush1.bf16.xpose.msra.mxu0 0
        %861 = vmatprep.mubr.bf16.mxu0 0
        %862 = vmatmul.mubr.bf16.gmra.mrb[0].mxu0 %v824
        %v863 = vpop.f32.mrb[0].mxu0
        %v864 = vadd.f32 0.0, %v863
        %v865 = vpop.f32.mrb[0].mxu0
        %v866 = vpop.f32.mrb[0].mxu0
        %v867 = vpop.f32.mrb[0].mxu0
        %868 = vdwg.mxu0
        %v869 = vmul.f32 %v864, 0.35355338
        %v870 = vsel %vm585, %v869, -inf
        %871 = vmax.xlane.f32.xlu0 %v870
        %v872 = vpop.xlane.xlu0 %871
        %v873 = vsub.f32 %v869, %v872
        %v874 = vmul.f32 %v873, 1.442695
        %v875 = vpow.pop %v874
        %v876 = vsel %vm585, %v875, 0.0
        %877 = vadd.xlane.f32.xlu0 %v876
        %v878 = vpop.xlane.xlu0 %877
        %v879 = vrcp.pop %v878
        %v880 = vmul.f32 %v875, %v879
        %v881 = vpack.c.bf16 %v880, %v880
        %882 = vrot.lane.b32.xlu0 %v583, 80
        %v883 = vpop.permute.xlu0 %882
        %v885 = vsel %vm585, %v881, 0
        %v888 = vsel %vm651, %v883, 0
        %890 = vmatprep.subr.bf16.mxu0 0
        %891 = vmatpush1.bf16.msra.mxu0 %v888
        %892 = vmatprep.subr.bf16.mxu0 0
        %893 = vmatpush1.bf16.msra.mxu0 0
        %894 = vmatprep.subr.bf16.mxu0 0
        %895 = vmatpush1.bf16.msra.mxu0 0
        %896 = vmatprep.subr.bf16.mxu0 0
        %897 = vmatpush1.bf16.msra.mxu0 0
        %898 = vmatprep.subr.bf16.mxu0 0
        %899 = vmatpush1.bf16.msra.mxu0 0
        %900 = vmatprep.subr.bf16.mxu0 0
        %901 = vmatpush1.bf16.msra.mxu0 0
        %902 = vmatprep.subr.bf16.mxu0 0
        %903 = vmatpush1.bf16.msra.mxu0 0
        %904 = vmatprep.subr.bf16.mxu0 0
        %905 = vmatpush1.bf16.msra.mxu0 0
        %906 = vmatprep.subr.bf16.mxu0 0
        %907 = vmatpush1.bf16.msra.mxu0 0
        %908 = vmatprep.subr.bf16.mxu0 0
        %909 = vmatpush1.bf16.msra.mxu0 0
        %910 = vmatprep.subr.bf16.mxu0 0
        %911 = vmatpush1.bf16.msra.mxu0 0
        %912 = vmatprep.subr.bf16.mxu0 0
        %913 = vmatpush1.bf16.msra.mxu0 0
        %914 = vmatprep.subr.bf16.mxu0 0
        %915 = vmatpush1.bf16.msra.mxu0 0
        %916 = vmatprep.subr.bf16.mxu0 0
        %917 = vmatpush1.bf16.msra.mxu0 0
        %918 = vmatprep.subr.bf16.mxu0 0
        %919 = vmatpush1.bf16.msra.mxu0 0
        %920 = vmatprep.subr.bf16.mxu0 0
        %921 = vmatpush1.bf16.msra.mxu0 0
        %922 = vmatprep.mubr.bf16.mxu0 0
        %923 = vmatmul.mubr.bf16.gmra.mrb[0].mxu0 %v885
        %v924 = vpop.f32.mrb[0].mxu0
        %v925 = vadd.f32 0.0, %v924
        %v926 = vpop.f32.mrb[0].mxu0
        %v927 = vpop.f32.mrb[0].mxu0
        %v928 = vpop.f32.mrb[0].mxu0
        %929 = vdwg.mxu0
        %v930 = vpack.c.bf16 %v925, %v925
        %v932 = vunpack.c.l.b16 %v930
        %v933 = vpack.c.b16 %v932, %v932
        %934 = vrot.lane.b32.xlu0 %v933, 16
        %v935 = vpop.permute.xlu0 %934
        %vm937 = vcmask 191616
        %938 = vst.msk [vmem:[#allocation2] sm:$0xf] %vm937, %v935
        %939 = vrot.lane.b32.xlu0 %v584, 104
        %v940 = vpop.permute.xlu0 %939
        %941 = vrot.lane.b32.xlu0 %v583, 104
        %v942 = vpop.permute.xlu0 %941
        %v944 = vsel %vm585, %v940, 0
        %v947 = vsel %vm585, %v942, 0
        %949 = vmatprep.subr.bf16.mxu0 0
        %950 = vmatpush1.bf16.xpose.msra.mxu0 %v947
        %951 = vmatprep.subr.bf16.mxu0 0
        %952 = vmatpush1.bf16.xpose.msra.mxu0 0
        %953 = vmatprep.subr.bf16.mxu0 0
        %954 = vmatpush1.bf16.xpose.msra.mxu0 0
        %955 = vmatprep.subr.bf16.mxu0 0
        %956 = vmatpush1.bf16.xpose.msra.mxu0 0
        %957 = vmatprep.subr.bf16.mxu0 0
        %958 = vmatpush1.bf16.xpose.msra.mxu0 0
        %959 = vmatprep.subr.bf16.mxu0 0
        %960 = vmatpush1.bf16.xpose.msra.mxu0 0
        %961 = vmatprep.subr.bf16.mxu0 0
        %962 = vmatpush1.bf16.xpose.msra.mxu0 0
        %963 = vmatprep.subr.bf16.mxu0 0
        %964 = vmatpush1.bf16.xpose.msra.mxu0 0
        %965 = vmatprep.subr.bf16.mxu0 0
        %966 = vmatpush1.bf16.xpose.msra.mxu0 0
        %967 = vmatprep.subr.bf16.mxu0 0
        %968 = vmatpush1.bf16.xpose.msra.mxu0 0
        %969 = vmatprep.subr.bf16.mxu0 0
        %970 = vmatpush1.bf16.xpose.msra.mxu0 0
        %971 = vmatprep.subr.bf16.mxu0 0
        %972 = vmatpush1.bf16.xpose.msra.mxu0 0
        %973 = vmatprep.subr.bf16.mxu0 0
        %974 = vmatpush1.bf16.xpose.msra.mxu0 0
        %975 = vmatprep.subr.bf16.mxu0 0
        %976 = vmatpush1.bf16.xpose.msra.mxu0 0
        %977 = vmatprep.subr.bf16.mxu0 0
        %978 = vmatpush1.bf16.xpose.msra.mxu0 0
        %979 = vmatprep.subr.bf16.mxu0 0
        %980 = vmatpush1.bf16.xpose.msra.mxu0 0
        %981 = vmatprep.mubr.bf16.mxu0 0
        %982 = vmatmul.mubr.bf16.gmra.mrb[0].mxu0 %v944
        %v983 = vpop.f32.mrb[0].mxu0
        %v984 = vadd.f32 0.0, %v983
        %v985 = vpop.f32.mrb[0].mxu0
        %v986 = vpop.f32.mrb[0].mxu0
        %v987 = vpop.f32.mrb[0].mxu0
        %988 = vdwg.mxu0
        %v989 = vmul.f32 %v984, 0.35355338
        %v990 = vsel %vm585, %v989, -inf
        %991 = vmax.xlane.f32.xlu0 %v990
        %v992 = vpop.xlane.xlu0 %991
        %v993 = vsub.f32 %v989, %v992
        %v994 = vmul.f32 %v993, 1.442695
        %v995 = vpow.pop %v994
        %v996 = vsel %vm585, %v995, 0.0
        %997 = vadd.xlane.f32.xlu0 %v996
        %v998 = vpop.xlane.xlu0 %997
        %v999 = vrcp.pop %v998
        %v1000 = vmul.f32 %v995, %v999
        %v1001 = vpack.c.bf16 %v1000, %v1000
        %1002 = vrot.lane.b32.xlu0 %v583, 72
        %v1003 = vpop.permute.xlu0 %1002
        %v1005 = vsel %vm585, %v1001, 0
        %v1008 = vsel %vm651, %v1003, 0
        %1010 = vmatprep.subr.bf16.mxu0 0
        %1011 = vmatpush1.bf16.msra.mxu0 %v1008
        %1012 = vmatprep.subr.bf16.mxu0 0
        %1013 = vmatpush1.bf16.msra.mxu0 0
        %1014 = vmatprep.subr.bf16.mxu0 0
        %1015 = vmatpush1.bf16.msra.mxu0 0
        %1016 = vmatprep.subr.bf16.mxu0 0
        %1017 = vmatpush1.bf16.msra.mxu0 0
        %1018 = vmatprep.subr.bf16.mxu0 0
        %1019 = vmatpush1.bf16.msra.mxu0 0
        %1020 = vmatprep.subr.bf16.mxu0 0
        %1021 = vmatpush1.bf16.msra.mxu0 0
        %1022 = vmatprep.subr.bf16.mxu0 0
        %1023 = vmatpush1.bf16.msra.mxu0 0
        %1024 = vmatprep.subr.bf16.mxu0 0
        %1025 = vmatpush1.bf16.msra.mxu0 0
        %1026 = vmatprep.subr.bf16.mxu0 0
        %1027 = vmatpush1.bf16.msra.mxu0 0
        %1028 = vmatprep.subr.bf16.mxu0 0
        %1029 = vmatpush1.bf16.msra.mxu0 0
        %1030 = vmatprep.subr.bf16.mxu0 0
        %1031 = vmatpush1.bf16.msra.mxu0 0
        %1032 = vmatprep.subr.bf16.mxu0 0
        %1033 = vmatpush1.bf16.msra.mxu0 0
        %1034 = vmatprep.subr.bf16.mxu0 0
        %1035 = vmatpush1.bf16.msra.mxu0 0
        %1036 = vmatprep.subr.bf16.mxu0 0
        %1037 = vmatpush1.bf16.msra.mxu0 0
        %1038 = vmatprep.subr.bf16.mxu0 0
        %1039 = vmatpush1.bf16.msra.mxu0 0
        %1040 = vmatprep.subr.bf16.mxu0 0
        %1041 = vmatpush1.bf16.msra.mxu0 0
        %1042 = vmatprep.mubr.bf16.mxu0 0
        %1043 = vmatmul.mubr.bf16.gmra.mrb[0].mxu0 %v1005
        %v1044 = vpop.f32.mrb[0].mxu0
        %v1045 = vadd.f32 0.0, %v1044
        %v1046 = vpop.f32.mrb[0].mxu0
        %v1047 = vpop.f32.mrb[0].mxu0
        %v1048 = vpop.f32.mrb[0].mxu0
        %1049 = vdwg.mxu0
        %v1050 = vpack.c.bf16 %v1045, %v1045
        %v1052 = vunpack.c.l.b16 %v1050
        %v1053 = vpack.c.b16 %v1052, %v1052
        %1054 = vrot.lane.b32.xlu0 %v1053, 24
        %v1055 = vpop.permute.xlu0 %1054
        %vm1057 = vcmask 257216
        %1058 = vst.msk [vmem:[#allocation2] sm:$0xf] %vm1057, %v1055
        %v1059 = vld [vmem:[#allocation2] sm:$0xf]
        %v1060 = vld [vmem:[#allocation10] sm:$0xf]
        %v1061 = vld [vmem:[#allocation10 + $0x4] sm:$0xf]
        %v1062 = vld [vmem:[#allocation10 + $0x8] sm:$0xf]
        %v1063 = vld [vmem:[#allocation10 + $0xc] sm:$0xf]
        %v1064 = vld [vmem:[%s8] sm:$0x1]
        %v1066 = vlaneseq
        %v1067 = vshrl.u32 %v1066, 7
        %v1068 = vsub.s32 0, %v1067
        %v1069 = vrot.slane %v1064, %v1068
        %v1075 = vunpack.c.l.b16 %v1060
        %v1076 = vunpack.c.l.b16 %v1061
        %v1077 = vunpack.c.l.b16 %v1062
        %v1078 = vunpack.c.l.b16 %v1063
        %v1079 = vpack.c.b16 %v1076, %v1075
        %v1080 = vpack.c.b16 %v1078, %v1077
        %v1084 = vsel %vm399, %v1059, 0
        %1086 = vmatprep.subr.bf16.mxu0 0
        %1087 = vmatpush1.bf16.msra.mxu0 %v1079
        %1088 = vmatprep.subr.bf16.mxu0 0
        %1089 = vmatpush1.bf16.msra.mxu0 %v1080
        %1090 = vmatprep.subr.bf16.mxu0 0
        %1091 = vmatpush1.bf16.msra.mxu0 0
        %1092 = vmatprep.subr.bf16.mxu0 0
        %1093 = vmatpush1.bf16.msra.mxu0 0
        %1094 = vmatprep.subr.bf16.mxu0 0
        %1095 = vmatpush1.bf16.msra.mxu0 0
        %1096 = vmatprep.subr.bf16.mxu0 0
        %1097 = vmatpush1.bf16.msra.mxu0 0
        %1098 = vmatprep.subr.bf16.mxu0 0
        %1099 = vmatpush1.bf16.msra.mxu0 0
        %1100 = vmatprep.subr.bf16.mxu0 0
        %1101 = vmatpush1.bf16.msra.mxu0 0
        %1102 = vmatprep.subr.bf16.mxu0 0
        %1103 = vmatpush1.bf16.msra.mxu0 0
        %1104 = vmatprep.subr.bf16.mxu0 0
        %1105 = vmatpush1.bf16.msra.mxu0 0
        %1106 = vmatprep.subr.bf16.mxu0 0
        %1107 = vmatpush1.bf16.msra.mxu0 0
        %1108 = vmatprep.subr.bf16.mxu0 0
        %1109 = vmatpush1.bf16.msra.mxu0 0
        %1110 = vmatprep.subr.bf16.mxu0 0
        %1111 = vmatpush1.bf16.msra.mxu0 0
        %1112 = vmatprep.subr.bf16.mxu0 0
        %1113 = vmatpush1.bf16.msra.mxu0 0
        %1114 = vmatprep.subr.bf16.mxu0 0
        %1115 = vmatpush1.bf16.msra.mxu0 0
        %1116 = vmatprep.subr.bf16.mxu0 0
        %1117 = vmatpush1.bf16.msra.mxu0 0
        %1118 = vmatprep.mubr.bf16.mxu0 0
        %1119 = vmatmul.mubr.bf16.gmra.mrb[0].mxu0 %v1084
        %v1120 = vpop.f32.mrb[0].mxu0
        %v1121 = vadd.f32 %v1069, %v1120
        %v1122 = vpop.f32.mrb[0].mxu0
        %v1123 = vpop.f32.mrb[0].mxu0
        %v1124 = vpop.f32.mrb[0].mxu0
        %1125 = vdwg.mxu0
        %v1126 = vadd.f32 %v398, %v1121
        %1127 = vst.msk [vmem:[%s392] sm:$0xff] %vm399, %v1126
        %s1128 = sand.u32 %s245, 1
        %s1129 = scalar_lea.sflag [#allocation7], %s1128
        %s1130 = sand.u32 %s245, 1
        %s1131 = smul.addr %s1130, 8
        %s1132 = scalar_lea.vmem [#allocation11], %s1131
        // Predicated region
        $region69: #{tpu_custom_call.1} parent=55 // pred_check
          %p1133 = pneg %p255
        $region70: #{tpu_custom_call.1} parent=55 // pred_check_branch
          %1135 = sbr.rel (%p1133) target = $region72
        $region71: #{tpu_custom_call.1} parent=55 // pred_region
          %s1137 = ssub.s32 128, 128
          %1138 = vsyncadd %s1129, %s1137
          %s1139 = sadd.s32 %s34, %s33
          %s1140 = smul.addr %s1139, 128
          %s1141 = scalar_lea.hbm %s9, %s1140
          %s1143 = sshll.u32 %s1132, 4
          %s1144 = int_to_ptr.vmem [resolvable:$true] %s1143
          %1146 = dma.vmem_to_hbm [thread:$0]  %s1144, 128, %s1141, %s1129
        $region72: #{tpu_custom_call.1} parent=55 // pred_fallthru
          _
      $region56: #{tpu_custom_call.1} parent=5 // pred_fallthru
        _
      %p1147 = scmp.le.s32.totalorder 2, %s24
      // Predicated region
      $region73: #{tpu_custom_call.1} parent=5 // pred_check
        %p1148 = pneg %p1147
      $region74: #{tpu_custom_call.1} parent=5 // pred_check_branch
        %1150 = sbr.rel (%p1148) target = $region76
      $region75: #{tpu_custom_call.1} parent=5 // pred_region
        %s1151 = ssub.s32 %s24, 2
        // Predicated region
        $region77: #{tpu_custom_call.1} parent=75 // pred_check
          %p1152 = pneg %p261
        $region78: #{tpu_custom_call.1} parent=75 // pred_check_branch
          %1154 = sbr.rel (%p1152) target = $region80
        $region79: #{tpu_custom_call.1} parent=75 // pred_region
          %s1155 = sand.u32 %s246, 1
          %s1156 = scalar_lea.sflag [#allocation7], %s1155
          %s1157 = sand.u32 %s246, 1
          %s1158 = smul.addr %s1157, 8
          %s1159 = scalar_lea.vmem [#allocation11], %s1158
          %1160 = dma.done %s1156, 128
        $region80: #{tpu_custom_call.1} parent=75 // pred_fallthru
          _
      $region76: #{tpu_custom_call.1} parent=5 // pred_fallthru
        _
    $region6: #{tpu_custom_call.1} parent=1 // loop_footer
      %s28 = sadd.s32 1, %s24
    $region7: #{tpu_custom_call.1} parent=1 // loop_footer_branch
      %23 = sbr.rel target = $region3
    $region8: #{tpu_custom_call.1} parent=1 // loop_exit
      _
    %1161 = vsyncpa [#allocation6], 1
    %s1162 = scalar_lea.sflag [#allocation6], 1
    %1163 = vsyncpa %s1162, 1
    %1164 = vsyncpa [#allocation9], 1
    %1165 = vsyncpa [#allocation7], 1
    %s1166 = scalar_lea.sflag [#allocation7], 1
    %1167 = vsyncpa %s1166, 1

</llo_original>
